<compile_context>
chip_gen: v7x
topology: tpu7x:2x2x1
jax: 0.10.0
libtpu: 0.0.40
codegen_flags: <defaults>
</compile_context>

<pallas_src>
import jax
import jax.numpy as jnp
from jax.experimental import pallas as pl
from jax.experimental.pallas import tpu as pltpu

IN_DIM = 3 * 28 * 28   # 2352
H1 = 500               # logical fc1 width (matches the PyTorch module)
H1_PAD = 512           # lane-aligned fc1 width used by the kernel
H2 = 256
OUT_DIM = 10


def _round_up(x, m):
    return ((x + m - 1) // m) * m


def mlp_kernel(w1_ref, b1_ref, w2_ref, b2_ref, w3_ref, b3_ref, x_ref, o_ref):
    # Weights/biases are VMEM-resident (constant index_map, single-buffered);
    # the bf16 x tile streams per grid step.  f32 accumulation throughout.
    x = x_ref[...]                                            # (TM, IN_DIM) bf16
    h1 = jnp.dot(x, w1_ref[...], preferred_element_type=jnp.float32)
    h1 = jnp.maximum(h1 + b1_ref[...], 0.0)
    h2 = jnp.dot(h1.astype(jnp.bfloat16), w2_ref[...],
                 preferred_element_type=jnp.float32)
    h2 = jnp.maximum(h2 + b2_ref[...], 0.0)
    out = jnp.dot(h2.astype(jnp.bfloat16), w3_ref[...],
                  preferred_element_type=jnp.float32)
    o_ref[...] = (out + b3_ref[...]).astype(o_ref.dtype)


def net_forward(x_nchw, params, *, tm=512):
    """x_nchw: (B, 3, 28, 28) float32 -> (B, 10) float32.

    `params` must be the kernel-packed params from `pack_params` (bf16 weights
    stored (in, out) with fc1 padded to 512, f32 biases shaped (1, out)).
    """
    B = x_nchw.shape[0]
    # Flatten + cast to bf16.  With allow_input_fusion on this operand the
    # reshape/convert fuses into the Pallas input DMA under jit (no standalone
    # HBM round trip) and halves the per-step x stream on v6e/v7x.
    x = x_nchw.reshape(B, IN_DIM).astype(jnp.bfloat16)
    w1, b1, w2, b2, w3, b3 = params

    # Batch tiling: no host-side padding.  Tiny batches get one full-extent
    # block (block dim == array dim is always legal); otherwise an 8-aligned
    # tile capped so the grid has >= 2 steps (keeps both v7x TensorCores busy
    # under dimension_semantics=("parallel",)).  The ragged tail block is
    # handled by Pallas (OOB reads are garbage, OOB writes dropped; rows are
    # independent so no valid row is affected).
    if B < 8:
        TM = B
    else:
        TM = max(8, min(tm, _round_up(pl.cdiv(B, 2), 8)))
    grid = (pl.cdiv(B, TM),)

    def w_spec(shape):
        # Weight-stationary: constant index_map => fetched once, stays in
        # VMEM.  Single-buffered (never re-fetched) to free VMEM on v7x.
        return pl.BlockSpec(shape, lambda i: (0, 0),
                            pipeline_mode=pl.Buffered(1))

    flops = 2 * B * (IN_DIM * H1_PAD + H1_PAD * H2 + H2 * OUT_DIM)
    bytes_accessed = (
        B * IN_DIM * 2                                         # bf16 x stream
        + sum(p.size * p.dtype.itemsize for p in params)
        + B * OUT_DIM * 4
    )

    return pl.pallas_call(
        mlp_kernel,
        out_shape=jax.ShapeDtypeStruct((B, OUT_DIM), jnp.float32),
        grid=grid,
        in_specs=[
            w_spec((IN_DIM, H1_PAD)), w_spec((1, H1_PAD)),
            w_spec((H1_PAD, H2)),     w_spec((1, H2)),
            w_spec((H2, OUT_DIM)),    w_spec((1, OUT_DIM)),
            pl.BlockSpec((TM, IN_DIM), lambda i: (i, 0)),
        ],
        out_specs=pl.BlockSpec((TM, OUT_DIM), lambda i: (i, 0)),
        compiler_params=pltpu.CompilerParams(
            dimension_semantics=("parallel",),
            vmem_limit_bytes=48 << 20,
            # One flag per operand: only x (operand 6) may have its producer
            # (reshape + f32->bf16 cast) fused into the kernel's input DMA.
            allow_input_fusion=[False] * 6 + [True],
        ),
        cost_estimate=pl.CostEstimate(
            flops=flops, transcendentals=0, bytes_accessed=bytes_accessed),
    )(w1, b1, w2, b2, w3, b3, x)


# jit entry point: needed so the x reshape/cast can fuse into the Pallas call.
net_forward_jit = jax.jit(net_forward, static_argnames=("tm",))


def init_params(key):
    """Deterministic init mirroring nn.Linear's U(-1/sqrt(fan_in), 1/sqrt(fan_in)).
    Weights stored transposed vs PyTorch, (in, out), cast to bf16; biases f32."""
    dims = [(IN_DIM, H1), (H1, H2), (H2, OUT_DIM)]
    params = []
    for i, (fan_in, fan_out) in enumerate(dims):
        kw, kb = jax.random.split(jax.random.fold_in(key, i))
        bound = 1.0 / jnp.sqrt(jnp.float32(fan_in))
        w = jax.random.uniform(kw, (fan_in, fan_out), jnp.float32, -bound, bound)
        b = jax.random.uniform(kb, (1, fan_out), jnp.float32, -bound, bound)
        params.extend([w.astype(jnp.bfloat16), b])
    return tuple(params)


def pack_params(params):
    """Zero-pad fc1's 500-wide output (and fc2's input rows) to 512 so the MXU
    sees lane-aligned shapes.  ReLU(x @ 0 + 0) == 0, so results are identical."""
    w1, b1, w2, b2, w3, b3 = params
    pad = H1_PAD - H1
    w1p = jnp.pad(w1, ((0, 0), (0, pad)))
    b1p = jnp.pad(b1, ((0, 0), (0, pad)))
    w2p = jnp.pad(w2, ((0, pad), (0, 0)))
    return (w1p, b1p, w2p, b2, w3, b3)


def reference_forward(x_nchw, params):
    """Plain-JAX reference (unpadded params) doing the same bf16-input /
    f32-accumulate math as the kernel."""
    w1, b1, w2, b2, w3, b3 = params

    def dot(a, w):
        return jnp.dot(a.astype(jnp.bfloat16).astype(jnp.float32),
                       w.astype(jnp.float32),
                       preferred_element_type=jnp.float32)

    x = x_nchw.reshape(x_nchw.shape[0], -1)
    h1 = jnp.maximum(dot(x, w1) + b1, 0.0)
    h2 = jnp.maximum(dot(h1, w2) + b2, 0.0)
    return dot(h2, w3) + b3


if __name__ == "__main__":
    key = jax.random.PRNGKey(0)
    kx, kp = jax.random.split(key)

    # Small batch; spatial/channel shapes are dictated by the module (3x28x28).
    x = jax.random.normal(kx, (2, 3, 28, 28), jnp.float32)
    raw_params = init_params(kp)          # PyTorch-shaped (H1 = 500)
    kparams = pack_params(raw_params)     # kernel-packed (H1 padded to 512)

    out = jax.block_until_ready(net_forward_jit(x, kparams))

    ref = reference_forward(x, raw_params)
    assert out.shape == (2, 10)
    # bf16 weights/activations -> relaxed tolerance vs the (matched) reference.
    assert jnp.allclose(out, ref, atol=2e-2, rtol=2e-2), (
        f"max abs err {jnp.max(jnp.abs(out - ref))}")

    print("KERNEL_OK")
</pallas_src>

<mosaic_0001>
module attributes {stable_mosaic.version = 11 : i64} {
  func.func @mlp_kernel(%arg0: i32, %arg1: memref<2352x512xbf16, #tpu.memory_space<vmem>>, %arg2: memref<1x512xf32, #tpu.memory_space<vmem>>, %arg3: memref<512x256xbf16, #tpu.memory_space<vmem>>, %arg4: memref<1x256xf32, #tpu.memory_space<vmem>>, %arg5: memref<256x10xbf16, #tpu.memory_space<vmem>>, %arg6: memref<1x10xf32, #tpu.memory_space<vmem>>, %arg7: memref<2x2352xbf16, #tpu.memory_space<vmem>>, %arg8: memref<2x10xf32, #tpu.memory_space<vmem>>) attributes {dimension_semantics = [#tpu.dimension_semantics<parallel>], iteration_bounds = array<i64: 1>, scalar_prefetch = 0 : i64, scratch_operands = 0 : i64, tpu.core_type = #tpu.core_type<tc>, window_params = [{pipeline_mode = #tpu.pipeline_mode<synchronous>, transform_indices = @transform_0, window_bounds = array<i64: 2352, 512>}, {pipeline_mode = #tpu.pipeline_mode<synchronous>, transform_indices = @transform_1, window_bounds = array<i64: 1, 512>}, {pipeline_mode = #tpu.pipeline_mode<synchronous>, transform_indices = @transform_2, window_bounds = array<i64: 512, 256>}, {pipeline_mode = #tpu.pipeline_mode<synchronous>, transform_indices = @transform_3, window_bounds = array<i64: 1, 256>}, {pipeline_mode = #tpu.pipeline_mode<synchronous>, transform_indices = @transform_4, window_bounds = array<i64: 256, 10>}, {pipeline_mode = #tpu.pipeline_mode<synchronous>, transform_indices = @transform_5, window_bounds = array<i64: 1, 10>}, {transform_indices = @transform_6, window_bounds = array<i64: 2, 2352>}, {transform_indices = @transform_7, window_bounds = array<i64: 2, 10>}]} {
    %c0 = arith.constant 0 : index
    %c0_0 = arith.constant 0 : index
    %0 = vector.load %arg7[%c0, %c0_0] : memref<2x2352xbf16, #tpu.memory_space<vmem>>, vector<2x2352xbf16>
    %c0_1 = arith.constant 0 : index
    %c0_2 = arith.constant 0 : index
    %1 = vector.load %arg1[%c0_1, %c0_2] : memref<2352x512xbf16, #tpu.memory_space<vmem>>, vector<2352x512xbf16>
    %cst = arith.constant dense<0.000000e+00> : vector<2x512xf32>
    %2 = tpu.matmul %0, %1, %cst {dimension_numbers = #tpu.dot_dimension_numbers<[1], [0], [0], [1], [0, 0, 1, 1], [], []>} : vector<2x2352xbf16>, vector<2352x512xbf16>, vector<2x512xf32> -> vector<2x512xf32>
    %c0_3 = arith.constant 0 : index
    %c0_4 = arith.constant 0 : index
    %3 = vector.load %arg2[%c0_3, %c0_4] : memref<1x512xf32, #tpu.memory_space<vmem>>, vector<1x512xf32>
    %4 = vector.broadcast %3 : vector<1x512xf32> to vector<2x512xf32>
    %5 = arith.addf %2, %4 : vector<2x512xf32>
    %cst_5 = arith.constant 0.000000e+00 : f32
    %6 = vector.broadcast %cst_5 : f32 to vector<2x512xf32>
    %7 = arith.maximumf %5, %6 : vector<2x512xf32>
    %8 = arith.truncf %7 : vector<2x512xf32> to vector<2x512xbf16>
    %c0_6 = arith.constant 0 : index
    %c0_7 = arith.constant 0 : index
    %9 = vector.load %arg3[%c0_6, %c0_7] : memref<512x256xbf16, #tpu.memory_space<vmem>>, vector<512x256xbf16>
    %cst_8 = arith.constant dense<0.000000e+00> : vector<2x256xf32>
    %10 = tpu.matmul %8, %9, %cst_8 {dimension_numbers = #tpu.dot_dimension_numbers<[1], [0], [0], [1], [0, 0, 1, 1], [], []>} : vector<2x512xbf16>, vector<512x256xbf16>, vector<2x256xf32> -> vector<2x256xf32>
    %c0_9 = arith.constant 0 : index
    %c0_10 = arith.constant 0 : index
    %11 = vector.load %arg4[%c0_9, %c0_10] : memref<1x256xf32, #tpu.memory_space<vmem>>, vector<1x256xf32>
    %12 = vector.broadcast %11 : vector<1x256xf32> to vector<2x256xf32>
    %13 = arith.addf %10, %12 : vector<2x256xf32>
    %cst_11 = arith.constant 0.000000e+00 : f32
    %14 = vector.broadcast %cst_11 : f32 to vector<2x256xf32>
    %15 = arith.maximumf %13, %14 : vector<2x256xf32>
    %16 = arith.truncf %15 : vector<2x256xf32> to vector<2x256xbf16>
    %c0_12 = arith.constant 0 : index
    %c0_13 = arith.constant 0 : index
    %17 = vector.load %arg5[%c0_12, %c0_13] : memref<256x10xbf16, #tpu.memory_space<vmem>>, vector<256x10xbf16>
    %cst_14 = arith.constant dense<0.000000e+00> : vector<2x10xf32>
    %18 = tpu.matmul %16, %17, %cst_14 {dimension_numbers = #tpu.dot_dimension_numbers<[1], [0], [0], [1], [0, 0, 1, 1], [], []>} : vector<2x256xbf16>, vector<256x10xbf16>, vector<2x10xf32> -> vector<2x10xf32>
    %c0_15 = arith.constant 0 : index
    %c0_16 = arith.constant 0 : index
    %19 = vector.load %arg6[%c0_15, %c0_16] : memref<1x10xf32, #tpu.memory_space<vmem>>, vector<1x10xf32>
    %20 = vector.broadcast %19 : vector<1x10xf32> to vector<2x10xf32>
    %21 = arith.addf %18, %20 : vector<2x10xf32>
    %c0_17 = arith.constant 0 : index
    %c0_18 = arith.constant 0 : index
    %22 = vector.load %arg8[%c0_17, %c0_18] : memref<2x10xf32, #tpu.memory_space<vmem>>, vector<2x10xf32>
    tpu.vector_store %arg8[%c0_17, %c0_18], %21 {strides = array<i32>} : memref<2x10xf32, #tpu.memory_space<vmem>>, vector<2x10xf32>,
    return
  }
  func.func @transform_0(%arg0: i32) -> (i32, i32) {
    %c0_i32 = arith.constant 0 : i32
    %c0_i32_0 = arith.constant 0 : i32
    %c0_i32_1 = arith.constant 0 : i32
    return %c0_i32, %c0_i32_0 : i32, i32
  }
  func.func @transform_1(%arg0: i32) -> (i32, i32) {
    %c0_i32 = arith.constant 0 : i32
    %c0_i32_0 = arith.constant 0 : i32
    %c0_i32_1 = arith.constant 0 : i32
    return %c0_i32, %c0_i32_0 : i32, i32
  }
  func.func @transform_2(%arg0: i32) -> (i32, i32) {
    %c0_i32 = arith.constant 0 : i32
    %c0_i32_0 = arith.constant 0 : i32
    %c0_i32_1 = arith.constant 0 : i32
    return %c0_i32, %c0_i32_0 : i32, i32
  }
  func.func @transform_3(%arg0: i32) -> (i32, i32) {
    %c0_i32 = arith.constant 0 : i32
    %c0_i32_0 = arith.constant 0 : i32
    %c0_i32_1 = arith.constant 0 : i32
    return %c0_i32, %c0_i32_0 : i32, i32
  }
  func.func @transform_4(%arg0: i32) -> (i32, i32) {
    %c0_i32 = arith.constant 0 : i32
    %c0_i32_0 = arith.constant 0 : i32
    %c0_i32_1 = arith.constant 0 : i32
    return %c0_i32, %c0_i32_0 : i32, i32
  }
  func.func @transform_5(%arg0: i32) -> (i32, i32) {
    %c0_i32 = arith.constant 0 : i32
    %c0_i32_0 = arith.constant 0 : i32
    %c0_i32_1 = arith.constant 0 : i32
    return %c0_i32, %c0_i32_0 : i32, i32
  }
  func.func @transform_6(%arg0: i32) -> (i32, i32) {
    %c0_i32 = arith.constant 0 : i32
    %c0_i32_0 = arith.constant 0 : i32
    return %arg0, %c0_i32 : i32, i32
  }
  func.func @transform_7(%arg0: i32) -> (i32, i32) {
    %c0_i32 = arith.constant 0 : i32
    %c0_i32_0 = arith.constant 0 : i32
    return %arg0, %c0_i32 : i32, i32
  }
}

</mosaic_0001>

<llo_original>
// kernel: net_forward.1
$region0: #{net_forward.1}
  #allocation0 [shape = 'u32[]', space=smem, size = 0x4, offset = 0x4, fixed_abs, tag = 'smem constant byte address 0x4 - core index']
  #allocation1 [shape = 'u32[144,128]{1,0:T(1,128)}', space=vmem, size = 0x12000, scoped, tag = 'internal scratch']
  %s0 = inlined_call_operand.hbm [shape: bf16[2352,512], index: 0, kind: input, shape index: {}]
  %s1 = inlined_call_operand.hbm [shape: f32[1,512], index: 1, kind: input, shape index: {}]
  %s2 = inlined_call_operand.hbm [shape: bf16[512,256], index: 2, kind: input, shape index: {}]
  %s3 = inlined_call_operand.hbm [shape: f32[1,256], index: 3, kind: input, shape index: {}]
  %s4 = inlined_call_operand.vmem [shape: bf16[256,10], index: 4, kind: input, shape index: {}]
  %s5 = inlined_call_operand.hbm [shape: f32[1,10], index: 5, kind: input, shape index: {}]
  %s6 = inlined_call_operand.vmem [shape: bf16[2,2352], index: 6, kind: input, shape index: {}]
  %s7 = inlined_call_operand.hbm [shape: f32[2,10], index: 7, kind: output, shape index: {}]
  %s8 = sld [smem:[#allocation0]]
  $region58: #{net_forward.1} parent=0
    _
  %s10 = ssub.s32 1, %s8
  %s11 = scalar_select 0, %s10, %s8
  $region1: #{net_forward.1} parent=0
    #allocation2 [shape = 'u8[2408448]{0}', space=vmem, size = 0x24c000, scoped, tag = 'input window, operand 0, single buffered']
    #allocation3 [shape = 's32[1]{0}', space=sflag, size = 0x4, scoped, tag = 'scoped memory for net_forward.1']
    #allocation4 [shape = 's32[1]{0}', space=sflag, size = 0x4, scoped, tag = 'scoped memory for net_forward.1']
    #allocation5 [shape = 'u8[2048]{0}', space=vmem, size = 0x800, scoped, tag = 'input window, operand 1, single buffered']
    #allocation6 [shape = 's32[1]{0}', space=sflag, size = 0x4, scoped, tag = 'scoped memory for net_forward.1']
    #allocation7 [shape = 'u8[262144]{0}', space=vmem, size = 0x40000, scoped, tag = 'input window, operand 2, single buffered']
    #allocation8 [shape = 'u8[1024]{0}', space=vmem, size = 0x400, scoped, tag = 'input window, operand 3, single buffered']
    #allocation9 [shape = 's32[1]{0}', space=sflag, size = 0x4, scoped, tag = 'scoped memory for net_forward.1']
    #allocation10 [shape = 'u8[512]{0}', space=vmem, size = 0x400, scoped, tag = 'input window, operand 5, single buffered']
    #allocation11 [shape = 'u8[1024]{0}', space=vmem, size = 0x400, scoped, tag = 'output window, operand 0, single buffered']
    %12 = vsyncpa [#allocation3], 0
    %13 = vsyncpa [#allocation6], 0
    %14 = vsyncpa [#allocation9], 0
    %15 = vsyncpa [#allocation4], 0
    // Predicated region
    $region2: #{net_forward.1} parent=1 // pred_check
      _
    $region3: #{net_forward.1} parent=1 // pred_check_branch
      %17 = sbr.rel (0) target = $region5
    $region4: #{net_forward.1} parent=1 // pred_region
      %s19 = ssub.s32 75264, 75264
      %20 = vsyncadd [#allocation3], %s19
      %s21 = sshll.u32 [#allocation2], 4
      %s22 = int_to_ptr.vmem [resolvable:$true] %s21
      %27 = dma.hbm_to_vmem [thread:$0]  %s0, 75264, %s22, [#allocation3], 256, 256, 16
    $region5: #{net_forward.1} parent=1 // pred_fallthru
      _
    // Predicated region
    $region6: #{net_forward.1} parent=1 // pred_check
      _
    $region7: #{net_forward.1} parent=1 // pred_check_branch
      %29 = sbr.rel (0) target = $region9
    $region8: #{net_forward.1} parent=1 // pred_region
      %s31 = ssub.s32 64, 64
      %32 = vsyncadd [#allocation6], %s31
      %s34 = sshll.u32 [#allocation5], 4
      %s35 = int_to_ptr.vmem [resolvable:$true] %s34
      %37 = dma.hbm_to_vmem [thread:$0]  %s1, 64, %s35, [#allocation6]
    $region9: #{net_forward.1} parent=1 // pred_fallthru
      _
    // Predicated region
    $region10: #{net_forward.1} parent=1 // pred_check
      _
    $region11: #{net_forward.1} parent=1 // pred_check_branch
      %39 = sbr.rel (0) target = $region13
    $region12: #{net_forward.1} parent=1 // pred_region
      %s41 = ssub.s32 8192, 8192
      %42 = vsyncadd [#allocation6], %s41
      %s43 = sshll.u32 [#allocation7], 4
      %s44 = int_to_ptr.vmem [resolvable:$true] %s43
      %49 = dma.hbm_to_vmem [thread:$0]  %s2, 8192, %s44, [#allocation6], 128, 128, 8
    $region13: #{net_forward.1} parent=1 // pred_fallthru
      _
    // Predicated region
    $region14: #{net_forward.1} parent=1 // pred_check
      _
    $region15: #{net_forward.1} parent=1 // pred_check_branch
      %51 = sbr.rel (0) target = $region17
    $region16: #{net_forward.1} parent=1 // pred_region
      %s53 = ssub.s32 32, 32
      %54 = vsyncadd [#allocation9], %s53
      %s56 = sshll.u32 [#allocation8], 4
      %s57 = int_to_ptr.vmem [resolvable:$true] %s56
      %59 = dma.hbm_to_vmem [thread:$0]  %s3, 32, %s57, [#allocation9]
    $region17: #{net_forward.1} parent=1 // pred_fallthru
      _
    // Predicated region
    $region18: #{net_forward.1} parent=1 // pred_check
      _
    $region19: #{net_forward.1} parent=1 // pred_check_branch
      %61 = sbr.rel (0) target = $region21
    $region20: #{net_forward.1} parent=1 // pred_region
      _
    $region21: #{net_forward.1} parent=1 // pred_fallthru
      _
    // Predicated region
    $region22: #{net_forward.1} parent=1 // pred_check
      _
    $region23: #{net_forward.1} parent=1 // pred_check_branch
      %63 = sbr.rel (0) target = $region25
    $region24: #{net_forward.1} parent=1 // pred_region
      %s65 = ssub.s32 16, 16
      %66 = vsyncadd [#allocation9], %s65
      %s68 = sshll.u32 [#allocation10], 4
      %s69 = int_to_ptr.vmem [resolvable:$true] %s68
      %71 = dma.hbm_to_vmem [thread:$0]  %s5, 16, %s69, [#allocation9]
    $region25: #{net_forward.1} parent=1 // pred_fallthru
      _
    // Predicated region
    $region26: #{net_forward.1} parent=1 // pred_check
      _
    $region27: #{net_forward.1} parent=1 // pred_check_branch
      %73 = sbr.rel (0) target = $region29
    $region28: #{net_forward.1} parent=1 // pred_region
      _
    $region29: #{net_forward.1} parent=1 // pred_fallthru
      _
    // Predicated region
    $region30: #{net_forward.1} parent=1 // pred_check
      _
    $region31: #{net_forward.1} parent=1 // pred_check_branch
      %75 = sbr.rel (0) target = $region33
    $region32: #{net_forward.1} parent=1 // pred_region
      %76 = dma.done [#allocation3], 75264
    $region33: #{net_forward.1} parent=1 // pred_fallthru
      _
    // Predicated region
    $region34: #{net_forward.1} parent=1 // pred_check
      _
    $region35: #{net_forward.1} parent=1 // pred_check_branch
      %78 = sbr.rel (0) target = $region37
    $region36: #{net_forward.1} parent=1 // pred_region
      %79 = dma.done [#allocation6], 64
    $region37: #{net_forward.1} parent=1 // pred_fallthru
      _
    // Predicated region
    $region38: #{net_forward.1} parent=1 // pred_check
      _
    $region39: #{net_forward.1} parent=1 // pred_check_branch
      %81 = sbr.rel (0) target = $region41
    $region40: #{net_forward.1} parent=1 // pred_region
      %82 = dma.done [#allocation6], 8192
    $region41: #{net_forward.1} parent=1 // pred_fallthru
      _
    // Predicated region
    $region42: #{net_forward.1} parent=1 // pred_check
      _
    $region43: #{net_forward.1} parent=1 // pred_check_branch
      %84 = sbr.rel (0) target = $region45
    $region44: #{net_forward.1} parent=1 // pred_region
      %85 = dma.done [#allocation9], 32
    $region45: #{net_forward.1} parent=1 // pred_fallthru
      _
    // Predicated region
    $region46: #{net_forward.1} parent=1 // pred_check
      _
    $region47: #{net_forward.1} parent=1 // pred_check_branch
      %87 = sbr.rel (0) target = $region49
    $region48: #{net_forward.1} parent=1 // pred_region
      %88 = dma.done [#allocation9], 16
    $region49: #{net_forward.1} parent=1 // pred_fallthru
      _
    %v90 = vld [vmem:[%s6] sm:$0xff]
    %v91 = vld [vmem:[%s6 + $0x8] sm:$0xff]
    %v92 = vld [vmem:[%s6 + $0x10] sm:$0x7]
    %v93 = vld [vmem:[#allocation2] sm:$0xff]
    %v94 = vld [vmem:[#allocation2 + $0x8] sm:$0xff]
    %v95 = vld [vmem:[#allocation2 + $0x10] sm:$0xff]
    %v96 = vld [vmem:[#allocation2 + $0x18] sm:$0xff]
    %v97 = vld [vmem:[#allocation2 + $0x20] sm:$0xff]
    %v98 = vld [vmem:[#allocation2 + $0x28] sm:$0xff]
    %v99 = vld [vmem:[#allocation2 + $0x30] sm:$0xff]
    %v100 = vld [vmem:[#allocation2 + $0x38] sm:$0xff]
    %v101 = vld [vmem:[#allocation2 + $0x40] sm:$0xff]
    %v102 = vld [vmem:[#allocation2 + $0x48] sm:$0xff]
    %v103 = vld [vmem:[#allocation2 + $0x50] sm:$0xff]
    %v104 = vld [vmem:[#allocation2 + $0x58] sm:$0xff]
    %v105 = vld [vmem:[#allocation2 + $0x60] sm:$0xff]
    %v106 = vld [vmem:[#allocation2 + $0x68] sm:$0xff]
    %v107 = vld [vmem:[#allocation2 + $0x70] sm:$0xff]
    %v108 = vld [vmem:[#allocation2 + $0x78] sm:$0xff]
    %v109 = vld [vmem:[#allocation2 + $0x80] sm:$0xff]
    %v110 = vld [vmem:[#allocation2 + $0x88] sm:$0xff]
    %v111 = vld [vmem:[#allocation2 + $0x90] sm:$0xff]
    %v112 = vld [vmem:[#allocation2 + $0x98] sm:$0xff]
    %v113 = vld [vmem:[#allocation2 + $0xa0] sm:$0xff]
    %v114 = vld [vmem:[#allocation2 + $0xa8] sm:$0xff]
    %v115 = vld [vmem:[#allocation2 + $0xb0] sm:$0xff]
    %v116 = vld [vmem:[#allocation2 + $0xb8] sm:$0xff]
    %v117 = vld [vmem:[#allocation2 + $0xc0] sm:$0xff]
    %v118 = vld [vmem:[#allocation2 + $0xc8] sm:$0xff]
    %v119 = vld [vmem:[#allocation2 + $0xd0] sm:$0xff]
    %v120 = vld [vmem:[#allocation2 + $0xd8] sm:$0xff]
    %v121 = vld [vmem:[#allocation2 + $0xe0] sm:$0xff]
    %v122 = vld [vmem:[#allocation2 + $0xe8] sm:$0xff]
    %v123 = vld [vmem:[#allocation2 + $0xf0] sm:$0xff]
    %v124 = vld [vmem:[#allocation2 + $0xf8] sm:$0xff]
    %v125 = vld [vmem:[#allocation2 + $0x100] sm:$0xff]
    %v126 = vld [vmem:[#allocation2 + $0x108] sm:$0xff]
    %v127 = vld [vmem:[#allocation2 + $0x110] sm:$0xff]
    %v128 = vld [vmem:[#allocation2 + $0x118] sm:$0xff]
    %v129 = vld [vmem:[#allocation2 + $0x120] sm:$0xff]
    %v130 = vld [vmem:[#allocation2 + $0x128] sm:$0xff]
    %v131 = vld [vmem:[#allocation2 + $0x130] sm:$0xff]
    %v132 = vld [vmem:[#allocation2 + $0x138] sm:$0xff]
    %v133 = vld [vmem:[#allocation2 + $0x140] sm:$0xff]
    %v134 = vld [vmem:[#allocation2 + $0x148] sm:$0xff]
    %v135 = vld [vmem:[#allocation2 + $0x150] sm:$0xff]
    %v136 = vld [vmem:[#allocation2 + $0x158] sm:$0xff]
    %v137 = vld [vmem:[#allocation2 + $0x160] sm:$0xff]
    %v138 = vld [vmem:[#allocation2 + $0x168] sm:$0xff]
    %v139 = vld [vmem:[#allocation2 + $0x170] sm:$0xff]
    %v140 = vld [vmem:[#allocation2 + $0x178] sm:$0xff]
    %v141 = vld [vmem:[#allocation2 + $0x180] sm:$0xff]
    %v142 = vld [vmem:[#allocation2 + $0x188] sm:$0xff]
    %v143 = vld [vmem:[#allocation2 + $0x190] sm:$0xff]
    %v144 = vld [vmem:[#allocation2 + $0x198] sm:$0xff]
    %v145 = vld [vmem:[#allocation2 + $0x1a0] sm:$0xff]
    %v146 = vld [vmem:[#allocation2 + $0x1a8] sm:$0xff]
    %v147 = vld [vmem:[#allocation2 + $0x1b0] sm:$0xff]
    %v148 = vld [vmem:[#allocation2 + $0x1b8] sm:$0xff]
    %v149 = vld [vmem:[#allocation2 + $0x1c0] sm:$0xff]
    %v150 = vld [vmem:[#allocation2 + $0x1c8] sm:$0xff]
    %v151 = vld [vmem:[#allocation2 + $0x1d0] sm:$0xff]
    %v152 = vld [vmem:[#allocation2 + $0x1d8] sm:$0xff]
    %v153 = vld [vmem:[#allocation2 + $0x1e0] sm:$0xff]
    %v154 = vld [vmem:[#allocation2 + $0x1e8] sm:$0xff]
    %v155 = vld [vmem:[#allocation2 + $0x1f0] sm:$0xff]
    %v156 = vld [vmem:[#allocation2 + $0x1f8] sm:$0xff]
    %v157 = vld [vmem:[#allocation2 + $0x200] sm:$0xff]
    %v158 = vld [vmem:[#allocation2 + $0x208] sm:$0xff]
    %v159 = vld [vmem:[#allocation2 + $0x210] sm:$0xff]
    %v160 = vld [vmem:[#allocation2 + $0x218] sm:$0xff]
    %v161 = vld [vmem:[#allocation2 + $0x220] sm:$0xff]
    %v162 = vld [vmem:[#allocation2 + $0x228] sm:$0xff]
    %v163 = vld [vmem:[#allocation2 + $0x230] sm:$0xff]
    %v164 = vld [vmem:[#allocation2 + $0x238] sm:$0xff]
    %v165 = vld [vmem:[#allocation2 + $0x240] sm:$0xff]
    %v166 = vld [vmem:[#allocation2 + $0x248] sm:$0xff]
    %v167 = vld [vmem:[#allocation2 + $0x250] sm:$0xff]
    %v168 = vld [vmem:[#allocation2 + $0x258] sm:$0xff]
    %v169 = vld [vmem:[#allocation2 + $0x260] sm:$0xff]
    %v170 = vld [vmem:[#allocation2 + $0x268] sm:$0xff]
    %v171 = vld [vmem:[#allocation2 + $0x270] sm:$0xff]
    %v172 = vld [vmem:[#allocation2 + $0x278] sm:$0xff]
    %v173 = vld [vmem:[#allocation2 + $0x280] sm:$0xff]
    %v174 = vld [vmem:[#allocation2 + $0x288] sm:$0xff]
    %v175 = vld [vmem:[#allocation2 + $0x290] sm:$0xff]
    %v176 = vld [vmem:[#allocation2 + $0x298] sm:$0xff]
    %v177 = vld [vmem:[#allocation2 + $0x2a0] sm:$0xff]
    %v178 = vld [vmem:[#allocation2 + $0x2a8] sm:$0xff]
    %v179 = vld [vmem:[#allocation2 + $0x2b0] sm:$0xff]
    %v180 = vld [vmem:[#allocation2 + $0x2b8] sm:$0xff]
    %v181 = vld [vmem:[#allocation2 + $0x2c0] sm:$0xff]
    %v182 = vld [vmem:[#allocation2 + $0x2c8] sm:$0xff]
    %v183 = vld [vmem:[#allocation2 + $0x2d0] sm:$0xff]
    %v184 = vld [vmem:[#allocation2 + $0x2d8] sm:$0xff]
    %v185 = vld [vmem:[#allocation2 + $0x2e0] sm:$0xff]
    %v186 = vld [vmem:[#allocation2 + $0x2e8] sm:$0xff]
    %v187 = vld [vmem:[#allocation2 + $0x2f0] sm:$0xff]
    %v188 = vld [vmem:[#allocation2 + $0x2f8] sm:$0xff]
    %v189 = vld [vmem:[#allocation2 + $0x300] sm:$0xff]
    %v190 = vld [vmem:[#allocation2 + $0x308] sm:$0xff]
    %v191 = vld [vmem:[#allocation2 + $0x310] sm:$0xff]
    %v192 = vld [vmem:[#allocation2 + $0x318] sm:$0xff]
    %v193 = vld [vmem:[#allocation2 + $0x320] sm:$0xff]
    %v194 = vld [vmem:[#allocation2 + $0x328] sm:$0xff]
    %v195 = vld [vmem:[#allocation2 + $0x330] sm:$0xff]
    %v196 = vld [vmem:[#allocation2 + $0x338] sm:$0xff]
    %v197 = vld [vmem:[#allocation2 + $0x340] sm:$0xff]
    %v198 = vld [vmem:[#allocation2 + $0x348] sm:$0xff]
    %v199 = vld [vmem:[#allocation2 + $0x350] sm:$0xff]
    %v200 = vld [vmem:[#allocation2 + $0x358] sm:$0xff]
    %v201 = vld [vmem:[#allocation2 + $0x360] sm:$0xff]
    %v202 = vld [vmem:[#allocation2 + $0x368] sm:$0xff]
    %v203 = vld [vmem:[#allocation2 + $0x370] sm:$0xff]
    %v204 = vld [vmem:[#allocation2 + $0x378] sm:$0xff]
    %v205 = vld [vmem:[#allocation2 + $0x380] sm:$0xff]
    %v206 = vld [vmem:[#allocation2 + $0x388] sm:$0xff]
    %v207 = vld [vmem:[#allocation2 + $0x390] sm:$0xff]
    %v208 = vld [vmem:[#allocation2 + $0x398] sm:$0xff]
    %v209 = vld [vmem:[#allocation2 + $0x3a0] sm:$0xff]
    %v210 = vld [vmem:[#allocation2 + $0x3a8] sm:$0xff]
    %v211 = vld [vmem:[#allocation2 + $0x3b0] sm:$0xff]
    %v212 = vld [vmem:[#allocation2 + $0x3b8] sm:$0xff]
    %v213 = vld [vmem:[#allocation2 + $0x3c0] sm:$0xff]
    %v214 = vld [vmem:[#allocation2 + $0x3c8] sm:$0xff]
    %v215 = vld [vmem:[#allocation2 + $0x3d0] sm:$0xff]
    %v216 = vld [vmem:[#allocation2 + $0x3d8] sm:$0xff]
    %v217 = vld [vmem:[#allocation2 + $0x3e0] sm:$0xff]
    %v218 = vld [vmem:[#allocation2 + $0x3e8] sm:$0xff]
    %v219 = vld [vmem:[#allocation2 + $0x3f0] sm:$0xff]
    %v220 = vld [vmem:[#allocation2 + $0x3f8] sm:$0xff]
    %v221 = vld [vmem:[#allocation2 + $0x400] sm:$0xff]
    %v222 = vld [vmem:[#allocation2 + $0x408] sm:$0xff]
    %v223 = vld [vmem:[#allocation2 + $0x410] sm:$0xff]
    %v224 = vld [vmem:[#allocation2 + $0x418] sm:$0xff]
    %v225 = vld [vmem:[#allocation2 + $0x420] sm:$0xff]
    %v226 = vld [vmem:[#allocation2 + $0x428] sm:$0xff]
    %v227 = vld [vmem:[#allocation2 + $0x430] sm:$0xff]
    %v228 = vld [vmem:[#allocation2 + $0x438] sm:$0xff]
    %v229 = vld [vmem:[#allocation2 + $0x440] sm:$0xff]
    %v230 = vld [vmem:[#allocation2 + $0x448] sm:$0xff]
    %v231 = vld [vmem:[#allocation2 + $0x450] sm:$0xff]
    %v232 = vld [vmem:[#allocation2 + $0x458] sm:$0xff]
    %v233 = vld [vmem:[#allocation2 + $0x460] sm:$0xff]
    %v234 = vld [vmem:[#allocation2 + $0x468] sm:$0xff]
    %v235 = vld [vmem:[#allocation2 + $0x470] sm:$0xff]
    %v236 = vld [vmem:[#allocation2 + $0x478] sm:$0xff]
    %v237 = vld [vmem:[#allocation2 + $0x480] sm:$0xff]
    %v238 = vld [vmem:[#allocation2 + $0x488] sm:$0xff]
    %v239 = vld [vmem:[#allocation2 + $0x490] sm:$0xff]
    %v240 = vld [vmem:[#allocation2 + $0x498] sm:$0xff]
    %v241 = vld [vmem:[#allocation2 + $0x4a0] sm:$0xff]
    %v242 = vld [vmem:[#allocation2 + $0x4a8] sm:$0xff]
    %v243 = vld [vmem:[#allocation2 + $0x4b0] sm:$0xff]
    %v244 = vld [vmem:[#allocation2 + $0x4b8] sm:$0xff]
    %v245 = vld [vmem:[#allocation2 + $0x4c0] sm:$0xff]
    %v246 = vld [vmem:[#allocation2 + $0x4c8] sm:$0xff]
    %v247 = vld [vmem:[#allocation2 + $0x4d0] sm:$0xff]
    %v248 = vld [vmem:[#allocation2 + $0x4d8] sm:$0xff]
    %v249 = vld [vmem:[#allocation2 + $0x4e0] sm:$0xff]
    %v250 = vld [vmem:[#allocation2 + $0x4e8] sm:$0xff]
    %v251 = vld [vmem:[#allocation2 + $0x4f0] sm:$0xff]
    %v252 = vld [vmem:[#allocation2 + $0x4f8] sm:$0xff]
    %v253 = vld [vmem:[#allocation2 + $0x500] sm:$0xff]
    %v254 = vld [vmem:[#allocation2 + $0x508] sm:$0xff]
    %v255 = vld [vmem:[#allocation2 + $0x510] sm:$0xff]
    %v256 = vld [vmem:[#allocation2 + $0x518] sm:$0xff]
    %v257 = vld [vmem:[#allocation2 + $0x520] sm:$0xff]
    %v258 = vld [vmem:[#allocation2 + $0x528] sm:$0xff]
    %v259 = vld [vmem:[#allocation2 + $0x530] sm:$0xff]
    %v260 = vld [vmem:[#allocation2 + $0x538] sm:$0xff]
    %v261 = vld [vmem:[#allocation2 + $0x540] sm:$0xff]
    %v262 = vld [vmem:[#allocation2 + $0x548] sm:$0xff]
    %v263 = vld [vmem:[#allocation2 + $0x550] sm:$0xff]
    %v264 = vld [vmem:[#allocation2 + $0x558] sm:$0xff]
    %v265 = vld [vmem:[#allocation2 + $0x560] sm:$0xff]
    %v266 = vld [vmem:[#allocation2 + $0x568] sm:$0xff]
    %v267 = vld [vmem:[#allocation2 + $0x570] sm:$0xff]
    %v268 = vld [vmem:[#allocation2 + $0x578] sm:$0xff]
    %v269 = vld [vmem:[#allocation2 + $0x580] sm:$0xff]
    %v270 = vld [vmem:[#allocation2 + $0x588] sm:$0xff]
    %v271 = vld [vmem:[#allocation2 + $0x590] sm:$0xff]
    %v272 = vld [vmem:[#allocation2 + $0x598] sm:$0xff]
    %v273 = vld [vmem:[#allocation2 + $0x5a0] sm:$0xff]
    %v274 = vld [vmem:[#allocation2 + $0x5a8] sm:$0xff]
    %v275 = vld [vmem:[#allocation2 + $0x5b0] sm:$0xff]
    %v276 = vld [vmem:[#allocation2 + $0x5b8] sm:$0xff]
    %v277 = vld [vmem:[#allocation2 + $0x5c0] sm:$0xff]
    %v278 = vld [vmem:[#allocation2 + $0x5c8] sm:$0xff]
    %v279 = vld [vmem:[#allocation2 + $0x5d0] sm:$0xff]
    %v280 = vld [vmem:[#allocation2 + $0x5d8] sm:$0xff]
    %v281 = vld [vmem:[#allocation2 + $0x5e0] sm:$0xff]
    %v282 = vld [vmem:[#allocation2 + $0x5e8] sm:$0xff]
    %v283 = vld [vmem:[#allocation2 + $0x5f0] sm:$0xff]
    %v284 = vld [vmem:[#allocation2 + $0x5f8] sm:$0xff]
    %v285 = vld [vmem:[#allocation2 + $0x600] sm:$0xff]
    %v286 = vld [vmem:[#allocation2 + $0x608] sm:$0xff]
    %v287 = vld [vmem:[#allocation2 + $0x610] sm:$0xff]
    %v288 = vld [vmem:[#allocation2 + $0x618] sm:$0xff]
    %v289 = vld [vmem:[#allocation2 + $0x620] sm:$0xff]
    %v290 = vld [vmem:[#allocation2 + $0x628] sm:$0xff]
    %v291 = vld [vmem:[#allocation2 + $0x630] sm:$0xff]
    %v292 = vld [vmem:[#allocation2 + $0x638] sm:$0xff]
    %v293 = vld [vmem:[#allocation2 + $0x640] sm:$0xff]
    %v294 = vld [vmem:[#allocation2 + $0x648] sm:$0xff]
    %v295 = vld [vmem:[#allocation2 + $0x650] sm:$0xff]
    %v296 = vld [vmem:[#allocation2 + $0x658] sm:$0xff]
    %v297 = vld [vmem:[#allocation2 + $0x660] sm:$0xff]
    %v298 = vld [vmem:[#allocation2 + $0x668] sm:$0xff]
    %v299 = vld [vmem:[#allocation2 + $0x670] sm:$0xff]
    %v300 = vld [vmem:[#allocation2 + $0x678] sm:$0xff]
    %v301 = vld [vmem:[#allocation2 + $0x680] sm:$0xff]
    %v302 = vld [vmem:[#allocation2 + $0x688] sm:$0xff]
    %v303 = vld [vmem:[#allocation2 + $0x690] sm:$0xff]
    %v304 = vld [vmem:[#allocation2 + $0x698] sm:$0xff]
    %v305 = vld [vmem:[#allocation2 + $0x6a0] sm:$0xff]
    %v306 = vld [vmem:[#allocation2 + $0x6a8] sm:$0xff]
    %v307 = vld [vmem:[#allocation2 + $0x6b0] sm:$0xff]
    %v308 = vld [vmem:[#allocation2 + $0x6b8] sm:$0xff]
    %v309 = vld [vmem:[#allocation2 + $0x6c0] sm:$0xff]
    %v310 = vld [vmem:[#allocation2 + $0x6c8] sm:$0xff]
    %v311 = vld [vmem:[#allocation2 + $0x6d0] sm:$0xff]
    %v312 = vld [vmem:[#allocation2 + $0x6d8] sm:$0xff]
    %v313 = vld [vmem:[#allocation2 + $0x6e0] sm:$0xff]
    %v314 = vld [vmem:[#allocation2 + $0x6e8] sm:$0xff]
    %v315 = vld [vmem:[#allocation2 + $0x6f0] sm:$0xff]
    %v316 = vld [vmem:[#allocation2 + $0x6f8] sm:$0xff]
    %v317 = vld [vmem:[#allocation2 + $0x700] sm:$0xff]
    %v318 = vld [vmem:[#allocation2 + $0x708] sm:$0xff]
    %v319 = vld [vmem:[#allocation2 + $0x710] sm:$0xff]
    %v320 = vld [vmem:[#allocation2 + $0x718] sm:$0xff]
    %v321 = vld [vmem:[#allocation2 + $0x720] sm:$0xff]
    %v322 = vld [vmem:[#allocation2 + $0x728] sm:$0xff]
    %v323 = vld [vmem:[#allocation2 + $0x730] sm:$0xff]
    %v324 = vld [vmem:[#allocation2 + $0x738] sm:$0xff]
    %v325 = vld [vmem:[#allocation2 + $0x740] sm:$0xff]
    %v326 = vld [vmem:[#allocation2 + $0x748] sm:$0xff]
    %v327 = vld [vmem:[#allocation2 + $0x750] sm:$0xff]
    %v328 = vld [vmem:[#allocation2 + $0x758] sm:$0xff]
    %v329 = vld [vmem:[#allocation2 + $0x760] sm:$0xff]
    %v330 = vld [vmem:[#allocation2 + $0x768] sm:$0xff]
    %v331 = vld [vmem:[#allocation2 + $0x770] sm:$0xff]
    %v332 = vld [vmem:[#allocation2 + $0x778] sm:$0xff]
    %v333 = vld [vmem:[#allocation2 + $0x780] sm:$0xff]
    %v334 = vld [vmem:[#allocation2 + $0x788] sm:$0xff]
    %v335 = vld [vmem:[#allocation2 + $0x790] sm:$0xff]
    %v336 = vld [vmem:[#allocation2 + $0x798] sm:$0xff]
    %v337 = vld [vmem:[#allocation2 + $0x7a0] sm:$0xff]
    %v338 = vld [vmem:[#allocation2 + $0x7a8] sm:$0xff]
    %v339 = vld [vmem:[#allocation2 + $0x7b0] sm:$0xff]
    %v340 = vld [vmem:[#allocation2 + $0x7b8] sm:$0xff]
    %v341 = vld [vmem:[#allocation2 + $0x7c0] sm:$0xff]
    %v342 = vld [vmem:[#allocation2 + $0x7c8] sm:$0xff]
    %v343 = vld [vmem:[#allocation2 + $0x7d0] sm:$0xff]
    %v344 = vld [vmem:[#allocation2 + $0x7d8] sm:$0xff]
    %v345 = vld [vmem:[#allocation2 + $0x7e0] sm:$0xff]
    %v346 = vld [vmem:[#allocation2 + $0x7e8] sm:$0xff]
    %v347 = vld [vmem:[#allocation2 + $0x7f0] sm:$0xff]
    %v348 = vld [vmem:[#allocation2 + $0x7f8] sm:$0xff]
    %v349 = vld [vmem:[#allocation2 + $0x800] sm:$0xff]
    %v350 = vld [vmem:[#allocation2 + $0x808] sm:$0xff]
    %v351 = vld [vmem:[#allocation2 + $0x810] sm:$0xff]
    %v352 = vld [vmem:[#allocation2 + $0x818] sm:$0xff]
    %v353 = vld [vmem:[#allocation2 + $0x820] sm:$0xff]
    %v354 = vld [vmem:[#allocation2 + $0x828] sm:$0xff]
    %v355 = vld [vmem:[#allocation2 + $0x830] sm:$0xff]
    %v356 = vld [vmem:[#allocation2 + $0x838] sm:$0xff]
    %v357 = vld [vmem:[#allocation2 + $0x840] sm:$0xff]
    %v358 = vld [vmem:[#allocation2 + $0x848] sm:$0xff]
    %v359 = vld [vmem:[#allocation2 + $0x850] sm:$0xff]
    %v360 = vld [vmem:[#allocation2 + $0x858] sm:$0xff]
    %v361 = vld [vmem:[#allocation2 + $0x860] sm:$0xff]
    %v362 = vld [vmem:[#allocation2 + $0x868] sm:$0xff]
    %v363 = vld [vmem:[#allocation2 + $0x870] sm:$0xff]
    %v364 = vld [vmem:[#allocation2 + $0x878] sm:$0xff]
    %v365 = vld [vmem:[#allocation2 + $0x880] sm:$0xff]
    %v366 = vld [vmem:[#allocation2 + $0x888] sm:$0xff]
    %v367 = vld [vmem:[#allocation2 + $0x890] sm:$0xff]
    %v368 = vld [vmem:[#allocation2 + $0x898] sm:$0xff]
    %v369 = vld [vmem:[#allocation2 + $0x8a0] sm:$0xff]
    %v370 = vld [vmem:[#allocation2 + $0x8a8] sm:$0xff]
    %v371 = vld [vmem:[#allocation2 + $0x8b0] sm:$0xff]
    %v372 = vld [vmem:[#allocation2 + $0x8b8] sm:$0xff]
    %v373 = vld [vmem:[#allocation2 + $0x8c0] sm:$0xff]
    %v374 = vld [vmem:[#allocation2 + $0x8c8] sm:$0xff]
    %v375 = vld [vmem:[#allocation2 + $0x8d0] sm:$0xff]
    %v376 = vld [vmem:[#allocation2 + $0x8d8] sm:$0xff]
    %v377 = vld [vmem:[#allocation2 + $0x8e0] sm:$0xff]
    %v378 = vld [vmem:[#allocation2 + $0x8e8] sm:$0xff]
    %v379 = vld [vmem:[#allocation2 + $0x8f0] sm:$0xff]
    %v380 = vld [vmem:[#allocation2 + $0x8f8] sm:$0xff]
    %v381 = vld [vmem:[#allocation2 + $0x900] sm:$0xff]
    %v382 = vld [vmem:[#allocation2 + $0x908] sm:$0xff]
    %v383 = vld [vmem:[#allocation2 + $0x910] sm:$0xff]
    %v384 = vld [vmem:[#allocation2 + $0x918] sm:$0xff]
    %v385 = vld [vmem:[#allocation2 + $0x920] sm:$0xff]
    %v386 = vld [vmem:[#allocation2 + $0x928] sm:$0xff]
    %v387 = vld [vmem:[#allocation2 + $0x930] sm:$0xff]
    %v388 = vld [vmem:[#allocation2 + $0x938] sm:$0xff]
    %v389 = vld [vmem:[#allocation2 + $0x940] sm:$0xff]
    %v390 = vld [vmem:[#allocation2 + $0x948] sm:$0xff]
    %v391 = vld [vmem:[#allocation2 + $0x950] sm:$0xff]
    %v392 = vld [vmem:[#allocation2 + $0x958] sm:$0xff]
    %v393 = vld [vmem:[#allocation2 + $0x960] sm:$0xff]
    %v394 = vld [vmem:[#allocation2 + $0x968] sm:$0xff]
    %v395 = vld [vmem:[#allocation2 + $0x970] sm:$0xff]
    %v396 = vld [vmem:[#allocation2 + $0x978] sm:$0xff]
    %v397 = vld [vmem:[#allocation2 + $0x980] sm:$0xff]
    %v398 = vld [vmem:[#allocation2 + $0x988] sm:$0xff]
    %v399 = vld [vmem:[#allocation2 + $0x990] sm:$0xff]
    %v400 = vld [vmem:[#allocation2 + $0x998] sm:$0xff]
    %v401 = vld [vmem:[#allocation2 + $0x9a0] sm:$0xff]
    %v402 = vld [vmem:[#allocation2 + $0x9a8] sm:$0xff]
    %v403 = vld [vmem:[#allocation2 + $0x9b0] sm:$0xff]
    %v404 = vld [vmem:[#allocation2 + $0x9b8] sm:$0xff]
    %v405 = vld [vmem:[#allocation2 + $0x9c0] sm:$0xff]
    %v406 = vld [vmem:[#allocation2 + $0x9c8] sm:$0xff]
    %v407 = vld [vmem:[#allocation2 + $0x9d0] sm:$0xff]
    %v408 = vld [vmem:[#allocation2 + $0x9d8] sm:$0xff]
    %v409 = vld [vmem:[#allocation2 + $0x9e0] sm:$0xff]
    %v410 = vld [vmem:[#allocation2 + $0x9e8] sm:$0xff]
    %v411 = vld [vmem:[#allocation2 + $0x9f0] sm:$0xff]
    %v412 = vld [vmem:[#allocation2 + $0x9f8] sm:$0xff]
    %v413 = vld [vmem:[#allocation2 + $0xa00] sm:$0xff]
    %v414 = vld [vmem:[#allocation2 + $0xa08] sm:$0xff]
    %v415 = vld [vmem:[#allocation2 + $0xa10] sm:$0xff]
    %v416 = vld [vmem:[#allocation2 + $0xa18] sm:$0xff]
    %v417 = vld [vmem:[#allocation2 + $0xa20] sm:$0xff]
    %v418 = vld [vmem:[#allocation2 + $0xa28] sm:$0xff]
    %v419 = vld [vmem:[#allocation2 + $0xa30] sm:$0xff]
    %v420 = vld [vmem:[#allocation2 + $0xa38] sm:$0xff]
    %v421 = vld [vmem:[#allocation2 + $0xa40] sm:$0xff]
    %v422 = vld [vmem:[#allocation2 + $0xa48] sm:$0xff]
    %v423 = vld [vmem:[#allocation2 + $0xa50] sm:$0xff]
    %v424 = vld [vmem:[#allocation2 + $0xa58] sm:$0xff]
    %v425 = vld [vmem:[#allocation2 + $0xa60] sm:$0xff]
    %v426 = vld [vmem:[#allocation2 + $0xa68] sm:$0xff]
    %v427 = vld [vmem:[#allocation2 + $0xa70] sm:$0xff]
    %v428 = vld [vmem:[#allocation2 + $0xa78] sm:$0xff]
    %v429 = vld [vmem:[#allocation2 + $0xa80] sm:$0xff]
    %v430 = vld [vmem:[#allocation2 + $0xa88] sm:$0xff]
    %v431 = vld [vmem:[#allocation2 + $0xa90] sm:$0xff]
    %v432 = vld [vmem:[#allocation2 + $0xa98] sm:$0xff]
    %v433 = vld [vmem:[#allocation2 + $0xaa0] sm:$0xff]
    %v434 = vld [vmem:[#allocation2 + $0xaa8] sm:$0xff]
    %v435 = vld [vmem:[#allocation2 + $0xab0] sm:$0xff]
    %v436 = vld [vmem:[#allocation2 + $0xab8] sm:$0xff]
    %v437 = vld [vmem:[#allocation2 + $0xac0] sm:$0xff]
    %v438 = vld [vmem:[#allocation2 + $0xac8] sm:$0xff]
    %v439 = vld [vmem:[#allocation2 + $0xad0] sm:$0xff]
    %v440 = vld [vmem:[#allocation2 + $0xad8] sm:$0xff]
    %v441 = vld [vmem:[#allocation2 + $0xae0] sm:$0xff]
    %v442 = vld [vmem:[#allocation2 + $0xae8] sm:$0xff]
    %v443 = vld [vmem:[#allocation2 + $0xaf0] sm:$0xff]
    %v444 = vld [vmem:[#allocation2 + $0xaf8] sm:$0xff]
    %v445 = vld [vmem:[#allocation2 + $0xb00] sm:$0xff]
    %v446 = vld [vmem:[#allocation2 + $0xb08] sm:$0xff]
    %v447 = vld [vmem:[#allocation2 + $0xb10] sm:$0xff]
    %v448 = vld [vmem:[#allocation2 + $0xb18] sm:$0xff]
    %v449 = vld [vmem:[#allocation2 + $0xb20] sm:$0xff]
    %v450 = vld [vmem:[#allocation2 + $0xb28] sm:$0xff]
    %v451 = vld [vmem:[#allocation2 + $0xb30] sm:$0xff]
    %v452 = vld [vmem:[#allocation2 + $0xb38] sm:$0xff]
    %v453 = vld [vmem:[#allocation2 + $0xb40] sm:$0xff]
    %v454 = vld [vmem:[#allocation2 + $0xb48] sm:$0xff]
    %v455 = vld [vmem:[#allocation2 + $0xb50] sm:$0xff]
    %v456 = vld [vmem:[#allocation2 + $0xb58] sm:$0xff]
    %v457 = vld [vmem:[#allocation2 + $0xb60] sm:$0xff]
    %v458 = vld [vmem:[#allocation2 + $0xb68] sm:$0xff]
    %v459 = vld [vmem:[#allocation2 + $0xb70] sm:$0xff]
    %v460 = vld [vmem:[#allocation2 + $0xb78] sm:$0xff]
    %v461 = vld [vmem:[#allocation2 + $0xb80] sm:$0xff]
    %v462 = vld [vmem:[#allocation2 + $0xb88] sm:$0xff]
    %v463 = vld [vmem:[#allocation2 + $0xb90] sm:$0xff]
    %v464 = vld [vmem:[#allocation2 + $0xb98] sm:$0xff]
    %v465 = vld [vmem:[#allocation2 + $0xba0] sm:$0xff]
    %v466 = vld [vmem:[#allocation2 + $0xba8] sm:$0xff]
    %v467 = vld [vmem:[#allocation2 + $0xbb0] sm:$0xff]
    %v468 = vld [vmem:[#allocation2 + $0xbb8] sm:$0xff]
    %v469 = vld [vmem:[#allocation2 + $0xbc0] sm:$0xff]
    %v470 = vld [vmem:[#allocation2 + $0xbc8] sm:$0xff]
    %v471 = vld [vmem:[#allocation2 + $0xbd0] sm:$0xff]
    %v472 = vld [vmem:[#allocation2 + $0xbd8] sm:$0xff]
    %v473 = vld [vmem:[#allocation2 + $0xbe0] sm:$0xff]
    %v474 = vld [vmem:[#allocation2 + $0xbe8] sm:$0xff]
    %v475 = vld [vmem:[#allocation2 + $0xbf0] sm:$0xff]
    %v476 = vld [vmem:[#allocation2 + $0xbf8] sm:$0xff]
    %v477 = vld [vmem:[#allocation2 + $0xc00] sm:$0xff]
    %v478 = vld [vmem:[#allocation2 + $0xc08] sm:$0xff]
    %v479 = vld [vmem:[#allocation2 + $0xc10] sm:$0xff]
    %v480 = vld [vmem:[#allocation2 + $0xc18] sm:$0xff]
    %v481 = vld [vmem:[#allocation2 + $0xc20] sm:$0xff]
    %v482 = vld [vmem:[#allocation2 + $0xc28] sm:$0xff]
    %v483 = vld [vmem:[#allocation2 + $0xc30] sm:$0xff]
    %v484 = vld [vmem:[#allocation2 + $0xc38] sm:$0xff]
    %v485 = vld [vmem:[#allocation2 + $0xc40] sm:$0xff]
    %v486 = vld [vmem:[#allocation2 + $0xc48] sm:$0xff]
    %v487 = vld [vmem:[#allocation2 + $0xc50] sm:$0xff]
    %v488 = vld [vmem:[#allocation2 + $0xc58] sm:$0xff]
    %v489 = vld [vmem:[#allocation2 + $0xc60] sm:$0xff]
    %v490 = vld [vmem:[#allocation2 + $0xc68] sm:$0xff]
    %v491 = vld [vmem:[#allocation2 + $0xc70] sm:$0xff]
    %v492 = vld [vmem:[#allocation2 + $0xc78] sm:$0xff]
    %v493 = vld [vmem:[#allocation2 + $0xc80] sm:$0xff]
    %v494 = vld [vmem:[#allocation2 + $0xc88] sm:$0xff]
    %v495 = vld [vmem:[#allocation2 + $0xc90] sm:$0xff]
    %v496 = vld [vmem:[#allocation2 + $0xc98] sm:$0xff]
    %v497 = vld [vmem:[#allocation2 + $0xca0] sm:$0xff]
    %v498 = vld [vmem:[#allocation2 + $0xca8] sm:$0xff]
    %v499 = vld [vmem:[#allocation2 + $0xcb0] sm:$0xff]
    %v500 = vld [vmem:[#allocation2 + $0xcb8] sm:$0xff]
    %v501 = vld [vmem:[#allocation2 + $0xcc0] sm:$0xff]
    %v502 = vld [vmem:[#allocation2 + $0xcc8] sm:$0xff]
    %v503 = vld [vmem:[#allocation2 + $0xcd0] sm:$0xff]
    %v504 = vld [vmem:[#allocation2 + $0xcd8] sm:$0xff]
    %v505 = vld [vmem:[#allocation2 + $0xce0] sm:$0xff]
    %v506 = vld [vmem:[#allocation2 + $0xce8] sm:$0xff]
    %v507 = vld [vmem:[#allocation2 + $0xcf0] sm:$0xff]
    %v508 = vld [vmem:[#allocation2 + $0xcf8] sm:$0xff]
    %v509 = vld [vmem:[#allocation2 + $0xd00] sm:$0xff]
    %v510 = vld [vmem:[#allocation2 + $0xd08] sm:$0xff]
    %v511 = vld [vmem:[#allocation2 + $0xd10] sm:$0xff]
    %v512 = vld [vmem:[#allocation2 + $0xd18] sm:$0xff]
    %v513 = vld [vmem:[#allocation2 + $0xd20] sm:$0xff]
    %v514 = vld [vmem:[#allocation2 + $0xd28] sm:$0xff]
    %v515 = vld [vmem:[#allocation2 + $0xd30] sm:$0xff]
    %v516 = vld [vmem:[#allocation2 + $0xd38] sm:$0xff]
    %v517 = vld [vmem:[#allocation2 + $0xd40] sm:$0xff]
    %v518 = vld [vmem:[#allocation2 + $0xd48] sm:$0xff]
    %v519 = vld [vmem:[#allocation2 + $0xd50] sm:$0xff]
    %v520 = vld [vmem:[#allocation2 + $0xd58] sm:$0xff]
    %v521 = vld [vmem:[#allocation2 + $0xd60] sm:$0xff]
    %v522 = vld [vmem:[#allocation2 + $0xd68] sm:$0xff]
    %v523 = vld [vmem:[#allocation2 + $0xd70] sm:$0xff]
    %v524 = vld [vmem:[#allocation2 + $0xd78] sm:$0xff]
    %v525 = vld [vmem:[#allocation2 + $0xd80] sm:$0xff]
    %v526 = vld [vmem:[#allocation2 + $0xd88] sm:$0xff]
    %v527 = vld [vmem:[#allocation2 + $0xd90] sm:$0xff]
    %v528 = vld [vmem:[#allocation2 + $0xd98] sm:$0xff]
    %v529 = vld [vmem:[#allocation2 + $0xda0] sm:$0xff]
    %v530 = vld [vmem:[#allocation2 + $0xda8] sm:$0xff]
    %v531 = vld [vmem:[#allocation2 + $0xdb0] sm:$0xff]
    %v532 = vld [vmem:[#allocation2 + $0xdb8] sm:$0xff]
    %v533 = vld [vmem:[#allocation2 + $0xdc0] sm:$0xff]
    %v534 = vld [vmem:[#allocation2 + $0xdc8] sm:$0xff]
    %v535 = vld [vmem:[#allocation2 + $0xdd0] sm:$0xff]
    %v536 = vld [vmem:[#allocation2 + $0xdd8] sm:$0xff]
    %v537 = vld [vmem:[#allocation2 + $0xde0] sm:$0xff]
    %v538 = vld [vmem:[#allocation2 + $0xde8] sm:$0xff]
    %v539 = vld [vmem:[#allocation2 + $0xdf0] sm:$0xff]
    %v540 = vld [vmem:[#allocation2 + $0xdf8] sm:$0xff]
    %v541 = vld [vmem:[#allocation2 + $0xe00] sm:$0xff]
    %v542 = vld [vmem:[#allocation2 + $0xe08] sm:$0xff]
    %v543 = vld [vmem:[#allocation2 + $0xe10] sm:$0xff]
    %v544 = vld [vmem:[#allocation2 + $0xe18] sm:$0xff]
    %v545 = vld [vmem:[#allocation2 + $0xe20] sm:$0xff]
    %v546 = vld [vmem:[#allocation2 + $0xe28] sm:$0xff]
    %v547 = vld [vmem:[#allocation2 + $0xe30] sm:$0xff]
    %v548 = vld [vmem:[#allocation2 + $0xe38] sm:$0xff]
    %v549 = vld [vmem:[#allocation2 + $0xe40] sm:$0xff]
    %v550 = vld [vmem:[#allocation2 + $0xe48] sm:$0xff]
    %v551 = vld [vmem:[#allocation2 + $0xe50] sm:$0xff]
    %v552 = vld [vmem:[#allocation2 + $0xe58] sm:$0xff]
    %v553 = vld [vmem:[#allocation2 + $0xe60] sm:$0xff]
    %v554 = vld [vmem:[#allocation2 + $0xe68] sm:$0xff]
    %v555 = vld [vmem:[#allocation2 + $0xe70] sm:$0xff]
    %v556 = vld [vmem:[#allocation2 + $0xe78] sm:$0xff]
    %v557 = vld [vmem:[#allocation2 + $0xe80] sm:$0xff]
    %v558 = vld [vmem:[#allocation2 + $0xe88] sm:$0xff]
    %v559 = vld [vmem:[#allocation2 + $0xe90] sm:$0xff]
    %v560 = vld [vmem:[#allocation2 + $0xe98] sm:$0xff]
    %v561 = vld [vmem:[#allocation2 + $0xea0] sm:$0xff]
    %v562 = vld [vmem:[#allocation2 + $0xea8] sm:$0xff]
    %v563 = vld [vmem:[#allocation2 + $0xeb0] sm:$0xff]
    %v564 = vld [vmem:[#allocation2 + $0xeb8] sm:$0xff]
    %v565 = vld [vmem:[#allocation2 + $0xec0] sm:$0xff]
    %v566 = vld [vmem:[#allocation2 + $0xec8] sm:$0xff]
    %v567 = vld [vmem:[#allocation2 + $0xed0] sm:$0xff]
    %v568 = vld [vmem:[#allocation2 + $0xed8] sm:$0xff]
    %v569 = vld [vmem:[#allocation2 + $0xee0] sm:$0xff]
    %v570 = vld [vmem:[#allocation2 + $0xee8] sm:$0xff]
    %v571 = vld [vmem:[#allocation2 + $0xef0] sm:$0xff]
    %v572 = vld [vmem:[#allocation2 + $0xef8] sm:$0xff]
    %v573 = vld [vmem:[#allocation2 + $0xf00] sm:$0xff]
    %v574 = vld [vmem:[#allocation2 + $0xf08] sm:$0xff]
    %v575 = vld [vmem:[#allocation2 + $0xf10] sm:$0xff]
    %v576 = vld [vmem:[#allocation2 + $0xf18] sm:$0xff]
    %v577 = vld [vmem:[#allocation2 + $0xf20] sm:$0xff]
    %v578 = vld [vmem:[#allocation2 + $0xf28] sm:$0xff]
    %v579 = vld [vmem:[#allocation2 + $0xf30] sm:$0xff]
    %v580 = vld [vmem:[#allocation2 + $0xf38] sm:$0xff]
    %v581 = vld [vmem:[#allocation2 + $0xf40] sm:$0xff]
    %v582 = vld [vmem:[#allocation2 + $0xf48] sm:$0xff]
    %v583 = vld [vmem:[#allocation2 + $0xf50] sm:$0xff]
    %v584 = vld [vmem:[#allocation2 + $0xf58] sm:$0xff]
    %v585 = vld [vmem:[#allocation2 + $0xf60] sm:$0xff]
    %v586 = vld [vmem:[#allocation2 + $0xf68] sm:$0xff]
    %v587 = vld [vmem:[#allocation2 + $0xf70] sm:$0xff]
    %v588 = vld [vmem:[#allocation2 + $0xf78] sm:$0xff]
    %v589 = vld [vmem:[#allocation2 + $0xf80] sm:$0xff]
    %v590 = vld [vmem:[#allocation2 + $0xf88] sm:$0xff]
    %v591 = vld [vmem:[#allocation2 + $0xf90] sm:$0xff]
    %v592 = vld [vmem:[#allocation2 + $0xf98] sm:$0xff]
    %v593 = vld [vmem:[#allocation2 + $0xfa0] sm:$0xff]
    %v594 = vld [vmem:[#allocation2 + $0xfa8] sm:$0xff]
    %v595 = vld [vmem:[#allocation2 + $0xfb0] sm:$0xff]
    %v596 = vld [vmem:[#allocation2 + $0xfb8] sm:$0xff]
    %v597 = vld [vmem:[#allocation2 + $0xfc0] sm:$0xff]
    %v598 = vld [vmem:[#allocation2 + $0xfc8] sm:$0xff]
    %v599 = vld [vmem:[#allocation2 + $0xfd0] sm:$0xff]
    %v600 = vld [vmem:[#allocation2 + $0xfd8] sm:$0xff]
    %v601 = vld [vmem:[#allocation2 + $0xfe0] sm:$0xff]
    %v602 = vld [vmem:[#allocation2 + $0xfe8] sm:$0xff]
    %v603 = vld [vmem:[#allocation2 + $0xff0] sm:$0xff]
    %v604 = vld [vmem:[#allocation2 + $0xff8] sm:$0xff]
    %v605 = vld [vmem:[#allocation2 + $0x1000] sm:$0xff]
    %v606 = vld [vmem:[#allocation2 + $0x1008] sm:$0xff]
    %v607 = vld [vmem:[#allocation2 + $0x1010] sm:$0xff]
    %v608 = vld [vmem:[#allocation2 + $0x1018] sm:$0xff]
    %v609 = vld [vmem:[#allocation2 + $0x1020] sm:$0xff]
    %v610 = vld [vmem:[#allocation2 + $0x1028] sm:$0xff]
    %v611 = vld [vmem:[#allocation2 + $0x1030] sm:$0xff]
    %v612 = vld [vmem:[#allocation2 + $0x1038] sm:$0xff]
    %v613 = vld [vmem:[#allocation2 + $0x1040] sm:$0xff]
    %v614 = vld [vmem:[#allocation2 + $0x1048] sm:$0xff]
    %v615 = vld [vmem:[#allocation2 + $0x1050] sm:$0xff]
    %v616 = vld [vmem:[#allocation2 + $0x1058] sm:$0xff]
    %v617 = vld [vmem:[#allocation2 + $0x1060] sm:$0xff]
    %v618 = vld [vmem:[#allocation2 + $0x1068] sm:$0xff]
    %v619 = vld [vmem:[#allocation2 + $0x1070] sm:$0xff]
    %v620 = vld [vmem:[#allocation2 + $0x1078] sm:$0xff]
    %v621 = vld [vmem:[#allocation2 + $0x1080] sm:$0xff]
    %v622 = vld [vmem:[#allocation2 + $0x1088] sm:$0xff]
    %v623 = vld [vmem:[#allocation2 + $0x1090] sm:$0xff]
    %v624 = vld [vmem:[#allocation2 + $0x1098] sm:$0xff]
    %v625 = vld [vmem:[#allocation2 + $0x10a0] sm:$0xff]
    %v626 = vld [vmem:[#allocation2 + $0x10a8] sm:$0xff]
    %v627 = vld [vmem:[#allocation2 + $0x10b0] sm:$0xff]
    %v628 = vld [vmem:[#allocation2 + $0x10b8] sm:$0xff]
    %v629 = vld [vmem:[#allocation2 + $0x10c0] sm:$0xff]
    %v630 = vld [vmem:[#allocation2 + $0x10c8] sm:$0xff]
    %v631 = vld [vmem:[#allocation2 + $0x10d0] sm:$0xff]
    %v632 = vld [vmem:[#allocation2 + $0x10d8] sm:$0xff]
    %v633 = vld [vmem:[#allocation2 + $0x10e0] sm:$0xff]
    %v634 = vld [vmem:[#allocation2 + $0x10e8] sm:$0xff]
    %v635 = vld [vmem:[#allocation2 + $0x10f0] sm:$0xff]
    %v636 = vld [vmem:[#allocation2 + $0x10f8] sm:$0xff]
    %v637 = vld [vmem:[#allocation2 + $0x1100] sm:$0xff]
    %v638 = vld [vmem:[#allocation2 + $0x1108] sm:$0xff]
    %v639 = vld [vmem:[#allocation2 + $0x1110] sm:$0xff]
    %v640 = vld [vmem:[#allocation2 + $0x1118] sm:$0xff]
    %v641 = vld [vmem:[#allocation2 + $0x1120] sm:$0xff]
    %v642 = vld [vmem:[#allocation2 + $0x1128] sm:$0xff]
    %v643 = vld [vmem:[#allocation2 + $0x1130] sm:$0xff]
    %v644 = vld [vmem:[#allocation2 + $0x1138] sm:$0xff]
    %v645 = vld [vmem:[#allocation2 + $0x1140] sm:$0xff]
    %v646 = vld [vmem:[#allocation2 + $0x1148] sm:$0xff]
    %v647 = vld [vmem:[#allocation2 + $0x1150] sm:$0xff]
    %v648 = vld [vmem:[#allocation2 + $0x1158] sm:$0xff]
    %v649 = vld [vmem:[#allocation2 + $0x1160] sm:$0xff]
    %v650 = vld [vmem:[#allocation2 + $0x1168] sm:$0xff]
    %v651 = vld [vmem:[#allocation2 + $0x1170] sm:$0xff]
    %v652 = vld [vmem:[#allocation2 + $0x1178] sm:$0xff]
    %v653 = vld [vmem:[#allocation2 + $0x1180] sm:$0xff]
    %v654 = vld [vmem:[#allocation2 + $0x1188] sm:$0xff]
    %v655 = vld [vmem:[#allocation2 + $0x1190] sm:$0xff]
    %v656 = vld [vmem:[#allocation2 + $0x1198] sm:$0xff]
    %v657 = vld [vmem:[#allocation2 + $0x11a0] sm:$0xff]
    %v658 = vld [vmem:[#allocation2 + $0x11a8] sm:$0xff]
    %v659 = vld [vmem:[#allocation2 + $0x11b0] sm:$0xff]
    %v660 = vld [vmem:[#allocation2 + $0x11b8] sm:$0xff]
    %v661 = vld [vmem:[#allocation2 + $0x11c0] sm:$0xff]
    %v662 = vld [vmem:[#allocation2 + $0x11c8] sm:$0xff]
    %v663 = vld [vmem:[#allocation2 + $0x11d0] sm:$0xff]
    %v664 = vld [vmem:[#allocation2 + $0x11d8] sm:$0xff]
    %v665 = vld [vmem:[#allocation2 + $0x11e0] sm:$0xff]
    %v666 = vld [vmem:[#allocation2 + $0x11e8] sm:$0xff]
    %v667 = vld [vmem:[#allocation2 + $0x11f0] sm:$0xff]
    %v668 = vld [vmem:[#allocation2 + $0x11f8] sm:$0xff]
    %v669 = vld [vmem:[#allocation2 + $0x1200] sm:$0xff]
    %v670 = vld [vmem:[#allocation2 + $0x1208] sm:$0xff]
    %v671 = vld [vmem:[#allocation2 + $0x1210] sm:$0xff]
    %v672 = vld [vmem:[#allocation2 + $0x1218] sm:$0xff]
    %v673 = vld [vmem:[#allocation2 + $0x1220] sm:$0xff]
    %v674 = vld [vmem:[#allocation2 + $0x1228] sm:$0xff]
    %v675 = vld [vmem:[#allocation2 + $0x1230] sm:$0xff]
    %v676 = vld [vmem:[#allocation2 + $0x1238] sm:$0xff]
    %v677 = vld [vmem:[#allocation2 + $0x1240] sm:$0xff]
    %v678 = vld [vmem:[#allocation2 + $0x1248] sm:$0xff]
    %v679 = vld [vmem:[#allocation2 + $0x1250] sm:$0xff]
    %v680 = vld [vmem:[#allocation2 + $0x1258] sm:$0xff]
    %v681 = vld [vmem:[#allocation5] sm:$0xf]
    %v683 = vlaneseq
    %v684 = vshrl.u32 %v683, 7
    %v685 = vsub.s32 0, %v684
    %v686 = vrot.slane %v681, %v685
    %v687 = vlaneseq
    %v688 = vshrl.u32 %v687, 7
    %v689 = vsub.s32 1, %v688
    %v690 = vrot.slane %v681, %v689
    %v691 = vlaneseq
    %v692 = vshrl.u32 %v691, 7
    %v693 = vsub.s32 2, %v692
    %v694 = vrot.slane %v681, %v693
    %v695 = vlaneseq
    %v696 = vshrl.u32 %v695, 7
    %v697 = vsub.s32 3, %v696
    %v698 = vrot.slane %v681, %v697
    %v706 = vcombine.high %v90, %v90
    %v708 = vunpack.c.l.s4 1966171168
    %v709 = vunpack.c.0.s8 %v708
    %v710 = vlaneseq
    %v711 = vshrl.u32 %v710, 7
    %v712 = vsub.s32 %v709, %v711
    %v713 = vrot.slane %v90, %v712
    %v715 = vunpack.c.l.s4 1966171168
    %v716 = vunpack.c.0.s8 %v715
    %v717 = vlaneseq
    %v718 = vshrl.u32 %v717, 7
    %v719 = vsub.s32 %v716, %v718
    %v720 = vrot.slane %v706, %v719
    %v721 = vcombine.high %v713, %v713
    %v722 = vcombine.high %v720, %v720
    %v724 = vunpack.c.l.s4 1966171168
    %v725 = vunpack.c.0.s8 %v724
    %v726 = vlaneseq
    %v727 = vshrl.u32 %v726, 7
    %v728 = vsub.s32 %v725, %v727
    %v729 = vrot.slane %v713, %v728
    %v731 = vunpack.c.l.s4 1966171168
    %v732 = vunpack.c.0.s8 %v731
    %v733 = vlaneseq
    %v734 = vshrl.u32 %v733, 7
    %v735 = vsub.s32 %v732, %v734
    %v736 = vrot.slane %v720, %v735
    %v738 = vunpack.c.l.s4 1966171168
    %v739 = vunpack.c.0.s8 %v738
    %v740 = vlaneseq
    %v741 = vshrl.u32 %v740, 7
    %v742 = vsub.s32 %v739, %v741
    %v743 = vrot.slane %v721, %v742
    %v745 = vunpack.c.l.s4 1966171168
    %v746 = vunpack.c.0.s8 %v745
    %v747 = vlaneseq
    %v748 = vshrl.u32 %v747, 7
    %v749 = vsub.s32 %v746, %v748
    %v750 = vrot.slane %v722, %v749
    %v751 = vcombine.high %v729, %v729
    %v752 = vcombine.high %v736, %v736
    %v753 = vcombine.high %v743, %v743
    %v754 = vcombine.high %v750, %v750
    %v755 = vcombine.high %v91, %v91
    %v757 = vunpack.c.l.s4 1966171168
    %v758 = vunpack.c.0.s8 %v757
    %v759 = vlaneseq
    %v760 = vshrl.u32 %v759, 7
    %v761 = vsub.s32 %v758, %v760
    %v762 = vrot.slane %v91, %v761
    %v764 = vunpack.c.l.s4 1966171168
    %v765 = vunpack.c.0.s8 %v764
    %v766 = vlaneseq
    %v767 = vshrl.u32 %v766, 7
    %v768 = vsub.s32 %v765, %v767
    %v769 = vrot.slane %v755, %v768
    %v770 = vcombine.high %v762, %v762
    %v771 = vcombine.high %v769, %v769
    %v773 = vunpack.c.l.s4 1966171168
    %v774 = vunpack.c.0.s8 %v773
    %v775 = vlaneseq
    %v776 = vshrl.u32 %v775, 7
    %v777 = vsub.s32 %v774, %v776
    %v778 = vrot.slane %v762, %v777
    %v780 = vunpack.c.l.s4 1966171168
    %v781 = vunpack.c.0.s8 %v780
    %v782 = vlaneseq
    %v783 = vshrl.u32 %v782, 7
    %v784 = vsub.s32 %v781, %v783
    %v785 = vrot.slane %v769, %v784
    %v787 = vunpack.c.l.s4 1966171168
    %v788 = vunpack.c.0.s8 %v787
    %v789 = vlaneseq
    %v790 = vshrl.u32 %v789, 7
    %v791 = vsub.s32 %v788, %v790
    %v792 = vrot.slane %v770, %v791
    %v794 = vunpack.c.l.s4 1966171168
    %v795 = vunpack.c.0.s8 %v794
    %v796 = vlaneseq
    %v797 = vshrl.u32 %v796, 7
    %v798 = vsub.s32 %v795, %v797
    %v799 = vrot.slane %v771, %v798
    %v800 = vcombine.high %v778, %v778
    %v801 = vcombine.high %v785, %v785
    %v802 = vcombine.high %v792, %v792
    %v803 = vcombine.high %v799, %v799
    %v805 = vunpack.c.l.s4 1966171168
    %v806 = vunpack.c.0.s8 %v805
    %v807 = vlaneseq
    %v808 = vshrl.u32 %v807, 7
    %v809 = vsub.s32 %v806, %v808
    %v810 = vrot.slane %v92, %v809
    %v811 = vcombine.high %v810, %v810
    %v813 = vunpack.c.l.s4 1966171168
    %v814 = vunpack.c.0.s8 %v813
    %v815 = vlaneseq
    %v816 = vshrl.u32 %v815, 7
    %v817 = vsub.s32 %v814, %v816
    %v818 = vrot.slane %v810, %v817
    %v820 = vunpack.c.l.s4 1966171168
    %v821 = vunpack.c.0.s8 %v820
    %v822 = vlaneseq
    %v823 = vshrl.u32 %v822, 7
    %v824 = vsub.s32 %v821, %v823
    %v825 = vrot.slane %v811, %v824
    %v826 = vcombine.high %v818, %v818
    %v1433 = vunpack.c.l.b16 %v93
    %v1434 = vunpack.c.h.b16 %v93
    %v1435 = vunpack.c.l.b16 %v94
    %v1436 = vunpack.c.h.b16 %v94
    %v1437 = vunpack.c.l.b16 %v95
    %v1438 = vunpack.c.h.b16 %v95
    %v1439 = vunpack.c.l.b16 %v96
    %v1440 = vunpack.c.h.b16 %v96
    %v1441 = vunpack.c.l.b16 %v97
    %v1442 = vunpack.c.h.b16 %v97
    %v1443 = vunpack.c.l.b16 %v98
    %v1444 = vunpack.c.h.b16 %v98
    %v1445 = vunpack.c.l.b16 %v99
    %v1446 = vunpack.c.h.b16 %v99
    %v1447 = vunpack.c.l.b16 %v100
    %v1448 = vunpack.c.h.b16 %v100
    %v1449 = vunpack.c.l.b16 %v101
    %v1450 = vunpack.c.h.b16 %v101
    %v1451 = vunpack.c.l.b16 %v102
    %v1452 = vunpack.c.h.b16 %v102
    %v1453 = vunpack.c.l.b16 %v103
    %v1454 = vunpack.c.h.b16 %v103
    %v1455 = vunpack.c.l.b16 %v104
    %v1456 = vunpack.c.h.b16 %v104
    %v1457 = vunpack.c.l.b16 %v105
    %v1458 = vunpack.c.h.b16 %v105
    %v1459 = vunpack.c.l.b16 %v106
    %v1460 = vunpack.c.h.b16 %v106
    %v1461 = vunpack.c.l.b16 %v107
    %v1462 = vunpack.c.h.b16 %v107
    %v1463 = vunpack.c.l.b16 %v108
    %v1464 = vunpack.c.h.b16 %v108
    %v1465 = vunpack.c.l.b16 %v109
    %v1466 = vunpack.c.h.b16 %v109
    %v1467 = vunpack.c.l.b16 %v110
    %v1468 = vunpack.c.h.b16 %v110
    %v1469 = vunpack.c.l.b16 %v111
    %v1470 = vunpack.c.h.b16 %v111
    %v1471 = vunpack.c.l.b16 %v112
    %v1472 = vunpack.c.h.b16 %v112
    %v1473 = vunpack.c.l.b16 %v113
    %v1474 = vunpack.c.h.b16 %v113
    %v1475 = vunpack.c.l.b16 %v114
    %v1476 = vunpack.c.h.b16 %v114
    %v1477 = vunpack.c.l.b16 %v115
    %v1478 = vunpack.c.h.b16 %v115
    %v1479 = vunpack.c.l.b16 %v116
    %v1480 = vunpack.c.h.b16 %v116
    %v1481 = vunpack.c.l.b16 %v117
    %v1482 = vunpack.c.h.b16 %v117
    %v1483 = vunpack.c.l.b16 %v118
    %v1484 = vunpack.c.h.b16 %v118
    %v1485 = vunpack.c.l.b16 %v119
    %v1486 = vunpack.c.h.b16 %v119
    %v1487 = vunpack.c.l.b16 %v120
    %v1488 = vunpack.c.h.b16 %v120
    %v1489 = vunpack.c.l.b16 %v121
    %v1490 = vunpack.c.h.b16 %v121
    %v1491 = vunpack.c.l.b16 %v122
    %v1492 = vunpack.c.h.b16 %v122
    %v1493 = vunpack.c.l.b16 %v123
    %v1494 = vunpack.c.h.b16 %v123
    %v1495 = vunpack.c.l.b16 %v124
    %v1496 = vunpack.c.h.b16 %v124
    %v1497 = vunpack.c.l.b16 %v125
    %v1498 = vunpack.c.h.b16 %v125
    %v1499 = vunpack.c.l.b16 %v126
    %v1500 = vunpack.c.h.b16 %v126
    %v1501 = vunpack.c.l.b16 %v127
    %v1502 = vunpack.c.h.b16 %v127
    %v1503 = vunpack.c.l.b16 %v128
    %v1504 = vunpack.c.h.b16 %v128
    %v1505 = vunpack.c.l.b16 %v129
    %v1506 = vunpack.c.h.b16 %v129
    %v1507 = vunpack.c.l.b16 %v130
    %v1508 = vunpack.c.h.b16 %v130
    %v1509 = vunpack.c.l.b16 %v131
    %v1510 = vunpack.c.h.b16 %v131
    %v1511 = vunpack.c.l.b16 %v132
    %v1512 = vunpack.c.h.b16 %v132
    %v1513 = vunpack.c.l.b16 %v133
    %v1514 = vunpack.c.h.b16 %v133
    %v1515 = vunpack.c.l.b16 %v134
    %v1516 = vunpack.c.h.b16 %v134
    %v1517 = vunpack.c.l.b16 %v135
    %v1518 = vunpack.c.h.b16 %v135
    %v1519 = vunpack.c.l.b16 %v136
    %v1520 = vunpack.c.h.b16 %v136
    %v1521 = vunpack.c.l.b16 %v137
    %v1522 = vunpack.c.h.b16 %v137
    %v1523 = vunpack.c.l.b16 %v138
    %v1524 = vunpack.c.h.b16 %v138
    %v1525 = vunpack.c.l.b16 %v139
    %v1526 = vunpack.c.h.b16 %v139
    %v1527 = vunpack.c.l.b16 %v140
    %v1528 = vunpack.c.h.b16 %v140
    %v1529 = vunpack.c.l.b16 %v141
    %v1530 = vunpack.c.h.b16 %v141
    %v1531 = vunpack.c.l.b16 %v142
    %v1532 = vunpack.c.h.b16 %v142
    %v1533 = vunpack.c.l.b16 %v143
    %v1534 = vunpack.c.h.b16 %v143
    %v1535 = vunpack.c.l.b16 %v144
    %v1536 = vunpack.c.h.b16 %v144
    %v1537 = vunpack.c.l.b16 %v145
    %v1538 = vunpack.c.h.b16 %v145
    %v1539 = vunpack.c.l.b16 %v146
    %v1540 = vunpack.c.h.b16 %v146
    %v1541 = vunpack.c.l.b16 %v147
    %v1542 = vunpack.c.h.b16 %v147
    %v1543 = vunpack.c.l.b16 %v148
    %v1544 = vunpack.c.h.b16 %v148
    %v1545 = vunpack.c.l.b16 %v149
    %v1546 = vunpack.c.h.b16 %v149
    %v1547 = vunpack.c.l.b16 %v150
    %v1548 = vunpack.c.h.b16 %v150
    %v1549 = vunpack.c.l.b16 %v151
    %v1550 = vunpack.c.h.b16 %v151
    %v1551 = vunpack.c.l.b16 %v152
    %v1552 = vunpack.c.h.b16 %v152
    %v1553 = vunpack.c.l.b16 %v153
    %v1554 = vunpack.c.h.b16 %v153
    %v1555 = vunpack.c.l.b16 %v154
    %v1556 = vunpack.c.h.b16 %v154
    %v1557 = vunpack.c.l.b16 %v155
    %v1558 = vunpack.c.h.b16 %v155
    %v1559 = vunpack.c.l.b16 %v156
    %v1560 = vunpack.c.h.b16 %v156
    %v1561 = vunpack.c.l.b16 %v157
    %v1562 = vunpack.c.h.b16 %v157
    %v1563 = vunpack.c.l.b16 %v158
    %v1564 = vunpack.c.h.b16 %v158
    %v1565 = vunpack.c.l.b16 %v159
    %v1566 = vunpack.c.h.b16 %v159
    %v1567 = vunpack.c.l.b16 %v160
    %v1568 = vunpack.c.h.b16 %v160
    %v1569 = vunpack.c.l.b16 %v161
    %v1570 = vunpack.c.h.b16 %v161
    %v1571 = vunpack.c.l.b16 %v162
    %v1572 = vunpack.c.h.b16 %v162
    %v1573 = vunpack.c.l.b16 %v163
    %v1574 = vunpack.c.h.b16 %v163
    %v1575 = vunpack.c.l.b16 %v164
    %v1576 = vunpack.c.h.b16 %v164
    %v1577 = vunpack.c.l.b16 %v165
    %v1578 = vunpack.c.h.b16 %v165
    %v1579 = vunpack.c.l.b16 %v166
    %v1580 = vunpack.c.h.b16 %v166
    %v1581 = vunpack.c.l.b16 %v167
    %v1582 = vunpack.c.h.b16 %v167
    %v1583 = vunpack.c.l.b16 %v168
    %v1584 = vunpack.c.h.b16 %v168
    %v1585 = vunpack.c.l.b16 %v169
    %v1586 = vunpack.c.h.b16 %v169
    %v1587 = vunpack.c.l.b16 %v170
    %v1588 = vunpack.c.h.b16 %v170
    %v1589 = vunpack.c.l.b16 %v171
    %v1590 = vunpack.c.h.b16 %v171
    %v1591 = vunpack.c.l.b16 %v172
    %v1592 = vunpack.c.h.b16 %v172
    %v1593 = vunpack.c.l.b16 %v173
    %v1594 = vunpack.c.h.b16 %v173
    %v1595 = vunpack.c.l.b16 %v174
    %v1596 = vunpack.c.h.b16 %v174
    %v1597 = vunpack.c.l.b16 %v175
    %v1598 = vunpack.c.h.b16 %v175
    %v1599 = vunpack.c.l.b16 %v176
    %v1600 = vunpack.c.h.b16 %v176
    %v1601 = vunpack.c.l.b16 %v177
    %v1602 = vunpack.c.h.b16 %v177
    %v1603 = vunpack.c.l.b16 %v178
    %v1604 = vunpack.c.h.b16 %v178
    %v1605 = vunpack.c.l.b16 %v179
    %v1606 = vunpack.c.h.b16 %v179
    %v1607 = vunpack.c.l.b16 %v180
    %v1608 = vunpack.c.h.b16 %v180
    %v1609 = vunpack.c.l.b16 %v181
    %v1610 = vunpack.c.h.b16 %v181
    %v1611 = vunpack.c.l.b16 %v182
    %v1612 = vunpack.c.h.b16 %v182
    %v1613 = vunpack.c.l.b16 %v183
    %v1614 = vunpack.c.h.b16 %v183
    %v1615 = vunpack.c.l.b16 %v184
    %v1616 = vunpack.c.h.b16 %v184
    %v1617 = vunpack.c.l.b16 %v185
    %v1618 = vunpack.c.h.b16 %v185
    %v1619 = vunpack.c.l.b16 %v186
    %v1620 = vunpack.c.h.b16 %v186
    %v1621 = vunpack.c.l.b16 %v187
    %v1622 = vunpack.c.h.b16 %v187
    %v1623 = vunpack.c.l.b16 %v188
    %v1624 = vunpack.c.h.b16 %v188
    %v1625 = vunpack.c.l.b16 %v189
    %v1626 = vunpack.c.h.b16 %v189
    %v1627 = vunpack.c.l.b16 %v190
    %v1628 = vunpack.c.h.b16 %v190
    %v1629 = vunpack.c.l.b16 %v191
    %v1630 = vunpack.c.h.b16 %v191
    %v1631 = vunpack.c.l.b16 %v192
    %v1632 = vunpack.c.h.b16 %v192
    %v1633 = vunpack.c.l.b16 %v193
    %v1634 = vunpack.c.h.b16 %v193
    %v1635 = vunpack.c.l.b16 %v194
    %v1636 = vunpack.c.h.b16 %v194
    %v1637 = vunpack.c.l.b16 %v195
    %v1638 = vunpack.c.h.b16 %v195
    %v1639 = vunpack.c.l.b16 %v196
    %v1640 = vunpack.c.h.b16 %v196
    %v1641 = vunpack.c.l.b16 %v197
    %v1642 = vunpack.c.h.b16 %v197
    %v1643 = vunpack.c.l.b16 %v198
    %v1644 = vunpack.c.h.b16 %v198
    %v1645 = vunpack.c.l.b16 %v199
    %v1646 = vunpack.c.h.b16 %v199
    %v1647 = vunpack.c.l.b16 %v200
    %v1648 = vunpack.c.h.b16 %v200
    %v1649 = vunpack.c.l.b16 %v201
    %v1650 = vunpack.c.h.b16 %v201
    %v1651 = vunpack.c.l.b16 %v202
    %v1652 = vunpack.c.h.b16 %v202
    %v1653 = vunpack.c.l.b16 %v203
    %v1654 = vunpack.c.h.b16 %v203
    %v1655 = vunpack.c.l.b16 %v204
    %v1656 = vunpack.c.h.b16 %v204
    %v1657 = vunpack.c.l.b16 %v205
    %v1658 = vunpack.c.h.b16 %v205
    %v1659 = vunpack.c.l.b16 %v206
    %v1660 = vunpack.c.h.b16 %v206
    %v1661 = vunpack.c.l.b16 %v207
    %v1662 = vunpack.c.h.b16 %v207
    %v1663 = vunpack.c.l.b16 %v208
    %v1664 = vunpack.c.h.b16 %v208
    %v1665 = vunpack.c.l.b16 %v209
    %v1666 = vunpack.c.h.b16 %v209
    %v1667 = vunpack.c.l.b16 %v210
    %v1668 = vunpack.c.h.b16 %v210
    %v1669 = vunpack.c.l.b16 %v211
    %v1670 = vunpack.c.h.b16 %v211
    %v1671 = vunpack.c.l.b16 %v212
    %v1672 = vunpack.c.h.b16 %v212
    %v1673 = vunpack.c.l.b16 %v213
    %v1674 = vunpack.c.h.b16 %v213
    %v1675 = vunpack.c.l.b16 %v214
    %v1676 = vunpack.c.h.b16 %v214
    %v1677 = vunpack.c.l.b16 %v215
    %v1678 = vunpack.c.h.b16 %v215
    %v1679 = vunpack.c.l.b16 %v216
    %v1680 = vunpack.c.h.b16 %v216
    %v1681 = vunpack.c.l.b16 %v217
    %v1682 = vunpack.c.h.b16 %v217
    %v1683 = vunpack.c.l.b16 %v218
    %v1684 = vunpack.c.h.b16 %v218
    %v1685 = vunpack.c.l.b16 %v219
    %v1686 = vunpack.c.h.b16 %v219
    %v1687 = vunpack.c.l.b16 %v220
    %v1688 = vunpack.c.h.b16 %v220
    %v1689 = vunpack.c.l.b16 %v221
    %v1690 = vunpack.c.h.b16 %v221
    %v1691 = vunpack.c.l.b16 %v222
    %v1692 = vunpack.c.h.b16 %v222
    %v1693 = vunpack.c.l.b16 %v223
    %v1694 = vunpack.c.h.b16 %v223
    %v1695 = vunpack.c.l.b16 %v224
    %v1696 = vunpack.c.h.b16 %v224
    %v1697 = vunpack.c.l.b16 %v225
    %v1698 = vunpack.c.h.b16 %v225
    %v1699 = vunpack.c.l.b16 %v226
    %v1700 = vunpack.c.h.b16 %v226
    %v1701 = vunpack.c.l.b16 %v227
    %v1702 = vunpack.c.h.b16 %v227
    %v1703 = vunpack.c.l.b16 %v228
    %v1704 = vunpack.c.h.b16 %v228
    %v1705 = vunpack.c.l.b16 %v229
    %v1706 = vunpack.c.h.b16 %v229
    %v1707 = vunpack.c.l.b16 %v230
    %v1708 = vunpack.c.h.b16 %v230
    %v1709 = vunpack.c.l.b16 %v231
    %v1710 = vunpack.c.h.b16 %v231
    %v1711 = vunpack.c.l.b16 %v232
    %v1712 = vunpack.c.h.b16 %v232
    %v1713 = vunpack.c.l.b16 %v233
    %v1714 = vunpack.c.h.b16 %v233
    %v1715 = vunpack.c.l.b16 %v234
    %v1716 = vunpack.c.h.b16 %v234
    %v1717 = vunpack.c.l.b16 %v235
    %v1718 = vunpack.c.h.b16 %v235
    %v1719 = vunpack.c.l.b16 %v236
    %v1720 = vunpack.c.h.b16 %v236
    %v1721 = vunpack.c.l.b16 %v237
    %v1722 = vunpack.c.h.b16 %v237
    %v1723 = vunpack.c.l.b16 %v238
    %v1724 = vunpack.c.h.b16 %v238
    %v1725 = vunpack.c.l.b16 %v239
    %v1726 = vunpack.c.h.b16 %v239
    %v1727 = vunpack.c.l.b16 %v240
    %v1728 = vunpack.c.h.b16 %v240
    %v1729 = vunpack.c.l.b16 %v241
    %v1730 = vunpack.c.h.b16 %v241
    %v1731 = vunpack.c.l.b16 %v242
    %v1732 = vunpack.c.h.b16 %v242
    %v1733 = vunpack.c.l.b16 %v243
    %v1734 = vunpack.c.h.b16 %v243
    %v1735 = vunpack.c.l.b16 %v244
    %v1736 = vunpack.c.h.b16 %v244
    %v1737 = vunpack.c.l.b16 %v245
    %v1738 = vunpack.c.h.b16 %v245
    %v1739 = vunpack.c.l.b16 %v246
    %v1740 = vunpack.c.h.b16 %v246
    %v1741 = vunpack.c.l.b16 %v247
    %v1742 = vunpack.c.h.b16 %v247
    %v1743 = vunpack.c.l.b16 %v248
    %v1744 = vunpack.c.h.b16 %v248
    %v1745 = vunpack.c.l.b16 %v249
    %v1746 = vunpack.c.h.b16 %v249
    %v1747 = vunpack.c.l.b16 %v250
    %v1748 = vunpack.c.h.b16 %v250
    %v1749 = vunpack.c.l.b16 %v251
    %v1750 = vunpack.c.h.b16 %v251
    %v1751 = vunpack.c.l.b16 %v252
    %v1752 = vunpack.c.h.b16 %v252
    %v1753 = vunpack.c.l.b16 %v253
    %v1754 = vunpack.c.h.b16 %v253
    %v1755 = vunpack.c.l.b16 %v254
    %v1756 = vunpack.c.h.b16 %v254
    %v1757 = vunpack.c.l.b16 %v255
    %v1758 = vunpack.c.h.b16 %v255
    %v1759 = vunpack.c.l.b16 %v256
    %v1760 = vunpack.c.h.b16 %v256
    %v1761 = vunpack.c.l.b16 %v257
    %v1762 = vunpack.c.h.b16 %v257
    %v1763 = vunpack.c.l.b16 %v258
    %v1764 = vunpack.c.h.b16 %v258
    %v1765 = vunpack.c.l.b16 %v259
    %v1766 = vunpack.c.h.b16 %v259
    %v1767 = vunpack.c.l.b16 %v260
    %v1768 = vunpack.c.h.b16 %v260
    %v1769 = vunpack.c.l.b16 %v261
    %v1770 = vunpack.c.h.b16 %v261
    %v1771 = vunpack.c.l.b16 %v262
    %v1772 = vunpack.c.h.b16 %v262
    %v1773 = vunpack.c.l.b16 %v263
    %v1774 = vunpack.c.h.b16 %v263
    %v1775 = vunpack.c.l.b16 %v264
    %v1776 = vunpack.c.h.b16 %v264
    %v1777 = vunpack.c.l.b16 %v265
    %v1778 = vunpack.c.h.b16 %v265
    %v1779 = vunpack.c.l.b16 %v266
    %v1780 = vunpack.c.h.b16 %v266
    %v1781 = vunpack.c.l.b16 %v267
    %v1782 = vunpack.c.h.b16 %v267
    %v1783 = vunpack.c.l.b16 %v268
    %v1784 = vunpack.c.h.b16 %v268
    %v1785 = vunpack.c.l.b16 %v269
    %v1786 = vunpack.c.h.b16 %v269
    %v1787 = vunpack.c.l.b16 %v270
    %v1788 = vunpack.c.h.b16 %v270
    %v1789 = vunpack.c.l.b16 %v271
    %v1790 = vunpack.c.h.b16 %v271
    %v1791 = vunpack.c.l.b16 %v272
    %v1792 = vunpack.c.h.b16 %v272
    %v1793 = vunpack.c.l.b16 %v273
    %v1794 = vunpack.c.h.b16 %v273
    %v1795 = vunpack.c.l.b16 %v274
    %v1796 = vunpack.c.h.b16 %v274
    %v1797 = vunpack.c.l.b16 %v275
    %v1798 = vunpack.c.h.b16 %v275
    %v1799 = vunpack.c.l.b16 %v276
    %v1800 = vunpack.c.h.b16 %v276
    %v1801 = vunpack.c.l.b16 %v277
    %v1802 = vunpack.c.h.b16 %v277
    %v1803 = vunpack.c.l.b16 %v278
    %v1804 = vunpack.c.h.b16 %v278
    %v1805 = vunpack.c.l.b16 %v279
    %v1806 = vunpack.c.h.b16 %v279
    %v1807 = vunpack.c.l.b16 %v280
    %v1808 = vunpack.c.h.b16 %v280
    %v1809 = vunpack.c.l.b16 %v281
    %v1810 = vunpack.c.h.b16 %v281
    %v1811 = vunpack.c.l.b16 %v282
    %v1812 = vunpack.c.h.b16 %v282
    %v1813 = vunpack.c.l.b16 %v283
    %v1814 = vunpack.c.h.b16 %v283
    %v1815 = vunpack.c.l.b16 %v284
    %v1816 = vunpack.c.h.b16 %v284
    %v1817 = vunpack.c.l.b16 %v285
    %v1818 = vunpack.c.h.b16 %v285
    %v1819 = vunpack.c.l.b16 %v286
    %v1820 = vunpack.c.h.b16 %v286
    %v1821 = vunpack.c.l.b16 %v287
    %v1822 = vunpack.c.h.b16 %v287
    %v1823 = vunpack.c.l.b16 %v288
    %v1824 = vunpack.c.h.b16 %v288
    %v1825 = vunpack.c.l.b16 %v289
    %v1826 = vunpack.c.h.b16 %v289
    %v1827 = vunpack.c.l.b16 %v290
    %v1828 = vunpack.c.h.b16 %v290
    %v1829 = vunpack.c.l.b16 %v291
    %v1830 = vunpack.c.h.b16 %v291
    %v1831 = vunpack.c.l.b16 %v292
    %v1832 = vunpack.c.h.b16 %v292
    %v1833 = vunpack.c.l.b16 %v293
    %v1834 = vunpack.c.h.b16 %v293
    %v1835 = vunpack.c.l.b16 %v294
    %v1836 = vunpack.c.h.b16 %v294
    %v1837 = vunpack.c.l.b16 %v295
    %v1838 = vunpack.c.h.b16 %v295
    %v1839 = vunpack.c.l.b16 %v296
    %v1840 = vunpack.c.h.b16 %v296
    %v1841 = vunpack.c.l.b16 %v297
    %v1842 = vunpack.c.h.b16 %v297
    %v1843 = vunpack.c.l.b16 %v298
    %v1844 = vunpack.c.h.b16 %v298
    %v1845 = vunpack.c.l.b16 %v299
    %v1846 = vunpack.c.h.b16 %v299
    %v1847 = vunpack.c.l.b16 %v300
    %v1848 = vunpack.c.h.b16 %v300
    %v1849 = vunpack.c.l.b16 %v301
    %v1850 = vunpack.c.h.b16 %v301
    %v1851 = vunpack.c.l.b16 %v302
    %v1852 = vunpack.c.h.b16 %v302
    %v1853 = vunpack.c.l.b16 %v303
    %v1854 = vunpack.c.h.b16 %v303
    %v1855 = vunpack.c.l.b16 %v304
    %v1856 = vunpack.c.h.b16 %v304
    %v1857 = vunpack.c.l.b16 %v305
    %v1858 = vunpack.c.h.b16 %v305
    %v1859 = vunpack.c.l.b16 %v306
    %v1860 = vunpack.c.h.b16 %v306
    %v1861 = vunpack.c.l.b16 %v307
    %v1862 = vunpack.c.h.b16 %v307
    %v1863 = vunpack.c.l.b16 %v308
    %v1864 = vunpack.c.h.b16 %v308
    %v1865 = vunpack.c.l.b16 %v309
    %v1866 = vunpack.c.h.b16 %v309
    %v1867 = vunpack.c.l.b16 %v310
    %v1868 = vunpack.c.h.b16 %v310
    %v1869 = vunpack.c.l.b16 %v311
    %v1870 = vunpack.c.h.b16 %v311
    %v1871 = vunpack.c.l.b16 %v312
    %v1872 = vunpack.c.h.b16 %v312
    %v1873 = vunpack.c.l.b16 %v313
    %v1874 = vunpack.c.h.b16 %v313
    %v1875 = vunpack.c.l.b16 %v314
    %v1876 = vunpack.c.h.b16 %v314
    %v1877 = vunpack.c.l.b16 %v315
    %v1878 = vunpack.c.h.b16 %v315
    %v1879 = vunpack.c.l.b16 %v316
    %v1880 = vunpack.c.h.b16 %v316
    %v1881 = vunpack.c.l.b16 %v317
    %v1882 = vunpack.c.h.b16 %v317
    %v1883 = vunpack.c.l.b16 %v318
    %v1884 = vunpack.c.h.b16 %v318
    %v1885 = vunpack.c.l.b16 %v319
    %v1886 = vunpack.c.h.b16 %v319
    %v1887 = vunpack.c.l.b16 %v320
    %v1888 = vunpack.c.h.b16 %v320
    %v1889 = vunpack.c.l.b16 %v321
    %v1890 = vunpack.c.h.b16 %v321
    %v1891 = vunpack.c.l.b16 %v322
    %v1892 = vunpack.c.h.b16 %v322
    %v1893 = vunpack.c.l.b16 %v323
    %v1894 = vunpack.c.h.b16 %v323
    %v1895 = vunpack.c.l.b16 %v324
    %v1896 = vunpack.c.h.b16 %v324
    %v1897 = vunpack.c.l.b16 %v325
    %v1898 = vunpack.c.h.b16 %v325
    %v1899 = vunpack.c.l.b16 %v326
    %v1900 = vunpack.c.h.b16 %v326
    %v1901 = vunpack.c.l.b16 %v327
    %v1902 = vunpack.c.h.b16 %v327
    %v1903 = vunpack.c.l.b16 %v328
    %v1904 = vunpack.c.h.b16 %v328
    %v1905 = vunpack.c.l.b16 %v329
    %v1906 = vunpack.c.h.b16 %v329
    %v1907 = vunpack.c.l.b16 %v330
    %v1908 = vunpack.c.h.b16 %v330
    %v1909 = vunpack.c.l.b16 %v331
    %v1910 = vunpack.c.h.b16 %v331
    %v1911 = vunpack.c.l.b16 %v332
    %v1912 = vunpack.c.h.b16 %v332
    %v1913 = vunpack.c.l.b16 %v333
    %v1914 = vunpack.c.h.b16 %v333
    %v1915 = vunpack.c.l.b16 %v334
    %v1916 = vunpack.c.h.b16 %v334
    %v1917 = vunpack.c.l.b16 %v335
    %v1918 = vunpack.c.h.b16 %v335
    %v1919 = vunpack.c.l.b16 %v336
    %v1920 = vunpack.c.h.b16 %v336
    %v1921 = vunpack.c.l.b16 %v337
    %v1922 = vunpack.c.h.b16 %v337
    %v1923 = vunpack.c.l.b16 %v338
    %v1924 = vunpack.c.h.b16 %v338
    %v1925 = vunpack.c.l.b16 %v339
    %v1926 = vunpack.c.h.b16 %v339
    %v1927 = vunpack.c.l.b16 %v340
    %v1928 = vunpack.c.h.b16 %v340
    %v1929 = vunpack.c.l.b16 %v341
    %v1930 = vunpack.c.h.b16 %v341
    %v1931 = vunpack.c.l.b16 %v342
    %v1932 = vunpack.c.h.b16 %v342
    %v1933 = vunpack.c.l.b16 %v343
    %v1934 = vunpack.c.h.b16 %v343
    %v1935 = vunpack.c.l.b16 %v344
    %v1936 = vunpack.c.h.b16 %v344
    %v1937 = vunpack.c.l.b16 %v345
    %v1938 = vunpack.c.h.b16 %v345
    %v1939 = vunpack.c.l.b16 %v346
    %v1940 = vunpack.c.h.b16 %v346
    %v1941 = vunpack.c.l.b16 %v347
    %v1942 = vunpack.c.h.b16 %v347
    %v1943 = vunpack.c.l.b16 %v348
    %v1944 = vunpack.c.h.b16 %v348
    %v1945 = vunpack.c.l.b16 %v349
    %v1946 = vunpack.c.h.b16 %v349
    %v1947 = vunpack.c.l.b16 %v350
    %v1948 = vunpack.c.h.b16 %v350
    %v1949 = vunpack.c.l.b16 %v351
    %v1950 = vunpack.c.h.b16 %v351
    %v1951 = vunpack.c.l.b16 %v352
    %v1952 = vunpack.c.h.b16 %v352
    %v1953 = vunpack.c.l.b16 %v353
    %v1954 = vunpack.c.h.b16 %v353
    %v1955 = vunpack.c.l.b16 %v354
    %v1956 = vunpack.c.h.b16 %v354
    %v1957 = vunpack.c.l.b16 %v355
    %v1958 = vunpack.c.h.b16 %v355
    %v1959 = vunpack.c.l.b16 %v356
    %v1960 = vunpack.c.h.b16 %v356
    %v1961 = vunpack.c.l.b16 %v357
    %v1962 = vunpack.c.h.b16 %v357
    %v1963 = vunpack.c.l.b16 %v358
    %v1964 = vunpack.c.h.b16 %v358
    %v1965 = vunpack.c.l.b16 %v359
    %v1966 = vunpack.c.h.b16 %v359
    %v1967 = vunpack.c.l.b16 %v360
    %v1968 = vunpack.c.h.b16 %v360
    %v1969 = vunpack.c.l.b16 %v361
    %v1970 = vunpack.c.h.b16 %v361
    %v1971 = vunpack.c.l.b16 %v362
    %v1972 = vunpack.c.h.b16 %v362
    %v1973 = vunpack.c.l.b16 %v363
    %v1974 = vunpack.c.h.b16 %v363
    %v1975 = vunpack.c.l.b16 %v364
    %v1976 = vunpack.c.h.b16 %v364
    %v1977 = vunpack.c.l.b16 %v365
    %v1978 = vunpack.c.h.b16 %v365
    %v1979 = vunpack.c.l.b16 %v366
    %v1980 = vunpack.c.h.b16 %v366
    %v1981 = vunpack.c.l.b16 %v367
    %v1982 = vunpack.c.h.b16 %v367
    %v1983 = vunpack.c.l.b16 %v368
    %v1984 = vunpack.c.h.b16 %v368
    %v1985 = vunpack.c.l.b16 %v369
    %v1986 = vunpack.c.h.b16 %v369
    %v1987 = vunpack.c.l.b16 %v370
    %v1988 = vunpack.c.h.b16 %v370
    %v1989 = vunpack.c.l.b16 %v371
    %v1990 = vunpack.c.h.b16 %v371
    %v1991 = vunpack.c.l.b16 %v372
    %v1992 = vunpack.c.h.b16 %v372
    %v1993 = vunpack.c.l.b16 %v373
    %v1994 = vunpack.c.h.b16 %v373
    %v1995 = vunpack.c.l.b16 %v374
    %v1996 = vunpack.c.h.b16 %v374
    %v1997 = vunpack.c.l.b16 %v375
    %v1998 = vunpack.c.h.b16 %v375
    %v1999 = vunpack.c.l.b16 %v376
    %v2000 = vunpack.c.h.b16 %v376
    %v2001 = vunpack.c.l.b16 %v377
    %v2002 = vunpack.c.h.b16 %v377
    %v2003 = vunpack.c.l.b16 %v378
    %v2004 = vunpack.c.h.b16 %v378
    %v2005 = vunpack.c.l.b16 %v379
    %v2006 = vunpack.c.h.b16 %v379
    %v2007 = vunpack.c.l.b16 %v380
    %v2008 = vunpack.c.h.b16 %v380
    %v2009 = vunpack.c.l.b16 %v381
    %v2010 = vunpack.c.h.b16 %v381
    %v2011 = vunpack.c.l.b16 %v382
    %v2012 = vunpack.c.h.b16 %v382
    %v2013 = vunpack.c.l.b16 %v383
    %v2014 = vunpack.c.h.b16 %v383
    %v2015 = vunpack.c.l.b16 %v384
    %v2016 = vunpack.c.h.b16 %v384
    %v2017 = vunpack.c.l.b16 %v385
    %v2018 = vunpack.c.h.b16 %v385
    %v2019 = vunpack.c.l.b16 %v386
    %v2020 = vunpack.c.h.b16 %v386
    %v2021 = vunpack.c.l.b16 %v387
    %v2022 = vunpack.c.h.b16 %v387
    %v2023 = vunpack.c.l.b16 %v388
    %v2024 = vunpack.c.h.b16 %v388
    %v2025 = vunpack.c.l.b16 %v389
    %v2026 = vunpack.c.h.b16 %v389
    %v2027 = vunpack.c.l.b16 %v390
    %v2028 = vunpack.c.h.b16 %v390
    %v2029 = vunpack.c.l.b16 %v391
    %v2030 = vunpack.c.h.b16 %v391
    %v2031 = vunpack.c.l.b16 %v392
    %v2032 = vunpack.c.h.b16 %v392
    %v2033 = vunpack.c.l.b16 %v393
    %v2034 = vunpack.c.h.b16 %v393
    %v2035 = vunpack.c.l.b16 %v394
    %v2036 = vunpack.c.h.b16 %v394
    %v2037 = vunpack.c.l.b16 %v395
    %v2038 = vunpack.c.h.b16 %v395
    %v2039 = vunpack.c.l.b16 %v396
    %v2040 = vunpack.c.h.b16 %v396
    %v2041 = vunpack.c.l.b16 %v397
    %v2042 = vunpack.c.h.b16 %v397
    %v2043 = vunpack.c.l.b16 %v398
    %v2044 = vunpack.c.h.b16 %v398
    %v2045 = vunpack.c.l.b16 %v399
    %v2046 = vunpack.c.h.b16 %v399
    %v2047 = vunpack.c.l.b16 %v400
    %v2048 = vunpack.c.h.b16 %v400
    %v2049 = vunpack.c.l.b16 %v401
    %v2050 = vunpack.c.h.b16 %v401
    %v2051 = vunpack.c.l.b16 %v402
    %v2052 = vunpack.c.h.b16 %v402
    %v2053 = vunpack.c.l.b16 %v403
    %v2054 = vunpack.c.h.b16 %v403
    %v2055 = vunpack.c.l.b16 %v404
    %v2056 = vunpack.c.h.b16 %v404
    %v2057 = vunpack.c.l.b16 %v405
    %v2058 = vunpack.c.h.b16 %v405
    %v2059 = vunpack.c.l.b16 %v406
    %v2060 = vunpack.c.h.b16 %v406
    %v2061 = vunpack.c.l.b16 %v407
    %v2062 = vunpack.c.h.b16 %v407
    %v2063 = vunpack.c.l.b16 %v408
    %v2064 = vunpack.c.h.b16 %v408
    %v2065 = vunpack.c.l.b16 %v409
    %v2066 = vunpack.c.h.b16 %v409
    %v2067 = vunpack.c.l.b16 %v410
    %v2068 = vunpack.c.h.b16 %v410
    %v2069 = vunpack.c.l.b16 %v411
    %v2070 = vunpack.c.h.b16 %v411
    %v2071 = vunpack.c.l.b16 %v412
    %v2072 = vunpack.c.h.b16 %v412
    %v2073 = vunpack.c.l.b16 %v413
    %v2074 = vunpack.c.h.b16 %v413
    %v2075 = vunpack.c.l.b16 %v414
    %v2076 = vunpack.c.h.b16 %v414
    %v2077 = vunpack.c.l.b16 %v415
    %v2078 = vunpack.c.h.b16 %v415
    %v2079 = vunpack.c.l.b16 %v416
    %v2080 = vunpack.c.h.b16 %v416
    %v2081 = vunpack.c.l.b16 %v417
    %v2082 = vunpack.c.h.b16 %v417
    %v2083 = vunpack.c.l.b16 %v418
    %v2084 = vunpack.c.h.b16 %v418
    %v2085 = vunpack.c.l.b16 %v419
    %v2086 = vunpack.c.h.b16 %v419
    %v2087 = vunpack.c.l.b16 %v420
    %v2088 = vunpack.c.h.b16 %v420
    %v2089 = vunpack.c.l.b16 %v421
    %v2090 = vunpack.c.h.b16 %v421
    %v2091 = vunpack.c.l.b16 %v422
    %v2092 = vunpack.c.h.b16 %v422
    %v2093 = vunpack.c.l.b16 %v423
    %v2094 = vunpack.c.h.b16 %v423
    %v2095 = vunpack.c.l.b16 %v424
    %v2096 = vunpack.c.h.b16 %v424
    %v2097 = vunpack.c.l.b16 %v425
    %v2098 = vunpack.c.h.b16 %v425
    %v2099 = vunpack.c.l.b16 %v426
    %v2100 = vunpack.c.h.b16 %v426
    %v2101 = vunpack.c.l.b16 %v427
    %v2102 = vunpack.c.h.b16 %v427
    %v2103 = vunpack.c.l.b16 %v428
    %v2104 = vunpack.c.h.b16 %v428
    %v2105 = vunpack.c.l.b16 %v429
    %v2106 = vunpack.c.h.b16 %v429
    %v2107 = vunpack.c.l.b16 %v430
    %v2108 = vunpack.c.h.b16 %v430
    %v2109 = vunpack.c.l.b16 %v431
    %v2110 = vunpack.c.h.b16 %v431
    %v2111 = vunpack.c.l.b16 %v432
    %v2112 = vunpack.c.h.b16 %v432
    %v2113 = vunpack.c.l.b16 %v433
    %v2114 = vunpack.c.h.b16 %v433
    %v2115 = vunpack.c.l.b16 %v434
    %v2116 = vunpack.c.h.b16 %v434
    %v2117 = vunpack.c.l.b16 %v435
    %v2118 = vunpack.c.h.b16 %v435
    %v2119 = vunpack.c.l.b16 %v436
    %v2120 = vunpack.c.h.b16 %v436
    %v2121 = vunpack.c.l.b16 %v437
    %v2122 = vunpack.c.h.b16 %v437
    %v2123 = vunpack.c.l.b16 %v438
    %v2124 = vunpack.c.h.b16 %v438
    %v2125 = vunpack.c.l.b16 %v439
    %v2126 = vunpack.c.h.b16 %v439
    %v2127 = vunpack.c.l.b16 %v440
    %v2128 = vunpack.c.h.b16 %v440
    %v2129 = vunpack.c.l.b16 %v441
    %v2130 = vunpack.c.h.b16 %v441
    %v2131 = vunpack.c.l.b16 %v442
    %v2132 = vunpack.c.h.b16 %v442
    %v2133 = vunpack.c.l.b16 %v443
    %v2134 = vunpack.c.h.b16 %v443
    %v2135 = vunpack.c.l.b16 %v444
    %v2136 = vunpack.c.h.b16 %v444
    %v2137 = vunpack.c.l.b16 %v445
    %v2138 = vunpack.c.h.b16 %v445
    %v2139 = vunpack.c.l.b16 %v446
    %v2140 = vunpack.c.h.b16 %v446
    %v2141 = vunpack.c.l.b16 %v447
    %v2142 = vunpack.c.h.b16 %v447
    %v2143 = vunpack.c.l.b16 %v448
    %v2144 = vunpack.c.h.b16 %v448
    %v2145 = vunpack.c.l.b16 %v449
    %v2146 = vunpack.c.h.b16 %v449
    %v2147 = vunpack.c.l.b16 %v450
    %v2148 = vunpack.c.h.b16 %v450
    %v2149 = vunpack.c.l.b16 %v451
    %v2150 = vunpack.c.h.b16 %v451
    %v2151 = vunpack.c.l.b16 %v452
    %v2152 = vunpack.c.h.b16 %v452
    %v2153 = vunpack.c.l.b16 %v453
    %v2154 = vunpack.c.h.b16 %v453
    %v2155 = vunpack.c.l.b16 %v454
    %v2156 = vunpack.c.h.b16 %v454
    %v2157 = vunpack.c.l.b16 %v455
    %v2158 = vunpack.c.h.b16 %v455
    %v2159 = vunpack.c.l.b16 %v456
    %v2160 = vunpack.c.h.b16 %v456
    %v2161 = vunpack.c.l.b16 %v457
    %v2162 = vunpack.c.h.b16 %v457
    %v2163 = vunpack.c.l.b16 %v458
    %v2164 = vunpack.c.h.b16 %v458
    %v2165 = vunpack.c.l.b16 %v459
    %v2166 = vunpack.c.h.b16 %v459
    %v2167 = vunpack.c.l.b16 %v460
    %v2168 = vunpack.c.h.b16 %v460
    %v2169 = vunpack.c.l.b16 %v461
    %v2170 = vunpack.c.h.b16 %v461
    %v2171 = vunpack.c.l.b16 %v462
    %v2172 = vunpack.c.h.b16 %v462
    %v2173 = vunpack.c.l.b16 %v463
    %v2174 = vunpack.c.h.b16 %v463
    %v2175 = vunpack.c.l.b16 %v464
    %v2176 = vunpack.c.h.b16 %v464
    %v2177 = vunpack.c.l.b16 %v465
    %v2178 = vunpack.c.h.b16 %v465
    %v2179 = vunpack.c.l.b16 %v466
    %v2180 = vunpack.c.h.b16 %v466
    %v2181 = vunpack.c.l.b16 %v467
    %v2182 = vunpack.c.h.b16 %v467
    %v2183 = vunpack.c.l.b16 %v468
    %v2184 = vunpack.c.h.b16 %v468
    %v2185 = vunpack.c.l.b16 %v469
    %v2186 = vunpack.c.h.b16 %v469
    %v2187 = vunpack.c.l.b16 %v470
    %v2188 = vunpack.c.h.b16 %v470
    %v2189 = vunpack.c.l.b16 %v471
    %v2190 = vunpack.c.h.b16 %v471
    %v2191 = vunpack.c.l.b16 %v472
    %v2192 = vunpack.c.h.b16 %v472
    %v2193 = vunpack.c.l.b16 %v473
    %v2194 = vunpack.c.h.b16 %v473
    %v2195 = vunpack.c.l.b16 %v474
    %v2196 = vunpack.c.h.b16 %v474
    %v2197 = vunpack.c.l.b16 %v475
    %v2198 = vunpack.c.h.b16 %v475
    %v2199 = vunpack.c.l.b16 %v476
    %v2200 = vunpack.c.h.b16 %v476
    %v2201 = vunpack.c.l.b16 %v477
    %v2202 = vunpack.c.h.b16 %v477
    %v2203 = vunpack.c.l.b16 %v478
    %v2204 = vunpack.c.h.b16 %v478
    %v2205 = vunpack.c.l.b16 %v479
    %v2206 = vunpack.c.h.b16 %v479
    %v2207 = vunpack.c.l.b16 %v480
    %v2208 = vunpack.c.h.b16 %v480
    %v2209 = vunpack.c.l.b16 %v481
    %v2210 = vunpack.c.h.b16 %v481
    %v2211 = vunpack.c.l.b16 %v482
    %v2212 = vunpack.c.h.b16 %v482
    %v2213 = vunpack.c.l.b16 %v483
    %v2214 = vunpack.c.h.b16 %v483
    %v2215 = vunpack.c.l.b16 %v484
    %v2216 = vunpack.c.h.b16 %v484
    %v2217 = vunpack.c.l.b16 %v485
    %v2218 = vunpack.c.h.b16 %v485
    %v2219 = vunpack.c.l.b16 %v486
    %v2220 = vunpack.c.h.b16 %v486
    %v2221 = vunpack.c.l.b16 %v487
    %v2222 = vunpack.c.h.b16 %v487
    %v2223 = vunpack.c.l.b16 %v488
    %v2224 = vunpack.c.h.b16 %v488
    %v2225 = vunpack.c.l.b16 %v489
    %v2226 = vunpack.c.h.b16 %v489
    %v2227 = vunpack.c.l.b16 %v490
    %v2228 = vunpack.c.h.b16 %v490
    %v2229 = vunpack.c.l.b16 %v491
    %v2230 = vunpack.c.h.b16 %v491
    %v2231 = vunpack.c.l.b16 %v492
    %v2232 = vunpack.c.h.b16 %v492
    %v2233 = vunpack.c.l.b16 %v493
    %v2234 = vunpack.c.h.b16 %v493
    %v2235 = vunpack.c.l.b16 %v494
    %v2236 = vunpack.c.h.b16 %v494
    %v2237 = vunpack.c.l.b16 %v495
    %v2238 = vunpack.c.h.b16 %v495
    %v2239 = vunpack.c.l.b16 %v496
    %v2240 = vunpack.c.h.b16 %v496
    %v2241 = vunpack.c.l.b16 %v497
    %v2242 = vunpack.c.h.b16 %v497
    %v2243 = vunpack.c.l.b16 %v498
    %v2244 = vunpack.c.h.b16 %v498
    %v2245 = vunpack.c.l.b16 %v499
    %v2246 = vunpack.c.h.b16 %v499
    %v2247 = vunpack.c.l.b16 %v500
    %v2248 = vunpack.c.h.b16 %v500
    %v2249 = vunpack.c.l.b16 %v501
    %v2250 = vunpack.c.h.b16 %v501
    %v2251 = vunpack.c.l.b16 %v502
    %v2252 = vunpack.c.h.b16 %v502
    %v2253 = vunpack.c.l.b16 %v503
    %v2254 = vunpack.c.h.b16 %v503
    %v2255 = vunpack.c.l.b16 %v504
    %v2256 = vunpack.c.h.b16 %v504
    %v2257 = vunpack.c.l.b16 %v505
    %v2258 = vunpack.c.h.b16 %v505
    %v2259 = vunpack.c.l.b16 %v506
    %v2260 = vunpack.c.h.b16 %v506
    %v2261 = vunpack.c.l.b16 %v507
    %v2262 = vunpack.c.h.b16 %v507
    %v2263 = vunpack.c.l.b16 %v508
    %v2264 = vunpack.c.h.b16 %v508
    %v2265 = vunpack.c.l.b16 %v509
    %v2266 = vunpack.c.h.b16 %v509
    %v2267 = vunpack.c.l.b16 %v510
    %v2268 = vunpack.c.h.b16 %v510
    %v2269 = vunpack.c.l.b16 %v511
    %v2270 = vunpack.c.h.b16 %v511
    %v2271 = vunpack.c.l.b16 %v512
    %v2272 = vunpack.c.h.b16 %v512
    %v2273 = vunpack.c.l.b16 %v513
    %v2274 = vunpack.c.h.b16 %v513
    %v2275 = vunpack.c.l.b16 %v514
    %v2276 = vunpack.c.h.b16 %v514
    %v2277 = vunpack.c.l.b16 %v515
    %v2278 = vunpack.c.h.b16 %v515
    %v2279 = vunpack.c.l.b16 %v516
    %v2280 = vunpack.c.h.b16 %v516
    %v2281 = vunpack.c.l.b16 %v517
    %v2282 = vunpack.c.h.b16 %v517
    %v2283 = vunpack.c.l.b16 %v518
    %v2284 = vunpack.c.h.b16 %v518
    %v2285 = vunpack.c.l.b16 %v519
    %v2286 = vunpack.c.h.b16 %v519
    %v2287 = vunpack.c.l.b16 %v520
    %v2288 = vunpack.c.h.b16 %v520
    %v2289 = vunpack.c.l.b16 %v521
    %v2290 = vunpack.c.h.b16 %v521
    %v2291 = vunpack.c.l.b16 %v522
    %v2292 = vunpack.c.h.b16 %v522
    %v2293 = vunpack.c.l.b16 %v523
    %v2294 = vunpack.c.h.b16 %v523
    %v2295 = vunpack.c.l.b16 %v524
    %v2296 = vunpack.c.h.b16 %v524
    %v2297 = vunpack.c.l.b16 %v525
    %v2298 = vunpack.c.h.b16 %v525
    %v2299 = vunpack.c.l.b16 %v526
    %v2300 = vunpack.c.h.b16 %v526
    %v2301 = vunpack.c.l.b16 %v527
    %v2302 = vunpack.c.h.b16 %v527
    %v2303 = vunpack.c.l.b16 %v528
    %v2304 = vunpack.c.h.b16 %v528
    %v2305 = vunpack.c.l.b16 %v529
    %v2306 = vunpack.c.h.b16 %v529
    %v2307 = vunpack.c.l.b16 %v530
    %v2308 = vunpack.c.h.b16 %v530
    %v2309 = vunpack.c.l.b16 %v531
    %v2310 = vunpack.c.h.b16 %v531
    %v2311 = vunpack.c.l.b16 %v532
    %v2312 = vunpack.c.h.b16 %v532
    %v2313 = vunpack.c.l.b16 %v533
    %v2314 = vunpack.c.h.b16 %v533
    %v2315 = vunpack.c.l.b16 %v534
    %v2316 = vunpack.c.h.b16 %v534
    %v2317 = vunpack.c.l.b16 %v535
    %v2318 = vunpack.c.h.b16 %v535
    %v2319 = vunpack.c.l.b16 %v536
    %v2320 = vunpack.c.h.b16 %v536
    %v2321 = vunpack.c.l.b16 %v537
    %v2322 = vunpack.c.h.b16 %v537
    %v2323 = vunpack.c.l.b16 %v538
    %v2324 = vunpack.c.h.b16 %v538
    %v2325 = vunpack.c.l.b16 %v539
    %v2326 = vunpack.c.h.b16 %v539
    %v2327 = vunpack.c.l.b16 %v540
    %v2328 = vunpack.c.h.b16 %v540
    %v2329 = vunpack.c.l.b16 %v541
    %v2330 = vunpack.c.h.b16 %v541
    %v2331 = vunpack.c.l.b16 %v542
    %v2332 = vunpack.c.h.b16 %v542
    %v2333 = vunpack.c.l.b16 %v543
    %v2334 = vunpack.c.h.b16 %v543
    %v2335 = vunpack.c.l.b16 %v544
    %v2336 = vunpack.c.h.b16 %v544
    %v2337 = vunpack.c.l.b16 %v545
    %v2338 = vunpack.c.h.b16 %v545
    %v2339 = vunpack.c.l.b16 %v546
    %v2340 = vunpack.c.h.b16 %v546
    %v2341 = vunpack.c.l.b16 %v547
    %v2342 = vunpack.c.h.b16 %v547
    %v2343 = vunpack.c.l.b16 %v548
    %v2344 = vunpack.c.h.b16 %v548
    %v2345 = vunpack.c.l.b16 %v549
    %v2346 = vunpack.c.h.b16 %v549
    %v2347 = vunpack.c.l.b16 %v550
    %v2348 = vunpack.c.h.b16 %v550
    %v2349 = vunpack.c.l.b16 %v551
    %v2350 = vunpack.c.h.b16 %v551
    %v2351 = vunpack.c.l.b16 %v552
    %v2352 = vunpack.c.h.b16 %v552
    %v2353 = vunpack.c.l.b16 %v553
    %v2354 = vunpack.c.h.b16 %v553
    %v2355 = vunpack.c.l.b16 %v554
    %v2356 = vunpack.c.h.b16 %v554
    %v2357 = vunpack.c.l.b16 %v555
    %v2358 = vunpack.c.h.b16 %v555
    %v2359 = vunpack.c.l.b16 %v556
    %v2360 = vunpack.c.h.b16 %v556
    %v2361 = vunpack.c.l.b16 %v557
    %v2362 = vunpack.c.h.b16 %v557
    %v2363 = vunpack.c.l.b16 %v558
    %v2364 = vunpack.c.h.b16 %v558
    %v2365 = vunpack.c.l.b16 %v559
    %v2366 = vunpack.c.h.b16 %v559
    %v2367 = vunpack.c.l.b16 %v560
    %v2368 = vunpack.c.h.b16 %v560
    %v2369 = vunpack.c.l.b16 %v561
    %v2370 = vunpack.c.h.b16 %v561
    %v2371 = vunpack.c.l.b16 %v562
    %v2372 = vunpack.c.h.b16 %v562
    %v2373 = vunpack.c.l.b16 %v563
    %v2374 = vunpack.c.h.b16 %v563
    %v2375 = vunpack.c.l.b16 %v564
    %v2376 = vunpack.c.h.b16 %v564
    %v2377 = vunpack.c.l.b16 %v565
    %v2378 = vunpack.c.h.b16 %v565
    %v2379 = vunpack.c.l.b16 %v566
    %v2380 = vunpack.c.h.b16 %v566
    %v2381 = vunpack.c.l.b16 %v567
    %v2382 = vunpack.c.h.b16 %v567
    %v2383 = vunpack.c.l.b16 %v568
    %v2384 = vunpack.c.h.b16 %v568
    %v2385 = vunpack.c.l.b16 %v569
    %v2386 = vunpack.c.h.b16 %v569
    %v2387 = vunpack.c.l.b16 %v570
    %v2388 = vunpack.c.h.b16 %v570
    %v2389 = vunpack.c.l.b16 %v571
    %v2390 = vunpack.c.h.b16 %v571
    %v2391 = vunpack.c.l.b16 %v572
    %v2392 = vunpack.c.h.b16 %v572
    %v2393 = vunpack.c.l.b16 %v573
    %v2394 = vunpack.c.h.b16 %v573
    %v2395 = vunpack.c.l.b16 %v574
    %v2396 = vunpack.c.h.b16 %v574
    %v2397 = vunpack.c.l.b16 %v575
    %v2398 = vunpack.c.h.b16 %v575
    %v2399 = vunpack.c.l.b16 %v576
    %v2400 = vunpack.c.h.b16 %v576
    %v2401 = vunpack.c.l.b16 %v577
    %v2402 = vunpack.c.h.b16 %v577
    %v2403 = vunpack.c.l.b16 %v578
    %v2404 = vunpack.c.h.b16 %v578
    %v2405 = vunpack.c.l.b16 %v579
    %v2406 = vunpack.c.h.b16 %v579
    %v2407 = vunpack.c.l.b16 %v580
    %v2408 = vunpack.c.h.b16 %v580
    %v2409 = vunpack.c.l.b16 %v581
    %v2410 = vunpack.c.h.b16 %v581
    %v2411 = vunpack.c.l.b16 %v582
    %v2412 = vunpack.c.h.b16 %v582
    %v2413 = vunpack.c.l.b16 %v583
    %v2414 = vunpack.c.h.b16 %v583
    %v2415 = vunpack.c.l.b16 %v584
    %v2416 = vunpack.c.h.b16 %v584
    %v2417 = vunpack.c.l.b16 %v585
    %v2418 = vunpack.c.h.b16 %v585
    %v2419 = vunpack.c.l.b16 %v586
    %v2420 = vunpack.c.h.b16 %v586
    %v2421 = vunpack.c.l.b16 %v587
    %v2422 = vunpack.c.h.b16 %v587
    %v2423 = vunpack.c.l.b16 %v588
    %v2424 = vunpack.c.h.b16 %v588
    %v2425 = vunpack.c.l.b16 %v589
    %v2426 = vunpack.c.h.b16 %v589
    %v2427 = vunpack.c.l.b16 %v590
    %v2428 = vunpack.c.h.b16 %v590
    %v2429 = vunpack.c.l.b16 %v591
    %v2430 = vunpack.c.h.b16 %v591
    %v2431 = vunpack.c.l.b16 %v592
    %v2432 = vunpack.c.h.b16 %v592
    %v2433 = vunpack.c.l.b16 %v593
    %v2434 = vunpack.c.h.b16 %v593
    %v2435 = vunpack.c.l.b16 %v594
    %v2436 = vunpack.c.h.b16 %v594
    %v2437 = vunpack.c.l.b16 %v595
    %v2438 = vunpack.c.h.b16 %v595
    %v2439 = vunpack.c.l.b16 %v596
    %v2440 = vunpack.c.h.b16 %v596
    %v2441 = vunpack.c.l.b16 %v597
    %v2442 = vunpack.c.h.b16 %v597
    %v2443 = vunpack.c.l.b16 %v598
    %v2444 = vunpack.c.h.b16 %v598
    %v2445 = vunpack.c.l.b16 %v599
    %v2446 = vunpack.c.h.b16 %v599
    %v2447 = vunpack.c.l.b16 %v600
    %v2448 = vunpack.c.h.b16 %v600
    %v2449 = vunpack.c.l.b16 %v601
    %v2450 = vunpack.c.h.b16 %v601
    %v2451 = vunpack.c.l.b16 %v602
    %v2452 = vunpack.c.h.b16 %v602
    %v2453 = vunpack.c.l.b16 %v603
    %v2454 = vunpack.c.h.b16 %v603
    %v2455 = vunpack.c.l.b16 %v604
    %v2456 = vunpack.c.h.b16 %v604
    %v2457 = vunpack.c.l.b16 %v605
    %v2458 = vunpack.c.h.b16 %v605
    %v2459 = vunpack.c.l.b16 %v606
    %v2460 = vunpack.c.h.b16 %v606
    %v2461 = vunpack.c.l.b16 %v607
    %v2462 = vunpack.c.h.b16 %v607
    %v2463 = vunpack.c.l.b16 %v608
    %v2464 = vunpack.c.h.b16 %v608
    %v2465 = vunpack.c.l.b16 %v609
    %v2466 = vunpack.c.h.b16 %v609
    %v2467 = vunpack.c.l.b16 %v610
    %v2468 = vunpack.c.h.b16 %v610
    %v2469 = vunpack.c.l.b16 %v611
    %v2470 = vunpack.c.h.b16 %v611
    %v2471 = vunpack.c.l.b16 %v612
    %v2472 = vunpack.c.h.b16 %v612
    %v2473 = vunpack.c.l.b16 %v613
    %v2474 = vunpack.c.h.b16 %v613
    %v2475 = vunpack.c.l.b16 %v614
    %v2476 = vunpack.c.h.b16 %v614
    %v2477 = vunpack.c.l.b16 %v615
    %v2478 = vunpack.c.h.b16 %v615
    %v2479 = vunpack.c.l.b16 %v616
    %v2480 = vunpack.c.h.b16 %v616
    %v2481 = vunpack.c.l.b16 %v617
    %v2482 = vunpack.c.h.b16 %v617
    %v2483 = vunpack.c.l.b16 %v618
    %v2484 = vunpack.c.h.b16 %v618
    %v2485 = vunpack.c.l.b16 %v619
    %v2486 = vunpack.c.h.b16 %v619
    %v2487 = vunpack.c.l.b16 %v620
    %v2488 = vunpack.c.h.b16 %v620
    %v2489 = vunpack.c.l.b16 %v621
    %v2490 = vunpack.c.h.b16 %v621
    %v2491 = vunpack.c.l.b16 %v622
    %v2492 = vunpack.c.h.b16 %v622
    %v2493 = vunpack.c.l.b16 %v623
    %v2494 = vunpack.c.h.b16 %v623
    %v2495 = vunpack.c.l.b16 %v624
    %v2496 = vunpack.c.h.b16 %v624
    %v2497 = vunpack.c.l.b16 %v625
    %v2498 = vunpack.c.h.b16 %v625
    %v2499 = vunpack.c.l.b16 %v626
    %v2500 = vunpack.c.h.b16 %v626
    %v2501 = vunpack.c.l.b16 %v627
    %v2502 = vunpack.c.h.b16 %v627
    %v2503 = vunpack.c.l.b16 %v628
    %v2504 = vunpack.c.h.b16 %v628
    %v2505 = vunpack.c.l.b16 %v629
    %v2506 = vunpack.c.h.b16 %v629
    %v2507 = vunpack.c.l.b16 %v630
    %v2508 = vunpack.c.h.b16 %v630
    %v2509 = vunpack.c.l.b16 %v631
    %v2510 = vunpack.c.h.b16 %v631
    %v2511 = vunpack.c.l.b16 %v632
    %v2512 = vunpack.c.h.b16 %v632
    %v2513 = vunpack.c.l.b16 %v633
    %v2514 = vunpack.c.h.b16 %v633
    %v2515 = vunpack.c.l.b16 %v634
    %v2516 = vunpack.c.h.b16 %v634
    %v2517 = vunpack.c.l.b16 %v635
    %v2518 = vunpack.c.h.b16 %v635
    %v2519 = vunpack.c.l.b16 %v636
    %v2520 = vunpack.c.h.b16 %v636
    %v2521 = vunpack.c.l.b16 %v637
    %v2522 = vunpack.c.h.b16 %v637
    %v2523 = vunpack.c.l.b16 %v638
    %v2524 = vunpack.c.h.b16 %v638
    %v2525 = vunpack.c.l.b16 %v639
    %v2526 = vunpack.c.h.b16 %v639
    %v2527 = vunpack.c.l.b16 %v640
    %v2528 = vunpack.c.h.b16 %v640
    %v2529 = vunpack.c.l.b16 %v641
    %v2530 = vunpack.c.h.b16 %v641
    %v2531 = vunpack.c.l.b16 %v642
    %v2532 = vunpack.c.h.b16 %v642
    %v2533 = vunpack.c.l.b16 %v643
    %v2534 = vunpack.c.h.b16 %v643
    %v2535 = vunpack.c.l.b16 %v644
    %v2536 = vunpack.c.h.b16 %v644
    %v2537 = vunpack.c.l.b16 %v645
    %v2538 = vunpack.c.h.b16 %v645
    %v2539 = vunpack.c.l.b16 %v646
    %v2540 = vunpack.c.h.b16 %v646
    %v2541 = vunpack.c.l.b16 %v647
    %v2542 = vunpack.c.h.b16 %v647
    %v2543 = vunpack.c.l.b16 %v648
    %v2544 = vunpack.c.h.b16 %v648
    %v2545 = vunpack.c.l.b16 %v649
    %v2546 = vunpack.c.h.b16 %v649
    %v2547 = vunpack.c.l.b16 %v650
    %v2548 = vunpack.c.h.b16 %v650
    %v2549 = vunpack.c.l.b16 %v651
    %v2550 = vunpack.c.h.b16 %v651
    %v2551 = vunpack.c.l.b16 %v652
    %v2552 = vunpack.c.h.b16 %v652
    %v2553 = vunpack.c.l.b16 %v653
    %v2554 = vunpack.c.h.b16 %v653
    %v2555 = vunpack.c.l.b16 %v654
    %v2556 = vunpack.c.h.b16 %v654
    %v2557 = vunpack.c.l.b16 %v655
    %v2558 = vunpack.c.h.b16 %v655
    %v2559 = vunpack.c.l.b16 %v656
    %v2560 = vunpack.c.h.b16 %v656
    %v2561 = vunpack.c.l.b16 %v657
    %v2562 = vunpack.c.h.b16 %v657
    %v2563 = vunpack.c.l.b16 %v658
    %v2564 = vunpack.c.h.b16 %v658
    %v2565 = vunpack.c.l.b16 %v659
    %v2566 = vunpack.c.h.b16 %v659
    %v2567 = vunpack.c.l.b16 %v660
    %v2568 = vunpack.c.h.b16 %v660
    %v2569 = vunpack.c.l.b16 %v661
    %v2570 = vunpack.c.h.b16 %v661
    %v2571 = vunpack.c.l.b16 %v662
    %v2572 = vunpack.c.h.b16 %v662
    %v2573 = vunpack.c.l.b16 %v663
    %v2574 = vunpack.c.h.b16 %v663
    %v2575 = vunpack.c.l.b16 %v664
    %v2576 = vunpack.c.h.b16 %v664
    %v2577 = vunpack.c.l.b16 %v665
    %v2578 = vunpack.c.h.b16 %v665
    %v2579 = vunpack.c.l.b16 %v666
    %v2580 = vunpack.c.h.b16 %v666
    %v2581 = vunpack.c.l.b16 %v667
    %v2582 = vunpack.c.h.b16 %v667
    %v2583 = vunpack.c.l.b16 %v668
    %v2584 = vunpack.c.h.b16 %v668
    %v2585 = vunpack.c.l.b16 %v669
    %v2586 = vunpack.c.h.b16 %v669
    %v2587 = vunpack.c.l.b16 %v670
    %v2588 = vunpack.c.h.b16 %v670
    %v2589 = vunpack.c.l.b16 %v671
    %v2590 = vunpack.c.h.b16 %v671
    %v2591 = vunpack.c.l.b16 %v672
    %v2592 = vunpack.c.h.b16 %v672
    %v2593 = vunpack.c.l.b16 %v673
    %v2594 = vunpack.c.h.b16 %v673
    %v2595 = vunpack.c.l.b16 %v674
    %v2596 = vunpack.c.h.b16 %v674
    %v2597 = vunpack.c.l.b16 %v675
    %v2598 = vunpack.c.h.b16 %v675
    %v2599 = vunpack.c.l.b16 %v676
    %v2600 = vunpack.c.h.b16 %v676
    %v2601 = vunpack.c.l.b16 %v677
    %v2602 = vunpack.c.h.b16 %v677
    %v2603 = vunpack.c.l.b16 %v678
    %v2604 = vunpack.c.h.b16 %v678
    %v2605 = vunpack.c.l.b16 %v679
    %v2606 = vunpack.c.h.b16 %v679
    %v2607 = vunpack.c.l.b16 %v680
    %v2608 = vunpack.c.h.b16 %v680
    %v2609 = vpack.c.b16 %v1437, %v1433
    %v2610 = vpack.c.b16 %v1438, %v1434
    %v2611 = vpack.c.b16 %v1439, %v1435
    %v2612 = vpack.c.b16 %v1440, %v1436
    %v2613 = vpack.c.b16 %v1445, %v1441
    %v2614 = vpack.c.b16 %v1446, %v1442
    %v2615 = vpack.c.b16 %v1447, %v1443
    %v2616 = vpack.c.b16 %v1448, %v1444
    %v2617 = vpack.c.b16 %v1453, %v1449
    %v2618 = vpack.c.b16 %v1454, %v1450
    %v2619 = vpack.c.b16 %v1455, %v1451
    %v2620 = vpack.c.b16 %v1456, %v1452
    %v2621 = vpack.c.b16 %v1461, %v1457
    %v2622 = vpack.c.b16 %v1462, %v1458
    %v2623 = vpack.c.b16 %v1463, %v1459
    %v2624 = vpack.c.b16 %v1464, %v1460
    %v2625 = vpack.c.b16 %v1469, %v1465
    %v2626 = vpack.c.b16 %v1470, %v1466
    %v2627 = vpack.c.b16 %v1471, %v1467
    %v2628 = vpack.c.b16 %v1472, %v1468
    %v2629 = vpack.c.b16 %v1477, %v1473
    %v2630 = vpack.c.b16 %v1478, %v1474
    %v2631 = vpack.c.b16 %v1479, %v1475
    %v2632 = vpack.c.b16 %v1480, %v1476
    %v2633 = vpack.c.b16 %v1485, %v1481
    %v2634 = vpack.c.b16 %v1486, %v1482
    %v2635 = vpack.c.b16 %v1487, %v1483
    %v2636 = vpack.c.b16 %v1488, %v1484
    %v2637 = vpack.c.b16 %v1493, %v1489
    %v2638 = vpack.c.b16 %v1494, %v1490
    %v2639 = vpack.c.b16 %v1495, %v1491
    %v2640 = vpack.c.b16 %v1496, %v1492
    %v2641 = vpack.c.b16 %v1501, %v1497
    %v2642 = vpack.c.b16 %v1502, %v1498
    %v2643 = vpack.c.b16 %v1503, %v1499
    %v2644 = vpack.c.b16 %v1504, %v1500
    %v2645 = vpack.c.b16 %v1509, %v1505
    %v2646 = vpack.c.b16 %v1510, %v1506
    %v2647 = vpack.c.b16 %v1511, %v1507
    %v2648 = vpack.c.b16 %v1512, %v1508
    %v2649 = vpack.c.b16 %v1517, %v1513
    %v2650 = vpack.c.b16 %v1518, %v1514
    %v2651 = vpack.c.b16 %v1519, %v1515
    %v2652 = vpack.c.b16 %v1520, %v1516
    %v2653 = vpack.c.b16 %v1525, %v1521
    %v2654 = vpack.c.b16 %v1526, %v1522
    %v2655 = vpack.c.b16 %v1527, %v1523
    %v2656 = vpack.c.b16 %v1528, %v1524
    %v2657 = vpack.c.b16 %v1533, %v1529
    %v2658 = vpack.c.b16 %v1534, %v1530
    %v2659 = vpack.c.b16 %v1535, %v1531
    %v2660 = vpack.c.b16 %v1536, %v1532
    %v2661 = vpack.c.b16 %v1541, %v1537
    %v2662 = vpack.c.b16 %v1542, %v1538
    %v2663 = vpack.c.b16 %v1543, %v1539
    %v2664 = vpack.c.b16 %v1544, %v1540
    %v2665 = vpack.c.b16 %v1549, %v1545
    %v2666 = vpack.c.b16 %v1550, %v1546
    %v2667 = vpack.c.b16 %v1551, %v1547
    %v2668 = vpack.c.b16 %v1552, %v1548
    %v2669 = vpack.c.b16 %v1557, %v1553
    %v2670 = vpack.c.b16 %v1558, %v1554
    %v2671 = vpack.c.b16 %v1559, %v1555
    %v2672 = vpack.c.b16 %v1560, %v1556
    %v2673 = vpack.c.b16 %v1565, %v1561
    %v2674 = vpack.c.b16 %v1566, %v1562
    %v2675 = vpack.c.b16 %v1567, %v1563
    %v2676 = vpack.c.b16 %v1568, %v1564
    %v2677 = vpack.c.b16 %v1573, %v1569
    %v2678 = vpack.c.b16 %v1574, %v1570
    %v2679 = vpack.c.b16 %v1575, %v1571
    %v2680 = vpack.c.b16 %v1576, %v1572
    %v2681 = vpack.c.b16 %v1581, %v1577
    %v2682 = vpack.c.b16 %v1582, %v1578
    %v2683 = vpack.c.b16 %v1583, %v1579
    %v2684 = vpack.c.b16 %v1584, %v1580
    %v2685 = vpack.c.b16 %v1589, %v1585
    %v2686 = vpack.c.b16 %v1590, %v1586
    %v2687 = vpack.c.b16 %v1591, %v1587
    %v2688 = vpack.c.b16 %v1592, %v1588
    %v2689 = vpack.c.b16 %v1597, %v1593
    %v2690 = vpack.c.b16 %v1598, %v1594
    %v2691 = vpack.c.b16 %v1599, %v1595
    %v2692 = vpack.c.b16 %v1600, %v1596
    %v2693 = vpack.c.b16 %v1605, %v1601
    %v2694 = vpack.c.b16 %v1606, %v1602
    %v2695 = vpack.c.b16 %v1607, %v1603
    %v2696 = vpack.c.b16 %v1608, %v1604
    %v2697 = vpack.c.b16 %v1613, %v1609
    %v2698 = vpack.c.b16 %v1614, %v1610
    %v2699 = vpack.c.b16 %v1615, %v1611
    %v2700 = vpack.c.b16 %v1616, %v1612
    %v2701 = vpack.c.b16 %v1621, %v1617
    %v2702 = vpack.c.b16 %v1622, %v1618
    %v2703 = vpack.c.b16 %v1623, %v1619
    %v2704 = vpack.c.b16 %v1624, %v1620
    %v2705 = vpack.c.b16 %v1629, %v1625
    %v2706 = vpack.c.b16 %v1630, %v1626
    %v2707 = vpack.c.b16 %v1631, %v1627
    %v2708 = vpack.c.b16 %v1632, %v1628
    %v2709 = vpack.c.b16 %v1637, %v1633
    %v2710 = vpack.c.b16 %v1638, %v1634
    %v2711 = vpack.c.b16 %v1639, %v1635
    %v2712 = vpack.c.b16 %v1640, %v1636
    %v2713 = vpack.c.b16 %v1645, %v1641
    %v2714 = vpack.c.b16 %v1646, %v1642
    %v2715 = vpack.c.b16 %v1647, %v1643
    %v2716 = vpack.c.b16 %v1648, %v1644
    %v2717 = vpack.c.b16 %v1653, %v1649
    %v2718 = vpack.c.b16 %v1654, %v1650
    %v2719 = vpack.c.b16 %v1655, %v1651
    %v2720 = vpack.c.b16 %v1656, %v1652
    %v2721 = vpack.c.b16 %v1661, %v1657
    %v2722 = vpack.c.b16 %v1662, %v1658
    %v2723 = vpack.c.b16 %v1663, %v1659
    %v2724 = vpack.c.b16 %v1664, %v1660
    %v2725 = vpack.c.b16 %v1669, %v1665
    %v2726 = vpack.c.b16 %v1670, %v1666
    %v2727 = vpack.c.b16 %v1671, %v1667
    %v2728 = vpack.c.b16 %v1672, %v1668
    %v2729 = vpack.c.b16 %v1677, %v1673
    %v2730 = vpack.c.b16 %v1678, %v1674
    %v2731 = vpack.c.b16 %v1679, %v1675
    %v2732 = vpack.c.b16 %v1680, %v1676
    %v2733 = vpack.c.b16 %v1685, %v1681
    %v2734 = vpack.c.b16 %v1686, %v1682
    %v2735 = vpack.c.b16 %v1687, %v1683
    %v2736 = vpack.c.b16 %v1688, %v1684
    %v2737 = vpack.c.b16 %v1693, %v1689
    %v2738 = vpack.c.b16 %v1694, %v1690
    %v2739 = vpack.c.b16 %v1695, %v1691
    %v2740 = vpack.c.b16 %v1696, %v1692
    %v2741 = vpack.c.b16 %v1701, %v1697
    %v2742 = vpack.c.b16 %v1702, %v1698
    %v2743 = vpack.c.b16 %v1703, %v1699
    %v2744 = vpack.c.b16 %v1704, %v1700
    %v2745 = vpack.c.b16 %v1709, %v1705
    %v2746 = vpack.c.b16 %v1710, %v1706
    %v2747 = vpack.c.b16 %v1711, %v1707
    %v2748 = vpack.c.b16 %v1712, %v1708
    %v2749 = vpack.c.b16 %v1717, %v1713
    %v2750 = vpack.c.b16 %v1718, %v1714
    %v2751 = vpack.c.b16 %v1719, %v1715
    %v2752 = vpack.c.b16 %v1720, %v1716
    %v2753 = vpack.c.b16 %v1725, %v1721
    %v2754 = vpack.c.b16 %v1726, %v1722
    %v2755 = vpack.c.b16 %v1727, %v1723
    %v2756 = vpack.c.b16 %v1728, %v1724
    %v2757 = vpack.c.b16 %v1733, %v1729
    %v2758 = vpack.c.b16 %v1734, %v1730
    %v2759 = vpack.c.b16 %v1735, %v1731
    %v2760 = vpack.c.b16 %v1736, %v1732
    %v2761 = vpack.c.b16 %v1741, %v1737
    %v2762 = vpack.c.b16 %v1742, %v1738
    %v2763 = vpack.c.b16 %v1743, %v1739
    %v2764 = vpack.c.b16 %v1744, %v1740
    %v2765 = vpack.c.b16 %v1749, %v1745
    %v2766 = vpack.c.b16 %v1750, %v1746
    %v2767 = vpack.c.b16 %v1751, %v1747
    %v2768 = vpack.c.b16 %v1752, %v1748
    %v2769 = vpack.c.b16 %v1757, %v1753
    %v2770 = vpack.c.b16 %v1758, %v1754
    %v2771 = vpack.c.b16 %v1759, %v1755
    %v2772 = vpack.c.b16 %v1760, %v1756
    %v2773 = vpack.c.b16 %v1765, %v1761
    %v2774 = vpack.c.b16 %v1766, %v1762
    %v2775 = vpack.c.b16 %v1767, %v1763
    %v2776 = vpack.c.b16 %v1768, %v1764
    %v2777 = vpack.c.b16 %v1773, %v1769
    %v2778 = vpack.c.b16 %v1774, %v1770
    %v2779 = vpack.c.b16 %v1775, %v1771
    %v2780 = vpack.c.b16 %v1776, %v1772
    %v2781 = vpack.c.b16 %v1781, %v1777
    %v2782 = vpack.c.b16 %v1782, %v1778
    %v2783 = vpack.c.b16 %v1783, %v1779
    %v2784 = vpack.c.b16 %v1784, %v1780
    %v2785 = vpack.c.b16 %v1789, %v1785
    %v2786 = vpack.c.b16 %v1790, %v1786
    %v2787 = vpack.c.b16 %v1791, %v1787
    %v2788 = vpack.c.b16 %v1792, %v1788
    %v2789 = vpack.c.b16 %v1797, %v1793
    %v2790 = vpack.c.b16 %v1798, %v1794
    %v2791 = vpack.c.b16 %v1799, %v1795
    %v2792 = vpack.c.b16 %v1800, %v1796
    %v2793 = vpack.c.b16 %v1805, %v1801
    %v2794 = vpack.c.b16 %v1806, %v1802
    %v2795 = vpack.c.b16 %v1807, %v1803
    %v2796 = vpack.c.b16 %v1808, %v1804
    %v2797 = vpack.c.b16 %v1813, %v1809
    %v2798 = vpack.c.b16 %v1814, %v1810
    %v2799 = vpack.c.b16 %v1815, %v1811
    %v2800 = vpack.c.b16 %v1816, %v1812
    %v2801 = vpack.c.b16 %v1821, %v1817
    %v2802 = vpack.c.b16 %v1822, %v1818
    %v2803 = vpack.c.b16 %v1823, %v1819
    %v2804 = vpack.c.b16 %v1824, %v1820
    %v2805 = vpack.c.b16 %v1829, %v1825
    %v2806 = vpack.c.b16 %v1830, %v1826
    %v2807 = vpack.c.b16 %v1831, %v1827
    %v2808 = vpack.c.b16 %v1832, %v1828
    %v2809 = vpack.c.b16 %v1837, %v1833
    %v2810 = vpack.c.b16 %v1838, %v1834
    %v2811 = vpack.c.b16 %v1839, %v1835
    %v2812 = vpack.c.b16 %v1840, %v1836
    %v2813 = vpack.c.b16 %v1845, %v1841
    %v2814 = vpack.c.b16 %v1846, %v1842
    %v2815 = vpack.c.b16 %v1847, %v1843
    %v2816 = vpack.c.b16 %v1848, %v1844
    %v2817 = vpack.c.b16 %v1853, %v1849
    %v2818 = vpack.c.b16 %v1854, %v1850
    %v2819 = vpack.c.b16 %v1855, %v1851
    %v2820 = vpack.c.b16 %v1856, %v1852
    %v2821 = vpack.c.b16 %v1861, %v1857
    %v2822 = vpack.c.b16 %v1862, %v1858
    %v2823 = vpack.c.b16 %v1863, %v1859
    %v2824 = vpack.c.b16 %v1864, %v1860
    %v2825 = vpack.c.b16 %v1869, %v1865
    %v2826 = vpack.c.b16 %v1870, %v1866
    %v2827 = vpack.c.b16 %v1871, %v1867
    %v2828 = vpack.c.b16 %v1872, %v1868
    %v2829 = vpack.c.b16 %v1877, %v1873
    %v2830 = vpack.c.b16 %v1878, %v1874
    %v2831 = vpack.c.b16 %v1879, %v1875
    %v2832 = vpack.c.b16 %v1880, %v1876
    %v2833 = vpack.c.b16 %v1885, %v1881
    %v2834 = vpack.c.b16 %v1886, %v1882
    %v2835 = vpack.c.b16 %v1887, %v1883
    %v2836 = vpack.c.b16 %v1888, %v1884
    %v2837 = vpack.c.b16 %v1893, %v1889
    %v2838 = vpack.c.b16 %v1894, %v1890
    %v2839 = vpack.c.b16 %v1895, %v1891
    %v2840 = vpack.c.b16 %v1896, %v1892
    %v2841 = vpack.c.b16 %v1901, %v1897
    %v2842 = vpack.c.b16 %v1902, %v1898
    %v2843 = vpack.c.b16 %v1903, %v1899
    %v2844 = vpack.c.b16 %v1904, %v1900
    %v2845 = vpack.c.b16 %v1909, %v1905
    %v2846 = vpack.c.b16 %v1910, %v1906
    %v2847 = vpack.c.b16 %v1911, %v1907
    %v2848 = vpack.c.b16 %v1912, %v1908
    %v2849 = vpack.c.b16 %v1917, %v1913
    %v2850 = vpack.c.b16 %v1918, %v1914
    %v2851 = vpack.c.b16 %v1919, %v1915
    %v2852 = vpack.c.b16 %v1920, %v1916
    %v2853 = vpack.c.b16 %v1925, %v1921
    %v2854 = vpack.c.b16 %v1926, %v1922
    %v2855 = vpack.c.b16 %v1927, %v1923
    %v2856 = vpack.c.b16 %v1928, %v1924
    %v2857 = vpack.c.b16 %v1933, %v1929
    %v2858 = vpack.c.b16 %v1934, %v1930
    %v2859 = vpack.c.b16 %v1935, %v1931
    %v2860 = vpack.c.b16 %v1936, %v1932
    %v2861 = vpack.c.b16 %v1941, %v1937
    %v2862 = vpack.c.b16 %v1942, %v1938
    %v2863 = vpack.c.b16 %v1943, %v1939
    %v2864 = vpack.c.b16 %v1944, %v1940
    %v2865 = vpack.c.b16 %v1949, %v1945
    %v2866 = vpack.c.b16 %v1950, %v1946
    %v2867 = vpack.c.b16 %v1951, %v1947
    %v2868 = vpack.c.b16 %v1952, %v1948
    %v2869 = vpack.c.b16 %v1957, %v1953
    %v2870 = vpack.c.b16 %v1958, %v1954
    %v2871 = vpack.c.b16 %v1959, %v1955
    %v2872 = vpack.c.b16 %v1960, %v1956
    %v2873 = vpack.c.b16 %v1965, %v1961
    %v2874 = vpack.c.b16 %v1966, %v1962
    %v2875 = vpack.c.b16 %v1967, %v1963
    %v2876 = vpack.c.b16 %v1968, %v1964
    %v2877 = vpack.c.b16 %v1973, %v1969
    %v2878 = vpack.c.b16 %v1974, %v1970
    %v2879 = vpack.c.b16 %v1975, %v1971
    %v2880 = vpack.c.b16 %v1976, %v1972
    %v2881 = vpack.c.b16 %v1981, %v1977
    %v2882 = vpack.c.b16 %v1982, %v1978
    %v2883 = vpack.c.b16 %v1983, %v1979
    %v2884 = vpack.c.b16 %v1984, %v1980
    %v2885 = vpack.c.b16 %v1989, %v1985
    %v2886 = vpack.c.b16 %v1990, %v1986
    %v2887 = vpack.c.b16 %v1991, %v1987
    %v2888 = vpack.c.b16 %v1992, %v1988
    %v2889 = vpack.c.b16 %v1997, %v1993
    %v2890 = vpack.c.b16 %v1998, %v1994
    %v2891 = vpack.c.b16 %v1999, %v1995
    %v2892 = vpack.c.b16 %v2000, %v1996
    %v2893 = vpack.c.b16 %v2005, %v2001
    %v2894 = vpack.c.b16 %v2006, %v2002
    %v2895 = vpack.c.b16 %v2007, %v2003
    %v2896 = vpack.c.b16 %v2008, %v2004
    %v2897 = vpack.c.b16 %v2013, %v2009
    %v2898 = vpack.c.b16 %v2014, %v2010
    %v2899 = vpack.c.b16 %v2015, %v2011
    %v2900 = vpack.c.b16 %v2016, %v2012
    %v2901 = vpack.c.b16 %v2021, %v2017
    %v2902 = vpack.c.b16 %v2022, %v2018
    %v2903 = vpack.c.b16 %v2023, %v2019
    %v2904 = vpack.c.b16 %v2024, %v2020
    %v2905 = vpack.c.b16 %v2029, %v2025
    %v2906 = vpack.c.b16 %v2030, %v2026
    %v2907 = vpack.c.b16 %v2031, %v2027
    %v2908 = vpack.c.b16 %v2032, %v2028
    %v2909 = vpack.c.b16 %v2037, %v2033
    %v2910 = vpack.c.b16 %v2038, %v2034
    %v2911 = vpack.c.b16 %v2039, %v2035
    %v2912 = vpack.c.b16 %v2040, %v2036
    %v2913 = vpack.c.b16 %v2045, %v2041
    %v2914 = vpack.c.b16 %v2046, %v2042
    %v2915 = vpack.c.b16 %v2047, %v2043
    %v2916 = vpack.c.b16 %v2048, %v2044
    %v2917 = vpack.c.b16 %v2053, %v2049
    %v2918 = vpack.c.b16 %v2054, %v2050
    %v2919 = vpack.c.b16 %v2055, %v2051
    %v2920 = vpack.c.b16 %v2056, %v2052
    %v2921 = vpack.c.b16 %v2061, %v2057
    %v2922 = vpack.c.b16 %v2062, %v2058
    %v2923 = vpack.c.b16 %v2063, %v2059
    %v2924 = vpack.c.b16 %v2064, %v2060
    %v2925 = vpack.c.b16 %v2069, %v2065
    %v2926 = vpack.c.b16 %v2070, %v2066
    %v2927 = vpack.c.b16 %v2071, %v2067
    %v2928 = vpack.c.b16 %v2072, %v2068
    %v2929 = vpack.c.b16 %v2077, %v2073
    %v2930 = vpack.c.b16 %v2078, %v2074
    %v2931 = vpack.c.b16 %v2079, %v2075
    %v2932 = vpack.c.b16 %v2080, %v2076
    %v2933 = vpack.c.b16 %v2085, %v2081
    %v2934 = vpack.c.b16 %v2086, %v2082
    %v2935 = vpack.c.b16 %v2087, %v2083
    %v2936 = vpack.c.b16 %v2088, %v2084
    %v2937 = vpack.c.b16 %v2093, %v2089
    %v2938 = vpack.c.b16 %v2094, %v2090
    %v2939 = vpack.c.b16 %v2095, %v2091
    %v2940 = vpack.c.b16 %v2096, %v2092
    %v2941 = vpack.c.b16 %v2101, %v2097
    %v2942 = vpack.c.b16 %v2102, %v2098
    %v2943 = vpack.c.b16 %v2103, %v2099
    %v2944 = vpack.c.b16 %v2104, %v2100
    %v2945 = vpack.c.b16 %v2109, %v2105
    %v2946 = vpack.c.b16 %v2110, %v2106
    %v2947 = vpack.c.b16 %v2111, %v2107
    %v2948 = vpack.c.b16 %v2112, %v2108
    %v2949 = vpack.c.b16 %v2117, %v2113
    %v2950 = vpack.c.b16 %v2118, %v2114
    %v2951 = vpack.c.b16 %v2119, %v2115
    %v2952 = vpack.c.b16 %v2120, %v2116
    %v2953 = vpack.c.b16 %v2125, %v2121
    %v2954 = vpack.c.b16 %v2126, %v2122
    %v2955 = vpack.c.b16 %v2127, %v2123
    %v2956 = vpack.c.b16 %v2128, %v2124
    %v2957 = vpack.c.b16 %v2133, %v2129
    %v2958 = vpack.c.b16 %v2134, %v2130
    %v2959 = vpack.c.b16 %v2135, %v2131
    %v2960 = vpack.c.b16 %v2136, %v2132
    %v2961 = vpack.c.b16 %v2141, %v2137
    %v2962 = vpack.c.b16 %v2142, %v2138
    %v2963 = vpack.c.b16 %v2143, %v2139
    %v2964 = vpack.c.b16 %v2144, %v2140
    %v2965 = vpack.c.b16 %v2149, %v2145
    %v2966 = vpack.c.b16 %v2150, %v2146
    %v2967 = vpack.c.b16 %v2151, %v2147
    %v2968 = vpack.c.b16 %v2152, %v2148
    %v2969 = vpack.c.b16 %v2157, %v2153
    %v2970 = vpack.c.b16 %v2158, %v2154
    %v2971 = vpack.c.b16 %v2159, %v2155
    %v2972 = vpack.c.b16 %v2160, %v2156
    %v2973 = vpack.c.b16 %v2165, %v2161
    %v2974 = vpack.c.b16 %v2166, %v2162
    %v2975 = vpack.c.b16 %v2167, %v2163
    %v2976 = vpack.c.b16 %v2168, %v2164
    %v2977 = vpack.c.b16 %v2173, %v2169
    %v2978 = vpack.c.b16 %v2174, %v2170
    %v2979 = vpack.c.b16 %v2175, %v2171
    %v2980 = vpack.c.b16 %v2176, %v2172
    %v2981 = vpack.c.b16 %v2181, %v2177
    %v2982 = vpack.c.b16 %v2182, %v2178
    %v2983 = vpack.c.b16 %v2183, %v2179
    %v2984 = vpack.c.b16 %v2184, %v2180
    %v2985 = vpack.c.b16 %v2189, %v2185
    %v2986 = vpack.c.b16 %v2190, %v2186
    %v2987 = vpack.c.b16 %v2191, %v2187
    %v2988 = vpack.c.b16 %v2192, %v2188
    %v2989 = vpack.c.b16 %v2197, %v2193
    %v2990 = vpack.c.b16 %v2198, %v2194
    %v2991 = vpack.c.b16 %v2199, %v2195
    %v2992 = vpack.c.b16 %v2200, %v2196
    %v2993 = vpack.c.b16 %v2205, %v2201
    %v2994 = vpack.c.b16 %v2206, %v2202
    %v2995 = vpack.c.b16 %v2207, %v2203
    %v2996 = vpack.c.b16 %v2208, %v2204
    %v2997 = vpack.c.b16 %v2213, %v2209
    %v2998 = vpack.c.b16 %v2214, %v2210
    %v2999 = vpack.c.b16 %v2215, %v2211
    %v3000 = vpack.c.b16 %v2216, %v2212
    %v3001 = vpack.c.b16 %v2221, %v2217
    %v3002 = vpack.c.b16 %v2222, %v2218
    %v3003 = vpack.c.b16 %v2223, %v2219
    %v3004 = vpack.c.b16 %v2224, %v2220
    %v3005 = vpack.c.b16 %v2229, %v2225
    %v3006 = vpack.c.b16 %v2230, %v2226
    %v3007 = vpack.c.b16 %v2231, %v2227
    %v3008 = vpack.c.b16 %v2232, %v2228
    %v3009 = vpack.c.b16 %v2237, %v2233
    %v3010 = vpack.c.b16 %v2238, %v2234
    %v3011 = vpack.c.b16 %v2239, %v2235
    %v3012 = vpack.c.b16 %v2240, %v2236
    %v3013 = vpack.c.b16 %v2245, %v2241
    %v3014 = vpack.c.b16 %v2246, %v2242
    %v3015 = vpack.c.b16 %v2247, %v2243
    %v3016 = vpack.c.b16 %v2248, %v2244
    %v3017 = vpack.c.b16 %v2253, %v2249
    %v3018 = vpack.c.b16 %v2254, %v2250
    %v3019 = vpack.c.b16 %v2255, %v2251
    %v3020 = vpack.c.b16 %v2256, %v2252
    %v3021 = vpack.c.b16 %v2261, %v2257
    %v3022 = vpack.c.b16 %v2262, %v2258
    %v3023 = vpack.c.b16 %v2263, %v2259
    %v3024 = vpack.c.b16 %v2264, %v2260
    %v3025 = vpack.c.b16 %v2269, %v2265
    %v3026 = vpack.c.b16 %v2270, %v2266
    %v3027 = vpack.c.b16 %v2271, %v2267
    %v3028 = vpack.c.b16 %v2272, %v2268
    %v3029 = vpack.c.b16 %v2277, %v2273
    %v3030 = vpack.c.b16 %v2278, %v2274
    %v3031 = vpack.c.b16 %v2279, %v2275
    %v3032 = vpack.c.b16 %v2280, %v2276
    %v3033 = vpack.c.b16 %v2285, %v2281
    %v3034 = vpack.c.b16 %v2286, %v2282
    %v3035 = vpack.c.b16 %v2287, %v2283
    %v3036 = vpack.c.b16 %v2288, %v2284
    %v3037 = vpack.c.b16 %v2293, %v2289
    %v3038 = vpack.c.b16 %v2294, %v2290
    %v3039 = vpack.c.b16 %v2295, %v2291
    %v3040 = vpack.c.b16 %v2296, %v2292
    %v3041 = vpack.c.b16 %v2301, %v2297
    %v3042 = vpack.c.b16 %v2302, %v2298
    %v3043 = vpack.c.b16 %v2303, %v2299
    %v3044 = vpack.c.b16 %v2304, %v2300
    %v3045 = vpack.c.b16 %v2309, %v2305
    %v3046 = vpack.c.b16 %v2310, %v2306
    %v3047 = vpack.c.b16 %v2311, %v2307
    %v3048 = vpack.c.b16 %v2312, %v2308
    %v3049 = vpack.c.b16 %v2317, %v2313
    %v3050 = vpack.c.b16 %v2318, %v2314
    %v3051 = vpack.c.b16 %v2319, %v2315
    %v3052 = vpack.c.b16 %v2320, %v2316
    %v3053 = vpack.c.b16 %v2325, %v2321
    %v3054 = vpack.c.b16 %v2326, %v2322
    %v3055 = vpack.c.b16 %v2327, %v2323
    %v3056 = vpack.c.b16 %v2328, %v2324
    %v3057 = vpack.c.b16 %v2333, %v2329
    %v3058 = vpack.c.b16 %v2334, %v2330
    %v3059 = vpack.c.b16 %v2335, %v2331
    %v3060 = vpack.c.b16 %v2336, %v2332
    %v3061 = vpack.c.b16 %v2341, %v2337
    %v3062 = vpack.c.b16 %v2342, %v2338
    %v3063 = vpack.c.b16 %v2343, %v2339
    %v3064 = vpack.c.b16 %v2344, %v2340
    %v3065 = vpack.c.b16 %v2349, %v2345
    %v3066 = vpack.c.b16 %v2350, %v2346
    %v3067 = vpack.c.b16 %v2351, %v2347
    %v3068 = vpack.c.b16 %v2352, %v2348
    %v3069 = vpack.c.b16 %v2357, %v2353
    %v3070 = vpack.c.b16 %v2358, %v2354
    %v3071 = vpack.c.b16 %v2359, %v2355
    %v3072 = vpack.c.b16 %v2360, %v2356
    %v3073 = vpack.c.b16 %v2365, %v2361
    %v3074 = vpack.c.b16 %v2366, %v2362
    %v3075 = vpack.c.b16 %v2367, %v2363
    %v3076 = vpack.c.b16 %v2368, %v2364
    %v3077 = vpack.c.b16 %v2373, %v2369
    %v3078 = vpack.c.b16 %v2374, %v2370
    %v3079 = vpack.c.b16 %v2375, %v2371
    %v3080 = vpack.c.b16 %v2376, %v2372
    %v3081 = vpack.c.b16 %v2381, %v2377
    %v3082 = vpack.c.b16 %v2382, %v2378
    %v3083 = vpack.c.b16 %v2383, %v2379
    %v3084 = vpack.c.b16 %v2384, %v2380
    %v3085 = vpack.c.b16 %v2389, %v2385
    %v3086 = vpack.c.b16 %v2390, %v2386
    %v3087 = vpack.c.b16 %v2391, %v2387
    %v3088 = vpack.c.b16 %v2392, %v2388
    %v3089 = vpack.c.b16 %v2397, %v2393
    %v3090 = vpack.c.b16 %v2398, %v2394
    %v3091 = vpack.c.b16 %v2399, %v2395
    %v3092 = vpack.c.b16 %v2400, %v2396
    %v3093 = vpack.c.b16 %v2405, %v2401
    %v3094 = vpack.c.b16 %v2406, %v2402
    %v3095 = vpack.c.b16 %v2407, %v2403
    %v3096 = vpack.c.b16 %v2408, %v2404
    %v3097 = vpack.c.b16 %v2413, %v2409
    %v3098 = vpack.c.b16 %v2414, %v2410
    %v3099 = vpack.c.b16 %v2415, %v2411
    %v3100 = vpack.c.b16 %v2416, %v2412
    %v3101 = vpack.c.b16 %v2421, %v2417
    %v3102 = vpack.c.b16 %v2422, %v2418
    %v3103 = vpack.c.b16 %v2423, %v2419
    %v3104 = vpack.c.b16 %v2424, %v2420
    %v3105 = vpack.c.b16 %v2429, %v2425
    %v3106 = vpack.c.b16 %v2430, %v2426
    %v3107 = vpack.c.b16 %v2431, %v2427
    %v3108 = vpack.c.b16 %v2432, %v2428
    %v3109 = vpack.c.b16 %v2437, %v2433
    %v3110 = vpack.c.b16 %v2438, %v2434
    %v3111 = vpack.c.b16 %v2439, %v2435
    %v3112 = vpack.c.b16 %v2440, %v2436
    %v3113 = vpack.c.b16 %v2445, %v2441
    %v3114 = vpack.c.b16 %v2446, %v2442
    %v3115 = vpack.c.b16 %v2447, %v2443
    %v3116 = vpack.c.b16 %v2448, %v2444
    %v3117 = vpack.c.b16 %v2453, %v2449
    %v3118 = vpack.c.b16 %v2454, %v2450
    %v3119 = vpack.c.b16 %v2455, %v2451
    %v3120 = vpack.c.b16 %v2456, %v2452
    %v3121 = vpack.c.b16 %v2461, %v2457
    %v3122 = vpack.c.b16 %v2462, %v2458
    %v3123 = vpack.c.b16 %v2463, %v2459
    %v3124 = vpack.c.b16 %v2464, %v2460
    %v3125 = vpack.c.b16 %v2469, %v2465
    %v3126 = vpack.c.b16 %v2470, %v2466
    %v3127 = vpack.c.b16 %v2471, %v2467
    %v3128 = vpack.c.b16 %v2472, %v2468
    %v3129 = vpack.c.b16 %v2477, %v2473
    %v3130 = vpack.c.b16 %v2478, %v2474
    %v3131 = vpack.c.b16 %v2479, %v2475
    %v3132 = vpack.c.b16 %v2480, %v2476
    %v3133 = vpack.c.b16 %v2485, %v2481
    %v3134 = vpack.c.b16 %v2486, %v2482
    %v3135 = vpack.c.b16 %v2487, %v2483
    %v3136 = vpack.c.b16 %v2488, %v2484
    %v3137 = vpack.c.b16 %v2493, %v2489
    %v3138 = vpack.c.b16 %v2494, %v2490
    %v3139 = vpack.c.b16 %v2495, %v2491
    %v3140 = vpack.c.b16 %v2496, %v2492
    %v3141 = vpack.c.b16 %v2501, %v2497
    %v3142 = vpack.c.b16 %v2502, %v2498
    %v3143 = vpack.c.b16 %v2503, %v2499
    %v3144 = vpack.c.b16 %v2504, %v2500
    %v3145 = vpack.c.b16 %v2509, %v2505
    %v3146 = vpack.c.b16 %v2510, %v2506
    %v3147 = vpack.c.b16 %v2511, %v2507
    %v3148 = vpack.c.b16 %v2512, %v2508
    %v3149 = vpack.c.b16 %v2517, %v2513
    %v3150 = vpack.c.b16 %v2518, %v2514
    %v3151 = vpack.c.b16 %v2519, %v2515
    %v3152 = vpack.c.b16 %v2520, %v2516
    %v3153 = vpack.c.b16 %v2525, %v2521
    %v3154 = vpack.c.b16 %v2526, %v2522
    %v3155 = vpack.c.b16 %v2527, %v2523
    %v3156 = vpack.c.b16 %v2528, %v2524
    %v3157 = vpack.c.b16 %v2533, %v2529
    %v3158 = vpack.c.b16 %v2534, %v2530
    %v3159 = vpack.c.b16 %v2535, %v2531
    %v3160 = vpack.c.b16 %v2536, %v2532
    %v3161 = vpack.c.b16 %v2541, %v2537
    %v3162 = vpack.c.b16 %v2542, %v2538
    %v3163 = vpack.c.b16 %v2543, %v2539
    %v3164 = vpack.c.b16 %v2544, %v2540
    %v3165 = vpack.c.b16 %v2549, %v2545
    %v3166 = vpack.c.b16 %v2550, %v2546
    %v3167 = vpack.c.b16 %v2551, %v2547
    %v3168 = vpack.c.b16 %v2552, %v2548
    %v3169 = vpack.c.b16 %v2557, %v2553
    %v3170 = vpack.c.b16 %v2558, %v2554
    %v3171 = vpack.c.b16 %v2559, %v2555
    %v3172 = vpack.c.b16 %v2560, %v2556
    %v3173 = vpack.c.b16 %v2565, %v2561
    %v3174 = vpack.c.b16 %v2566, %v2562
    %v3175 = vpack.c.b16 %v2567, %v2563
    %v3176 = vpack.c.b16 %v2568, %v2564
    %v3177 = vpack.c.b16 %v2573, %v2569
    %v3178 = vpack.c.b16 %v2574, %v2570
    %v3179 = vpack.c.b16 %v2575, %v2571
    %v3180 = vpack.c.b16 %v2576, %v2572
    %v3181 = vpack.c.b16 %v2581, %v2577
    %v3182 = vpack.c.b16 %v2582, %v2578
    %v3183 = vpack.c.b16 %v2583, %v2579
    %v3184 = vpack.c.b16 %v2584, %v2580
    %v3185 = vpack.c.b16 %v2589, %v2585
    %v3186 = vpack.c.b16 %v2590, %v2586
    %v3187 = vpack.c.b16 %v2591, %v2587
    %v3188 = vpack.c.b16 %v2592, %v2588
    %v3189 = vpack.c.b16 %v2597, %v2593
    %v3190 = vpack.c.b16 %v2598, %v2594
    %v3191 = vpack.c.b16 %v2599, %v2595
    %v3192 = vpack.c.b16 %v2600, %v2596
    %v3193 = vpack.c.b16 %v2605, %v2601
    %v3194 = vpack.c.b16 %v2606, %v2602
    %v3195 = vpack.c.b16 %v2607, %v2603
    %v3196 = vpack.c.b16 %v2608, %v2604
    %vm3785 = vcmask 392192
    %v3787 = vsel %vm3785, %v826, 0
    %3789 = vmatprep.subr.bf16.mxu0 %v2610
    %3790 = vmatpush1.bf16.msra.mxu0 %v2609
    %3791 = vmatprep.subr.bf16.mxu0 %v2614
    %3792 = vmatpush1.bf16.msra.mxu0 %v2613
    %3793 = vmatprep.subr.bf16.mxu0 %v2618
    %3794 = vmatpush1.bf16.msra.mxu0 %v2617
    %3795 = vmatprep.subr.bf16.mxu0 %v2622
    %3796 = vmatpush1.bf16.msra.mxu0 %v2621
    %3797 = vmatprep.subr.bf16.mxu0 %v2626
    %3798 = vmatpush1.bf16.msra.mxu0 %v2625
    %3799 = vmatprep.subr.bf16.mxu0 %v2630
    %3800 = vmatpush1.bf16.msra.mxu0 %v2629
    %3801 = vmatprep.subr.bf16.mxu0 %v2634
    %3802 = vmatpush1.bf16.msra.mxu0 %v2633
    %3803 = vmatprep.subr.bf16.mxu0 %v2638
    %3804 = vmatpush1.bf16.msra.mxu0 %v2637
    %3805 = vmatprep.subr.bf16.mxu0 %v2642
    %3806 = vmatpush1.bf16.msra.mxu0 %v2641
    %3807 = vmatprep.subr.bf16.mxu0 %v2646
    %3808 = vmatpush1.bf16.msra.mxu0 %v2645
    %3809 = vmatprep.subr.bf16.mxu0 %v2650
    %3810 = vmatpush1.bf16.msra.mxu0 %v2649
    %3811 = vmatprep.subr.bf16.mxu0 %v2654
    %3812 = vmatpush1.bf16.msra.mxu0 %v2653
    %3813 = vmatprep.subr.bf16.mxu0 %v2658
    %3814 = vmatpush1.bf16.msra.mxu0 %v2657
    %3815 = vmatprep.subr.bf16.mxu0 %v2662
    %3816 = vmatpush1.bf16.msra.mxu0 %v2661
    %3817 = vmatprep.subr.bf16.mxu0 %v2666
    %3818 = vmatpush1.bf16.msra.mxu0 %v2665
    %3819 = vmatprep.subr.bf16.mxu0 %v2670
    %3820 = vmatpush1.bf16.msra.mxu0 %v2669
    %3821 = vmatprep.mubr.bf16.mxu0 %v743
    %3822 = vmatmul.mubr.bf16.gmra.mrb[0].mxu0 %v729
    %v3823 = vpop.f32.mrb[0].mxu0
    %v3824 = vadd.f32 %v686, %v3823
    %v3825 = vpop.f32.mrb[0].mxu0
    %v3826 = vadd.f32 %v690, %v3825
    %v3827 = vpop.f32.mrb[0].mxu0
    %v3828 = vpop.f32.mrb[0].mxu0
    %3829 = vdwg.mxu0
    %3830 = vmatprep.subr.bf16.mxu0 %v2674
    %3831 = vmatpush1.bf16.msra.mxu0 %v2673
    %3832 = vmatprep.subr.bf16.mxu0 %v2678
    %3833 = vmatpush1.bf16.msra.mxu0 %v2677
    %3834 = vmatprep.subr.bf16.mxu0 %v2682
    %3835 = vmatpush1.bf16.msra.mxu0 %v2681
    %3836 = vmatprep.subr.bf16.mxu0 %v2686
    %3837 = vmatpush1.bf16.msra.mxu0 %v2685
    %3838 = vmatprep.subr.bf16.mxu0 %v2690
    %3839 = vmatpush1.bf16.msra.mxu0 %v2689
    %3840 = vmatprep.subr.bf16.mxu0 %v2694
    %3841 = vmatpush1.bf16.msra.mxu0 %v2693
    %3842 = vmatprep.subr.bf16.mxu0 %v2698
    %3843 = vmatpush1.bf16.msra.mxu0 %v2697
    %3844 = vmatprep.subr.bf16.mxu0 %v2702
    %3845 = vmatpush1.bf16.msra.mxu0 %v2701
    %3846 = vmatprep.subr.bf16.mxu0 %v2706
    %3847 = vmatpush1.bf16.msra.mxu0 %v2705
    %3848 = vmatprep.subr.bf16.mxu0 %v2710
    %3849 = vmatpush1.bf16.msra.mxu0 %v2709
    %3850 = vmatprep.subr.bf16.mxu0 %v2714
    %3851 = vmatpush1.bf16.msra.mxu0 %v2713
    %3852 = vmatprep.subr.bf16.mxu0 %v2718
    %3853 = vmatpush1.bf16.msra.mxu0 %v2717
    %3854 = vmatprep.subr.bf16.mxu0 %v2722
    %3855 = vmatpush1.bf16.msra.mxu0 %v2721
    %3856 = vmatprep.subr.bf16.mxu0 %v2726
    %3857 = vmatpush1.bf16.msra.mxu0 %v2725
    %3858 = vmatprep.subr.bf16.mxu0 %v2730
    %3859 = vmatpush1.bf16.msra.mxu0 %v2729
    %3860 = vmatprep.subr.bf16.mxu0 %v2734
    %3861 = vmatpush1.bf16.msra.mxu0 %v2733
    %3862 = vmatprep.mubr.bf16.mxu0 %v753
    %3863 = vmatmul.mubr.bf16.gmra.mrb[0].mxu0 %v751
    %v3864 = vpop.f32.mrb[0].mxu0
    %v3865 = vadd.f32 %v3824, %v3864
    %v3866 = vpop.f32.mrb[0].mxu0
    %v3867 = vadd.f32 %v3826, %v3866
    %v3868 = vpop.f32.mrb[0].mxu0
    %v3869 = vpop.f32.mrb[0].mxu0
    %3870 = vdwg.mxu0
    %3871 = vmatprep.subr.bf16.mxu0 %v2738
    %3872 = vmatpush1.bf16.msra.mxu0 %v2737
    %3873 = vmatprep.subr.bf16.mxu0 %v2742
    %3874 = vmatpush1.bf16.msra.mxu0 %v2741
    %3875 = vmatprep.subr.bf16.mxu0 %v2746
    %3876 = vmatpush1.bf16.msra.mxu0 %v2745
    %3877 = vmatprep.subr.bf16.mxu0 %v2750
    %3878 = vmatpush1.bf16.msra.mxu0 %v2749
    %3879 = vmatprep.subr.bf16.mxu0 %v2754
    %3880 = vmatpush1.bf16.msra.mxu0 %v2753
    %3881 = vmatprep.subr.bf16.mxu0 %v2758
    %3882 = vmatpush1.bf16.msra.mxu0 %v2757
    %3883 = vmatprep.subr.bf16.mxu0 %v2762
    %3884 = vmatpush1.bf16.msra.mxu0 %v2761
    %3885 = vmatprep.subr.bf16.mxu0 %v2766
    %3886 = vmatpush1.bf16.msra.mxu0 %v2765
    %3887 = vmatprep.subr.bf16.mxu0 %v2770
    %3888 = vmatpush1.bf16.msra.mxu0 %v2769
    %3889 = vmatprep.subr.bf16.mxu0 %v2774
    %3890 = vmatpush1.bf16.msra.mxu0 %v2773
    %3891 = vmatprep.subr.bf16.mxu0 %v2778
    %3892 = vmatpush1.bf16.msra.mxu0 %v2777
    %3893 = vmatprep.subr.bf16.mxu0 %v2782
    %3894 = vmatpush1.bf16.msra.mxu0 %v2781
    %3895 = vmatprep.subr.bf16.mxu0 %v2786
    %3896 = vmatpush1.bf16.msra.mxu0 %v2785
    %3897 = vmatprep.subr.bf16.mxu0 %v2790
    %3898 = vmatpush1.bf16.msra.mxu0 %v2789
    %3899 = vmatprep.subr.bf16.mxu0 %v2794
    %3900 = vmatpush1.bf16.msra.mxu0 %v2793
    %3901 = vmatprep.subr.bf16.mxu0 %v2798
    %3902 = vmatpush1.bf16.msra.mxu0 %v2797
    %3903 = vmatprep.mubr.bf16.mxu0 %v750
    %3904 = vmatmul.mubr.bf16.gmra.mrb[0].mxu0 %v736
    %v3905 = vpop.f32.mrb[0].mxu0
    %v3906 = vadd.f32 %v3865, %v3905
    %v3907 = vpop.f32.mrb[0].mxu0
    %v3908 = vadd.f32 %v3867, %v3907
    %v3909 = vpop.f32.mrb[0].mxu0
    %v3910 = vpop.f32.mrb[0].mxu0
    %3911 = vdwg.mxu0
    %3912 = vmatprep.subr.bf16.mxu0 %v2802
    %3913 = vmatpush1.bf16.msra.mxu0 %v2801
    %3914 = vmatprep.subr.bf16.mxu0 %v2806
    %3915 = vmatpush1.bf16.msra.mxu0 %v2805
    %3916 = vmatprep.subr.bf16.mxu0 %v2810
    %3917 = vmatpush1.bf16.msra.mxu0 %v2809
    %3918 = vmatprep.subr.bf16.mxu0 %v2814
    %3919 = vmatpush1.bf16.msra.mxu0 %v2813
    %3920 = vmatprep.subr.bf16.mxu0 %v2818
    %3921 = vmatpush1.bf16.msra.mxu0 %v2817
    %3922 = vmatprep.subr.bf16.mxu0 %v2822
    %3923 = vmatpush1.bf16.msra.mxu0 %v2821
    %3924 = vmatprep.subr.bf16.mxu0 %v2826
    %3925 = vmatpush1.bf16.msra.mxu0 %v2825
    %3926 = vmatprep.subr.bf16.mxu0 %v2830
    %3927 = vmatpush1.bf16.msra.mxu0 %v2829
    %3928 = vmatprep.subr.bf16.mxu0 %v2834
    %3929 = vmatpush1.bf16.msra.mxu0 %v2833
    %3930 = vmatprep.subr.bf16.mxu0 %v2838
    %3931 = vmatpush1.bf16.msra.mxu0 %v2837
    %3932 = vmatprep.subr.bf16.mxu0 %v2842
    %3933 = vmatpush1.bf16.msra.mxu0 %v2841
    %3934 = vmatprep.subr.bf16.mxu0 %v2846
    %3935 = vmatpush1.bf16.msra.mxu0 %v2845
    %3936 = vmatprep.subr.bf16.mxu0 %v2850
    %3937 = vmatpush1.bf16.msra.mxu0 %v2849
    %3938 = vmatprep.subr.bf16.mxu0 %v2854
    %3939 = vmatpush1.bf16.msra.mxu0 %v2853
    %3940 = vmatprep.subr.bf16.mxu0 %v2858
    %3941 = vmatpush1.bf16.msra.mxu0 %v2857
    %3942 = vmatprep.subr.bf16.mxu0 %v2862
    %3943 = vmatpush1.bf16.msra.mxu0 %v2861
    %3944 = vmatprep.mubr.bf16.mxu0 %v754
    %3945 = vmatmul.mubr.bf16.gmra.mrb[0].mxu0 %v752
    %v3946 = vpop.f32.mrb[0].mxu0
    %v3947 = vadd.f32 %v3906, %v3946
    %v3948 = vpop.f32.mrb[0].mxu0
    %v3949 = vadd.f32 %v3908, %v3948
    %v3950 = vpop.f32.mrb[0].mxu0
    %v3951 = vpop.f32.mrb[0].mxu0
    %3952 = vdwg.mxu0
    %3953 = vmatprep.subr.bf16.mxu0 %v2866
    %3954 = vmatpush1.bf16.msra.mxu0 %v2865
    %3955 = vmatprep.subr.bf16.mxu0 %v2870
    %3956 = vmatpush1.bf16.msra.mxu0 %v2869
    %3957 = vmatprep.subr.bf16.mxu0 %v2874
    %3958 = vmatpush1.bf16.msra.mxu0 %v2873
    %3959 = vmatprep.subr.bf16.mxu0 %v2878
    %3960 = vmatpush1.bf16.msra.mxu0 %v2877
    %3961 = vmatprep.subr.bf16.mxu0 %v2882
    %3962 = vmatpush1.bf16.msra.mxu0 %v2881
    %3963 = vmatprep.subr.bf16.mxu0 %v2886
    %3964 = vmatpush1.bf16.msra.mxu0 %v2885
    %3965 = vmatprep.subr.bf16.mxu0 %v2890
    %3966 = vmatpush1.bf16.msra.mxu0 %v2889
    %3967 = vmatprep.subr.bf16.mxu0 %v2894
    %3968 = vmatpush1.bf16.msra.mxu0 %v2893
    %3969 = vmatprep.subr.bf16.mxu0 %v2898
    %3970 = vmatpush1.bf16.msra.mxu0 %v2897
    %3971 = vmatprep.subr.bf16.mxu0 %v2902
    %3972 = vmatpush1.bf16.msra.mxu0 %v2901
    %3973 = vmatprep.subr.bf16.mxu0 %v2906
    %3974 = vmatpush1.bf16.msra.mxu0 %v2905
    %3975 = vmatprep.subr.bf16.mxu0 %v2910
    %3976 = vmatpush1.bf16.msra.mxu0 %v2909
    %3977 = vmatprep.subr.bf16.mxu0 %v2914
    %3978 = vmatpush1.bf16.msra.mxu0 %v2913
    %3979 = vmatprep.subr.bf16.mxu0 %v2918
    %3980 = vmatpush1.bf16.msra.mxu0 %v2917
    %3981 = vmatprep.subr.bf16.mxu0 %v2922
    %3982 = vmatpush1.bf16.msra.mxu0 %v2921
    %3983 = vmatprep.subr.bf16.mxu0 %v2926
    %3984 = vmatpush1.bf16.msra.mxu0 %v2925
    %3985 = vmatprep.mubr.bf16.mxu0 %v792
    %3986 = vmatmul.mubr.bf16.gmra.mrb[0].mxu0 %v778
    %v3987 = vpop.f32.mrb[0].mxu0
    %v3988 = vadd.f32 %v3947, %v3987
    %v3989 = vpop.f32.mrb[0].mxu0
    %v3990 = vadd.f32 %v3949, %v3989
    %v3991 = vpop.f32.mrb[0].mxu0
    %v3992 = vpop.f32.mrb[0].mxu0
    %3993 = vdwg.mxu0
    %3994 = vmatprep.subr.bf16.mxu0 %v2930
    %3995 = vmatpush1.bf16.msra.mxu0 %v2929
    %3996 = vmatprep.subr.bf16.mxu0 %v2934
    %3997 = vmatpush1.bf16.msra.mxu0 %v2933
    %3998 = vmatprep.subr.bf16.mxu0 %v2938
    %3999 = vmatpush1.bf16.msra.mxu0 %v2937
    %4000 = vmatprep.subr.bf16.mxu0 %v2942
    %4001 = vmatpush1.bf16.msra.mxu0 %v2941
    %4002 = vmatprep.subr.bf16.mxu0 %v2946
    %4003 = vmatpush1.bf16.msra.mxu0 %v2945
    %4004 = vmatprep.subr.bf16.mxu0 %v2950
    %4005 = vmatpush1.bf16.msra.mxu0 %v2949
    %4006 = vmatprep.subr.bf16.mxu0 %v2954
    %4007 = vmatpush1.bf16.msra.mxu0 %v2953
    %4008 = vmatprep.subr.bf16.mxu0 %v2958
    %4009 = vmatpush1.bf16.msra.mxu0 %v2957
    %4010 = vmatprep.subr.bf16.mxu0 %v2962
    %4011 = vmatpush1.bf16.msra.mxu0 %v2961
    %4012 = vmatprep.subr.bf16.mxu0 %v2966
    %4013 = vmatpush1.bf16.msra.mxu0 %v2965
    %4014 = vmatprep.subr.bf16.mxu0 %v2970
    %4015 = vmatpush1.bf16.msra.mxu0 %v2969
    %4016 = vmatprep.subr.bf16.mxu0 %v2974
    %4017 = vmatpush1.bf16.msra.mxu0 %v2973
    %4018 = vmatprep.subr.bf16.mxu0 %v2978
    %4019 = vmatpush1.bf16.msra.mxu0 %v2977
    %4020 = vmatprep.subr.bf16.mxu0 %v2982
    %4021 = vmatpush1.bf16.msra.mxu0 %v2981
    %4022 = vmatprep.subr.bf16.mxu0 %v2986
    %4023 = vmatpush1.bf16.msra.mxu0 %v2985
    %4024 = vmatprep.subr.bf16.mxu0 %v2990
    %4025 = vmatpush1.bf16.msra.mxu0 %v2989
    %4026 = vmatprep.mubr.bf16.mxu0 %v802
    %4027 = vmatmul.mubr.bf16.gmra.mrb[0].mxu0 %v800
    %v4028 = vpop.f32.mrb[0].mxu0
    %v4029 = vadd.f32 %v3988, %v4028
    %v4030 = vpop.f32.mrb[0].mxu0
    %v4031 = vadd.f32 %v3990, %v4030
    %v4032 = vpop.f32.mrb[0].mxu0
    %v4033 = vpop.f32.mrb[0].mxu0
    %4034 = vdwg.mxu0
    %4035 = vmatprep.subr.bf16.mxu0 %v2994
    %4036 = vmatpush1.bf16.msra.mxu0 %v2993
    %4037 = vmatprep.subr.bf16.mxu0 %v2998
    %4038 = vmatpush1.bf16.msra.mxu0 %v2997
    %4039 = vmatprep.subr.bf16.mxu0 %v3002
    %4040 = vmatpush1.bf16.msra.mxu0 %v3001
    %4041 = vmatprep.subr.bf16.mxu0 %v3006
    %4042 = vmatpush1.bf16.msra.mxu0 %v3005
    %4043 = vmatprep.subr.bf16.mxu0 %v3010
    %4044 = vmatpush1.bf16.msra.mxu0 %v3009
    %4045 = vmatprep.subr.bf16.mxu0 %v3014
    %4046 = vmatpush1.bf16.msra.mxu0 %v3013
    %4047 = vmatprep.subr.bf16.mxu0 %v3018
    %4048 = vmatpush1.bf16.msra.mxu0 %v3017
    %4049 = vmatprep.subr.bf16.mxu0 %v3022
    %4050 = vmatpush1.bf16.msra.mxu0 %v3021
    %4051 = vmatprep.subr.bf16.mxu0 %v3026
    %4052 = vmatpush1.bf16.msra.mxu0 %v3025
    %4053 = vmatprep.subr.bf16.mxu0 %v3030
    %4054 = vmatpush1.bf16.msra.mxu0 %v3029
    %4055 = vmatprep.subr.bf16.mxu0 %v3034
    %4056 = vmatpush1.bf16.msra.mxu0 %v3033
    %4057 = vmatprep.subr.bf16.mxu0 %v3038
    %4058 = vmatpush1.bf16.msra.mxu0 %v3037
    %4059 = vmatprep.subr.bf16.mxu0 %v3042
    %4060 = vmatpush1.bf16.msra.mxu0 %v3041
    %4061 = vmatprep.subr.bf16.mxu0 %v3046
    %4062 = vmatpush1.bf16.msra.mxu0 %v3045
    %4063 = vmatprep.subr.bf16.mxu0 %v3050
    %4064 = vmatpush1.bf16.msra.mxu0 %v3049
    %4065 = vmatprep.subr.bf16.mxu0 %v3054
    %4066 = vmatpush1.bf16.msra.mxu0 %v3053
    %4067 = vmatprep.mubr.bf16.mxu0 %v799
    %4068 = vmatmul.mubr.bf16.gmra.mrb[0].mxu0 %v785
    %v4069 = vpop.f32.mrb[0].mxu0
    %v4070 = vadd.f32 %v4029, %v4069
    %v4071 = vpop.f32.mrb[0].mxu0
    %v4072 = vadd.f32 %v4031, %v4071
    %v4073 = vpop.f32.mrb[0].mxu0
    %v4074 = vpop.f32.mrb[0].mxu0
    %4075 = vdwg.mxu0
    %4076 = vmatprep.subr.bf16.mxu0 %v3058
    %4077 = vmatpush1.bf16.msra.mxu0 %v3057
    %4078 = vmatprep.subr.bf16.mxu0 %v3062
    %4079 = vmatpush1.bf16.msra.mxu0 %v3061
    %4080 = vmatprep.subr.bf16.mxu0 %v3066
    %4081 = vmatpush1.bf16.msra.mxu0 %v3065
    %4082 = vmatprep.subr.bf16.mxu0 %v3070
    %4083 = vmatpush1.bf16.msra.mxu0 %v3069
    %4084 = vmatprep.subr.bf16.mxu0 %v3074
    %4085 = vmatpush1.bf16.msra.mxu0 %v3073
    %4086 = vmatprep.subr.bf16.mxu0 %v3078
    %4087 = vmatpush1.bf16.msra.mxu0 %v3077
    %4088 = vmatprep.subr.bf16.mxu0 %v3082
    %4089 = vmatpush1.bf16.msra.mxu0 %v3081
    %4090 = vmatprep.subr.bf16.mxu0 %v3086
    %4091 = vmatpush1.bf16.msra.mxu0 %v3085
    %4092 = vmatprep.subr.bf16.mxu0 %v3090
    %4093 = vmatpush1.bf16.msra.mxu0 %v3089
    %4094 = vmatprep.subr.bf16.mxu0 %v3094
    %4095 = vmatpush1.bf16.msra.mxu0 %v3093
    %4096 = vmatprep.subr.bf16.mxu0 %v3098
    %4097 = vmatpush1.bf16.msra.mxu0 %v3097
    %4098 = vmatprep.subr.bf16.mxu0 %v3102
    %4099 = vmatpush1.bf16.msra.mxu0 %v3101
    %4100 = vmatprep.subr.bf16.mxu0 %v3106
    %4101 = vmatpush1.bf16.msra.mxu0 %v3105
    %4102 = vmatprep.subr.bf16.mxu0 %v3110
    %4103 = vmatpush1.bf16.msra.mxu0 %v3109
    %4104 = vmatprep.subr.bf16.mxu0 %v3114
    %4105 = vmatpush1.bf16.msra.mxu0 %v3113
    %4106 = vmatprep.subr.bf16.mxu0 %v3118
    %4107 = vmatpush1.bf16.msra.mxu0 %v3117
    %4108 = vmatprep.mubr.bf16.mxu0 %v803
    %4109 = vmatmul.mubr.bf16.gmra.mrb[0].mxu0 %v801
    %v4110 = vpop.f32.mrb[0].mxu0
    %v4111 = vadd.f32 %v4070, %v4110
    %v4112 = vpop.f32.mrb[0].mxu0
    %v4113 = vadd.f32 %v4072, %v4112
    %v4114 = vpop.f32.mrb[0].mxu0
    %v4115 = vpop.f32.mrb[0].mxu0
    %4116 = vdwg.mxu0
    %4117 = vmatprep.subr.bf16.mxu0 %v3122
    %4118 = vmatpush1.bf16.msra.mxu0 %v3121
    %4119 = vmatprep.subr.bf16.mxu0 %v3126
    %4120 = vmatpush1.bf16.msra.mxu0 %v3125
    %4121 = vmatprep.subr.bf16.mxu0 %v3130
    %4122 = vmatpush1.bf16.msra.mxu0 %v3129
    %4123 = vmatprep.subr.bf16.mxu0 %v3134
    %4124 = vmatpush1.bf16.msra.mxu0 %v3133
    %4125 = vmatprep.subr.bf16.mxu0 %v3138
    %4126 = vmatpush1.bf16.msra.mxu0 %v3137
    %4127 = vmatprep.subr.bf16.mxu0 %v3142
    %4128 = vmatpush1.bf16.msra.mxu0 %v3141
    %4129 = vmatprep.subr.bf16.mxu0 %v3146
    %4130 = vmatpush1.bf16.msra.mxu0 %v3145
    %4131 = vmatprep.subr.bf16.mxu0 %v3150
    %4132 = vmatpush1.bf16.msra.mxu0 %v3149
    %4133 = vmatprep.subr.bf16.mxu0 %v3154
    %4134 = vmatpush1.bf16.msra.mxu0 %v3153
    %4135 = vmatprep.subr.bf16.mxu0 %v3158
    %4136 = vmatpush1.bf16.msra.mxu0 %v3157
    %4137 = vmatprep.subr.bf16.mxu0 %v3162
    %4138 = vmatpush1.bf16.msra.mxu0 %v3161
    %4139 = vmatprep.subr.bf16.mxu0 %v3166
    %4140 = vmatpush1.bf16.msra.mxu0 %v3165
    %4141 = vmatprep.subr.bf16.mxu0 %v3170
    %4142 = vmatpush1.bf16.msra.mxu0 %v3169
    %4143 = vmatprep.subr.bf16.mxu0 %v3174
    %4144 = vmatpush1.bf16.msra.mxu0 %v3173
    %4145 = vmatprep.subr.bf16.mxu0 %v3178
    %4146 = vmatpush1.bf16.msra.mxu0 %v3177
    %4147 = vmatprep.subr.bf16.mxu0 %v3182
    %4148 = vmatpush1.bf16.msra.mxu0 %v3181
    %4149 = vmatprep.mubr.bf16.mxu0 %v825
    %4150 = vmatmul.mubr.bf16.gmra.mrb[0].mxu0 %v818
    %v4151 = vpop.f32.mrb[0].mxu0
    %v4152 = vadd.f32 %v4111, %v4151
    %v4153 = vpop.f32.mrb[0].mxu0
    %v4154 = vadd.f32 %v4113, %v4153
    %v4155 = vpop.f32.mrb[0].mxu0
    %v4156 = vpop.f32.mrb[0].mxu0
    %4157 = vdwg.mxu0
    %4158 = vmatprep.subr.bf16.mxu0 %v3186
    %4159 = vmatpush1.bf16.msra.mxu0 %v3185
    %4160 = vmatprep.subr.bf16.mxu0 %v3190
    %4161 = vmatpush1.bf16.msra.mxu0 %v3189
    %4162 = vmatprep.subr.bf16.mxu0 %v3194
    %4163 = vmatpush1.bf16.msra.mxu0 %v3193
    %4164 = vmatprep.subr.bf16.mxu0 0
    %4165 = vmatpush1.bf16.msra.mxu0 0
    %4166 = vmatprep.subr.bf16.mxu0 0
    %4167 = vmatpush1.bf16.msra.mxu0 0
    %4168 = vmatprep.subr.bf16.mxu0 0
    %4169 = vmatpush1.bf16.msra.mxu0 0
    %4170 = vmatprep.subr.bf16.mxu0 0
    %4171 = vmatpush1.bf16.msra.mxu0 0
    %4172 = vmatprep.subr.bf16.mxu0 0
    %4173 = vmatpush1.bf16.msra.mxu0 0
    %4174 = vmatprep.subr.bf16.mxu0 0
    %4175 = vmatpush1.bf16.msra.mxu0 0
    %4176 = vmatprep.subr.bf16.mxu0 0
    %4177 = vmatpush1.bf16.msra.mxu0 0
    %4178 = vmatprep.subr.bf16.mxu0 0
    %4179 = vmatpush1.bf16.msra.mxu0 0
    %4180 = vmatprep.subr.bf16.mxu0 0
    %4181 = vmatpush1.bf16.msra.mxu0 0
    %4182 = vmatprep.subr.bf16.mxu0 0
    %4183 = vmatpush1.bf16.msra.mxu0 0
    %4184 = vmatprep.subr.bf16.mxu0 0
    %4185 = vmatpush1.bf16.msra.mxu0 0
    %4186 = vmatprep.subr.bf16.mxu0 0
    %4187 = vmatpush1.bf16.msra.mxu0 0
    %4188 = vmatprep.subr.bf16.mxu0 0
    %4189 = vmatpush1.bf16.msra.mxu0 0
    %4190 = vmatprep.mubr.bf16.mxu0 0
    %4191 = vmatmul.mubr.bf16.gmra.mrb[0].mxu0 %v3787
    %v4192 = vpop.f32.mrb[0].mxu0
    %v4193 = vadd.f32 %v4152, %v4192
    %v4194 = vpop.f32.mrb[0].mxu0
    %v4195 = vadd.f32 %v4154, %v4194
    %v4196 = vpop.f32.mrb[0].mxu0
    %v4197 = vpop.f32.mrb[0].mxu0
    %4198 = vdwg.mxu0
    %4199 = vmatprep.subr.bf16.mxu0 %v2612
    %4200 = vmatpush1.bf16.msra.mxu0 %v2611
    %4201 = vmatprep.subr.bf16.mxu0 %v2616
    %4202 = vmatpush1.bf16.msra.mxu0 %v2615
    %4203 = vmatprep.subr.bf16.mxu0 %v2620
    %4204 = vmatpush1.bf16.msra.mxu0 %v2619
    %4205 = vmatprep.subr.bf16.mxu0 %v2624
    %4206 = vmatpush1.bf16.msra.mxu0 %v2623
    %4207 = vmatprep.subr.bf16.mxu0 %v2628
    %4208 = vmatpush1.bf16.msra.mxu0 %v2627
    %4209 = vmatprep.subr.bf16.mxu0 %v2632
    %4210 = vmatpush1.bf16.msra.mxu0 %v2631
    %4211 = vmatprep.subr.bf16.mxu0 %v2636
    %4212 = vmatpush1.bf16.msra.mxu0 %v2635
    %4213 = vmatprep.subr.bf16.mxu0 %v2640
    %4214 = vmatpush1.bf16.msra.mxu0 %v2639
    %4215 = vmatprep.subr.bf16.mxu0 %v2644
    %4216 = vmatpush1.bf16.msra.mxu0 %v2643
    %4217 = vmatprep.subr.bf16.mxu0 %v2648
    %4218 = vmatpush1.bf16.msra.mxu0 %v2647
    %4219 = vmatprep.subr.bf16.mxu0 %v2652
    %4220 = vmatpush1.bf16.msra.mxu0 %v2651
    %4221 = vmatprep.subr.bf16.mxu0 %v2656
    %4222 = vmatpush1.bf16.msra.mxu0 %v2655
    %4223 = vmatprep.subr.bf16.mxu0 %v2660
    %4224 = vmatpush1.bf16.msra.mxu0 %v2659
    %4225 = vmatprep.subr.bf16.mxu0 %v2664
    %4226 = vmatpush1.bf16.msra.mxu0 %v2663
    %4227 = vmatprep.subr.bf16.mxu0 %v2668
    %4228 = vmatpush1.bf16.msra.mxu0 %v2667
    %4229 = vmatprep.subr.bf16.mxu0 %v2672
    %4230 = vmatpush1.bf16.msra.mxu0 %v2671
    %4231 = vmatprep.mubr.bf16.mxu0 %v743
    %4232 = vmatmul.mubr.bf16.gmra.mrb[0].mxu0 %v729
    %v4233 = vpop.f32.mrb[0].mxu0
    %v4234 = vadd.f32 %v694, %v4233
    %v4235 = vpop.f32.mrb[0].mxu0
    %v4236 = vadd.f32 %v698, %v4235
    %v4237 = vpop.f32.mrb[0].mxu0
    %v4238 = vpop.f32.mrb[0].mxu0
    %4239 = vdwg.mxu0
    %4240 = vmatprep.subr.bf16.mxu0 %v2676
    %4241 = vmatpush1.bf16.msra.mxu0 %v2675
    %4242 = vmatprep.subr.bf16.mxu0 %v2680
    %4243 = vmatpush1.bf16.msra.mxu0 %v2679
    %4244 = vmatprep.subr.bf16.mxu0 %v2684
    %4245 = vmatpush1.bf16.msra.mxu0 %v2683
    %4246 = vmatprep.subr.bf16.mxu0 %v2688
    %4247 = vmatpush1.bf16.msra.mxu0 %v2687
    %4248 = vmatprep.subr.bf16.mxu0 %v2692
    %4249 = vmatpush1.bf16.msra.mxu0 %v2691
    %4250 = vmatprep.subr.bf16.mxu0 %v2696
    %4251 = vmatpush1.bf16.msra.mxu0 %v2695
    %4252 = vmatprep.subr.bf16.mxu0 %v2700
    %4253 = vmatpush1.bf16.msra.mxu0 %v2699
    %4254 = vmatprep.subr.bf16.mxu0 %v2704
    %4255 = vmatpush1.bf16.msra.mxu0 %v2703
    %4256 = vmatprep.subr.bf16.mxu0 %v2708
    %4257 = vmatpush1.bf16.msra.mxu0 %v2707
    %4258 = vmatprep.subr.bf16.mxu0 %v2712
    %4259 = vmatpush1.bf16.msra.mxu0 %v2711
    %4260 = vmatprep.subr.bf16.mxu0 %v2716
    %4261 = vmatpush1.bf16.msra.mxu0 %v2715
    %4262 = vmatprep.subr.bf16.mxu0 %v2720
    %4263 = vmatpush1.bf16.msra.mxu0 %v2719
    %4264 = vmatprep.subr.bf16.mxu0 %v2724
    %4265 = vmatpush1.bf16.msra.mxu0 %v2723
    %4266 = vmatprep.subr.bf16.mxu0 %v2728
    %4267 = vmatpush1.bf16.msra.mxu0 %v2727
    %4268 = vmatprep.subr.bf16.mxu0 %v2732
    %4269 = vmatpush1.bf16.msra.mxu0 %v2731
    %4270 = vmatprep.subr.bf16.mxu0 %v2736
    %4271 = vmatpush1.bf16.msra.mxu0 %v2735
    %4272 = vmatprep.mubr.bf16.mxu0 %v753
    %4273 = vmatmul.mubr.bf16.gmra.mrb[0].mxu0 %v751
    %v4274 = vpop.f32.mrb[0].mxu0
    %v4275 = vadd.f32 %v4234, %v4274
    %v4276 = vpop.f32.mrb[0].mxu0
    %v4277 = vadd.f32 %v4236, %v4276
    %v4278 = vpop.f32.mrb[0].mxu0
    %v4279 = vpop.f32.mrb[0].mxu0
    %4280 = vdwg.mxu0
    %4281 = vmatprep.subr.bf16.mxu0 %v2740
    %4282 = vmatpush1.bf16.msra.mxu0 %v2739
    %4283 = vmatprep.subr.bf16.mxu0 %v2744
    %4284 = vmatpush1.bf16.msra.mxu0 %v2743
    %4285 = vmatprep.subr.bf16.mxu0 %v2748
    %4286 = vmatpush1.bf16.msra.mxu0 %v2747
    %4287 = vmatprep.subr.bf16.mxu0 %v2752
    %4288 = vmatpush1.bf16.msra.mxu0 %v2751
    %4289 = vmatprep.subr.bf16.mxu0 %v2756
    %4290 = vmatpush1.bf16.msra.mxu0 %v2755
    %4291 = vmatprep.subr.bf16.mxu0 %v2760
    %4292 = vmatpush1.bf16.msra.mxu0 %v2759
    %4293 = vmatprep.subr.bf16.mxu0 %v2764
    %4294 = vmatpush1.bf16.msra.mxu0 %v2763
    %4295 = vmatprep.subr.bf16.mxu0 %v2768
    %4296 = vmatpush1.bf16.msra.mxu0 %v2767
    %4297 = vmatprep.subr.bf16.mxu0 %v2772
    %4298 = vmatpush1.bf16.msra.mxu0 %v2771
    %4299 = vmatprep.subr.bf16.mxu0 %v2776
    %4300 = vmatpush1.bf16.msra.mxu0 %v2775
    %4301 = vmatprep.subr.bf16.mxu0 %v2780
    %4302 = vmatpush1.bf16.msra.mxu0 %v2779
    %4303 = vmatprep.subr.bf16.mxu0 %v2784
    %4304 = vmatpush1.bf16.msra.mxu0 %v2783
    %4305 = vmatprep.subr.bf16.mxu0 %v2788
    %4306 = vmatpush1.bf16.msra.mxu0 %v2787
    %4307 = vmatprep.subr.bf16.mxu0 %v2792
    %4308 = vmatpush1.bf16.msra.mxu0 %v2791
    %4309 = vmatprep.subr.bf16.mxu0 %v2796
    %4310 = vmatpush1.bf16.msra.mxu0 %v2795
    %4311 = vmatprep.subr.bf16.mxu0 %v2800
    %4312 = vmatpush1.bf16.msra.mxu0 %v2799
    %4313 = vmatprep.mubr.bf16.mxu0 %v750
    %4314 = vmatmul.mubr.bf16.gmra.mrb[0].mxu0 %v736
    %v4315 = vpop.f32.mrb[0].mxu0
    %v4316 = vadd.f32 %v4275, %v4315
    %v4317 = vpop.f32.mrb[0].mxu0
    %v4318 = vadd.f32 %v4277, %v4317
    %v4319 = vpop.f32.mrb[0].mxu0
    %v4320 = vpop.f32.mrb[0].mxu0
    %4321 = vdwg.mxu0
    %4322 = vmatprep.subr.bf16.mxu0 %v2804
    %4323 = vmatpush1.bf16.msra.mxu0 %v2803
    %4324 = vmatprep.subr.bf16.mxu0 %v2808
    %4325 = vmatpush1.bf16.msra.mxu0 %v2807
    %4326 = vmatprep.subr.bf16.mxu0 %v2812
    %4327 = vmatpush1.bf16.msra.mxu0 %v2811
    %4328 = vmatprep.subr.bf16.mxu0 %v2816
    %4329 = vmatpush1.bf16.msra.mxu0 %v2815
    %4330 = vmatprep.subr.bf16.mxu0 %v2820
    %4331 = vmatpush1.bf16.msra.mxu0 %v2819
    %4332 = vmatprep.subr.bf16.mxu0 %v2824
    %4333 = vmatpush1.bf16.msra.mxu0 %v2823
    %4334 = vmatprep.subr.bf16.mxu0 %v2828
    %4335 = vmatpush1.bf16.msra.mxu0 %v2827
    %4336 = vmatprep.subr.bf16.mxu0 %v2832
    %4337 = vmatpush1.bf16.msra.mxu0 %v2831
    %4338 = vmatprep.subr.bf16.mxu0 %v2836
    %4339 = vmatpush1.bf16.msra.mxu0 %v2835
    %4340 = vmatprep.subr.bf16.mxu0 %v2840
    %4341 = vmatpush1.bf16.msra.mxu0 %v2839
    %4342 = vmatprep.subr.bf16.mxu0 %v2844
    %4343 = vmatpush1.bf16.msra.mxu0 %v2843
    %4344 = vmatprep.subr.bf16.mxu0 %v2848
    %4345 = vmatpush1.bf16.msra.mxu0 %v2847
    %4346 = vmatprep.subr.bf16.mxu0 %v2852
    %4347 = vmatpush1.bf16.msra.mxu0 %v2851
    %4348 = vmatprep.subr.bf16.mxu0 %v2856
    %4349 = vmatpush1.bf16.msra.mxu0 %v2855
    %4350 = vmatprep.subr.bf16.mxu0 %v2860
    %4351 = vmatpush1.bf16.msra.mxu0 %v2859
    %4352 = vmatprep.subr.bf16.mxu0 %v2864
    %4353 = vmatpush1.bf16.msra.mxu0 %v2863
    %4354 = vmatprep.mubr.bf16.mxu0 %v754
    %4355 = vmatmul.mubr.bf16.gmra.mrb[0].mxu0 %v752
    %v4356 = vpop.f32.mrb[0].mxu0
    %v4357 = vadd.f32 %v4316, %v4356
    %v4358 = vpop.f32.mrb[0].mxu0
    %v4359 = vadd.f32 %v4318, %v4358
    %v4360 = vpop.f32.mrb[0].mxu0
    %v4361 = vpop.f32.mrb[0].mxu0
    %4362 = vdwg.mxu0
    %4363 = vmatprep.subr.bf16.mxu0 %v2868
    %4364 = vmatpush1.bf16.msra.mxu0 %v2867
    %4365 = vmatprep.subr.bf16.mxu0 %v2872
    %4366 = vmatpush1.bf16.msra.mxu0 %v2871
    %4367 = vmatprep.subr.bf16.mxu0 %v2876
    %4368 = vmatpush1.bf16.msra.mxu0 %v2875
    %4369 = vmatprep.subr.bf16.mxu0 %v2880
    %4370 = vmatpush1.bf16.msra.mxu0 %v2879
    %4371 = vmatprep.subr.bf16.mxu0 %v2884
    %4372 = vmatpush1.bf16.msra.mxu0 %v2883
    %4373 = vmatprep.subr.bf16.mxu0 %v2888
    %4374 = vmatpush1.bf16.msra.mxu0 %v2887
    %4375 = vmatprep.subr.bf16.mxu0 %v2892
    %4376 = vmatpush1.bf16.msra.mxu0 %v2891
    %4377 = vmatprep.subr.bf16.mxu0 %v2896
    %4378 = vmatpush1.bf16.msra.mxu0 %v2895
    %4379 = vmatprep.subr.bf16.mxu0 %v2900
    %4380 = vmatpush1.bf16.msra.mxu0 %v2899
    %4381 = vmatprep.subr.bf16.mxu0 %v2904
    %4382 = vmatpush1.bf16.msra.mxu0 %v2903
    %4383 = vmatprep.subr.bf16.mxu0 %v2908
    %4384 = vmatpush1.bf16.msra.mxu0 %v2907
    %4385 = vmatprep.subr.bf16.mxu0 %v2912
    %4386 = vmatpush1.bf16.msra.mxu0 %v2911
    %4387 = vmatprep.subr.bf16.mxu0 %v2916
    %4388 = vmatpush1.bf16.msra.mxu0 %v2915
    %4389 = vmatprep.subr.bf16.mxu0 %v2920
    %4390 = vmatpush1.bf16.msra.mxu0 %v2919
    %4391 = vmatprep.subr.bf16.mxu0 %v2924
    %4392 = vmatpush1.bf16.msra.mxu0 %v2923
    %4393 = vmatprep.subr.bf16.mxu0 %v2928
    %4394 = vmatpush1.bf16.msra.mxu0 %v2927
    %4395 = vmatprep.mubr.bf16.mxu0 %v792
    %4396 = vmatmul.mubr.bf16.gmra.mrb[0].mxu0 %v778
    %v4397 = vpop.f32.mrb[0].mxu0
    %v4398 = vadd.f32 %v4357, %v4397
    %v4399 = vpop.f32.mrb[0].mxu0
    %v4400 = vadd.f32 %v4359, %v4399
    %v4401 = vpop.f32.mrb[0].mxu0
    %v4402 = vpop.f32.mrb[0].mxu0
    %4403 = vdwg.mxu0
    %4404 = vmatprep.subr.bf16.mxu0 %v2932
    %4405 = vmatpush1.bf16.msra.mxu0 %v2931
    %4406 = vmatprep.subr.bf16.mxu0 %v2936
    %4407 = vmatpush1.bf16.msra.mxu0 %v2935
    %4408 = vmatprep.subr.bf16.mxu0 %v2940
    %4409 = vmatpush1.bf16.msra.mxu0 %v2939
    %4410 = vmatprep.subr.bf16.mxu0 %v2944
    %4411 = vmatpush1.bf16.msra.mxu0 %v2943
    %4412 = vmatprep.subr.bf16.mxu0 %v2948
    %4413 = vmatpush1.bf16.msra.mxu0 %v2947
    %4414 = vmatprep.subr.bf16.mxu0 %v2952
    %4415 = vmatpush1.bf16.msra.mxu0 %v2951
    %4416 = vmatprep.subr.bf16.mxu0 %v2956
    %4417 = vmatpush1.bf16.msra.mxu0 %v2955
    %4418 = vmatprep.subr.bf16.mxu0 %v2960
    %4419 = vmatpush1.bf16.msra.mxu0 %v2959
    %4420 = vmatprep.subr.bf16.mxu0 %v2964
    %4421 = vmatpush1.bf16.msra.mxu0 %v2963
    %4422 = vmatprep.subr.bf16.mxu0 %v2968
    %4423 = vmatpush1.bf16.msra.mxu0 %v2967
    %4424 = vmatprep.subr.bf16.mxu0 %v2972
    %4425 = vmatpush1.bf16.msra.mxu0 %v2971
    %4426 = vmatprep.subr.bf16.mxu0 %v2976
    %4427 = vmatpush1.bf16.msra.mxu0 %v2975
    %4428 = vmatprep.subr.bf16.mxu0 %v2980
    %4429 = vmatpush1.bf16.msra.mxu0 %v2979
    %4430 = vmatprep.subr.bf16.mxu0 %v2984
    %4431 = vmatpush1.bf16.msra.mxu0 %v2983
    %4432 = vmatprep.subr.bf16.mxu0 %v2988
    %4433 = vmatpush1.bf16.msra.mxu0 %v2987
    %4434 = vmatprep.subr.bf16.mxu0 %v2992
    %4435 = vmatpush1.bf16.msra.mxu0 %v2991
    %4436 = vmatprep.mubr.bf16.mxu0 %v802
    %4437 = vmatmul.mubr.bf16.gmra.mrb[0].mxu0 %v800
    %v4438 = vpop.f32.mrb[0].mxu0
    %v4439 = vadd.f32 %v4398, %v4438
    %v4440 = vpop.f32.mrb[0].mxu0
    %v4441 = vadd.f32 %v4400, %v4440
    %v4442 = vpop.f32.mrb[0].mxu0
    %v4443 = vpop.f32.mrb[0].mxu0
    %4444 = vdwg.mxu0
    %4445 = vmatprep.subr.bf16.mxu0 %v2996
    %4446 = vmatpush1.bf16.msra.mxu0 %v2995
    %4447 = vmatprep.subr.bf16.mxu0 %v3000
    %4448 = vmatpush1.bf16.msra.mxu0 %v2999
    %4449 = vmatprep.subr.bf16.mxu0 %v3004
    %4450 = vmatpush1.bf16.msra.mxu0 %v3003
    %4451 = vmatprep.subr.bf16.mxu0 %v3008
    %4452 = vmatpush1.bf16.msra.mxu0 %v3007
    %4453 = vmatprep.subr.bf16.mxu0 %v3012
    %4454 = vmatpush1.bf16.msra.mxu0 %v3011
    %4455 = vmatprep.subr.bf16.mxu0 %v3016
    %4456 = vmatpush1.bf16.msra.mxu0 %v3015
    %4457 = vmatprep.subr.bf16.mxu0 %v3020
    %4458 = vmatpush1.bf16.msra.mxu0 %v3019
    %4459 = vmatprep.subr.bf16.mxu0 %v3024
    %4460 = vmatpush1.bf16.msra.mxu0 %v3023
    %4461 = vmatprep.subr.bf16.mxu0 %v3028
    %4462 = vmatpush1.bf16.msra.mxu0 %v3027
    %4463 = vmatprep.subr.bf16.mxu0 %v3032
    %4464 = vmatpush1.bf16.msra.mxu0 %v3031
    %4465 = vmatprep.subr.bf16.mxu0 %v3036
    %4466 = vmatpush1.bf16.msra.mxu0 %v3035
    %4467 = vmatprep.subr.bf16.mxu0 %v3040
    %4468 = vmatpush1.bf16.msra.mxu0 %v3039
    %4469 = vmatprep.subr.bf16.mxu0 %v3044
    %4470 = vmatpush1.bf16.msra.mxu0 %v3043
    %4471 = vmatprep.subr.bf16.mxu0 %v3048
    %4472 = vmatpush1.bf16.msra.mxu0 %v3047
    %4473 = vmatprep.subr.bf16.mxu0 %v3052
    %4474 = vmatpush1.bf16.msra.mxu0 %v3051
    %4475 = vmatprep.subr.bf16.mxu0 %v3056
    %4476 = vmatpush1.bf16.msra.mxu0 %v3055
    %4477 = vmatprep.mubr.bf16.mxu0 %v799
    %4478 = vmatmul.mubr.bf16.gmra.mrb[0].mxu0 %v785
    %v4479 = vpop.f32.mrb[0].mxu0
    %v4480 = vadd.f32 %v4439, %v4479
    %v4481 = vpop.f32.mrb[0].mxu0
    %v4482 = vadd.f32 %v4441, %v4481
    %v4483 = vpop.f32.mrb[0].mxu0
    %v4484 = vpop.f32.mrb[0].mxu0
    %4485 = vdwg.mxu0
    %4486 = vmatprep.subr.bf16.mxu0 %v3060
    %4487 = vmatpush1.bf16.msra.mxu0 %v3059
    %4488 = vmatprep.subr.bf16.mxu0 %v3064
    %4489 = vmatpush1.bf16.msra.mxu0 %v3063
    %4490 = vmatprep.subr.bf16.mxu0 %v3068
    %4491 = vmatpush1.bf16.msra.mxu0 %v3067
    %4492 = vmatprep.subr.bf16.mxu0 %v3072
    %4493 = vmatpush1.bf16.msra.mxu0 %v3071
    %4494 = vmatprep.subr.bf16.mxu0 %v3076
    %4495 = vmatpush1.bf16.msra.mxu0 %v3075
    %4496 = vmatprep.subr.bf16.mxu0 %v3080
    %4497 = vmatpush1.bf16.msra.mxu0 %v3079
    %4498 = vmatprep.subr.bf16.mxu0 %v3084
    %4499 = vmatpush1.bf16.msra.mxu0 %v3083
    %4500 = vmatprep.subr.bf16.mxu0 %v3088
    %4501 = vmatpush1.bf16.msra.mxu0 %v3087
    %4502 = vmatprep.subr.bf16.mxu0 %v3092
    %4503 = vmatpush1.bf16.msra.mxu0 %v3091
    %4504 = vmatprep.subr.bf16.mxu0 %v3096
    %4505 = vmatpush1.bf16.msra.mxu0 %v3095
    %4506 = vmatprep.subr.bf16.mxu0 %v3100
    %4507 = vmatpush1.bf16.msra.mxu0 %v3099
    %4508 = vmatprep.subr.bf16.mxu0 %v3104
    %4509 = vmatpush1.bf16.msra.mxu0 %v3103
    %4510 = vmatprep.subr.bf16.mxu0 %v3108
    %4511 = vmatpush1.bf16.msra.mxu0 %v3107
    %4512 = vmatprep.subr.bf16.mxu0 %v3112
    %4513 = vmatpush1.bf16.msra.mxu0 %v3111
    %4514 = vmatprep.subr.bf16.mxu0 %v3116
    %4515 = vmatpush1.bf16.msra.mxu0 %v3115
    %4516 = vmatprep.subr.bf16.mxu0 %v3120
    %4517 = vmatpush1.bf16.msra.mxu0 %v3119
    %4518 = vmatprep.mubr.bf16.mxu0 %v803
    %4519 = vmatmul.mubr.bf16.gmra.mrb[0].mxu0 %v801
    %v4520 = vpop.f32.mrb[0].mxu0
    %v4521 = vadd.f32 %v4480, %v4520
    %v4522 = vpop.f32.mrb[0].mxu0
    %v4523 = vadd.f32 %v4482, %v4522
    %v4524 = vpop.f32.mrb[0].mxu0
    %v4525 = vpop.f32.mrb[0].mxu0
    %4526 = vdwg.mxu0
    %4527 = vmatprep.subr.bf16.mxu0 %v3124
    %4528 = vmatpush1.bf16.msra.mxu0 %v3123
    %4529 = vmatprep.subr.bf16.mxu0 %v3128
    %4530 = vmatpush1.bf16.msra.mxu0 %v3127
    %4531 = vmatprep.subr.bf16.mxu0 %v3132
    %4532 = vmatpush1.bf16.msra.mxu0 %v3131
    %4533 = vmatprep.subr.bf16.mxu0 %v3136
    %4534 = vmatpush1.bf16.msra.mxu0 %v3135
    %4535 = vmatprep.subr.bf16.mxu0 %v3140
    %4536 = vmatpush1.bf16.msra.mxu0 %v3139
    %4537 = vmatprep.subr.bf16.mxu0 %v3144
    %4538 = vmatpush1.bf16.msra.mxu0 %v3143
    %4539 = vmatprep.subr.bf16.mxu0 %v3148
    %4540 = vmatpush1.bf16.msra.mxu0 %v3147
    %4541 = vmatprep.subr.bf16.mxu0 %v3152
    %4542 = vmatpush1.bf16.msra.mxu0 %v3151
    %4543 = vmatprep.subr.bf16.mxu0 %v3156
    %4544 = vmatpush1.bf16.msra.mxu0 %v3155
    %4545 = vmatprep.subr.bf16.mxu0 %v3160
    %4546 = vmatpush1.bf16.msra.mxu0 %v3159
    %4547 = vmatprep.subr.bf16.mxu0 %v3164
    %4548 = vmatpush1.bf16.msra.mxu0 %v3163
    %4549 = vmatprep.subr.bf16.mxu0 %v3168
    %4550 = vmatpush1.bf16.msra.mxu0 %v3167
    %4551 = vmatprep.subr.bf16.mxu0 %v3172
    %4552 = vmatpush1.bf16.msra.mxu0 %v3171
    %4553 = vmatprep.subr.bf16.mxu0 %v3176
    %4554 = vmatpush1.bf16.msra.mxu0 %v3175
    %4555 = vmatprep.subr.bf16.mxu0 %v3180
    %4556 = vmatpush1.bf16.msra.mxu0 %v3179
    %4557 = vmatprep.subr.bf16.mxu0 %v3184
    %4558 = vmatpush1.bf16.msra.mxu0 %v3183
    %4559 = vmatprep.mubr.bf16.mxu0 %v825
    %4560 = vmatmul.mubr.bf16.gmra.mrb[0].mxu0 %v818
    %v4561 = vpop.f32.mrb[0].mxu0
    %v4562 = vadd.f32 %v4521, %v4561
    %v4563 = vpop.f32.mrb[0].mxu0
    %v4564 = vadd.f32 %v4523, %v4563
    %v4565 = vpop.f32.mrb[0].mxu0
    %v4566 = vpop.f32.mrb[0].mxu0
    %4567 = vdwg.mxu0
    %4568 = vmatprep.subr.bf16.mxu0 %v3188
    %4569 = vmatpush1.bf16.msra.mxu0 %v3187
    %4570 = vmatprep.subr.bf16.mxu0 %v3192
    %4571 = vmatpush1.bf16.msra.mxu0 %v3191
    %4572 = vmatprep.subr.bf16.mxu0 %v3196
    %4573 = vmatpush1.bf16.msra.mxu0 %v3195
    %4574 = vmatprep.subr.bf16.mxu0 0
    %4575 = vmatpush1.bf16.msra.mxu0 0
    %4576 = vmatprep.subr.bf16.mxu0 0
    %4577 = vmatpush1.bf16.msra.mxu0 0
    %4578 = vmatprep.subr.bf16.mxu0 0
    %4579 = vmatpush1.bf16.msra.mxu0 0
    %4580 = vmatprep.subr.bf16.mxu0 0
    %4581 = vmatpush1.bf16.msra.mxu0 0
    %4582 = vmatprep.subr.bf16.mxu0 0
    %4583 = vmatpush1.bf16.msra.mxu0 0
    %4584 = vmatprep.subr.bf16.mxu0 0
    %4585 = vmatpush1.bf16.msra.mxu0 0
    %4586 = vmatprep.subr.bf16.mxu0 0
    %4587 = vmatpush1.bf16.msra.mxu0 0
    %4588 = vmatprep.subr.bf16.mxu0 0
    %4589 = vmatpush1.bf16.msra.mxu0 0
    %4590 = vmatprep.subr.bf16.mxu0 0
    %4591 = vmatpush1.bf16.msra.mxu0 0
    %4592 = vmatprep.subr.bf16.mxu0 0
    %4593 = vmatpush1.bf16.msra.mxu0 0
    %4594 = vmatprep.subr.bf16.mxu0 0
    %4595 = vmatpush1.bf16.msra.mxu0 0
    %4596 = vmatprep.subr.bf16.mxu0 0
    %4597 = vmatpush1.bf16.msra.mxu0 0
    %4598 = vmatprep.subr.bf16.mxu0 0
    %4599 = vmatpush1.bf16.msra.mxu0 0
    %4600 = vmatprep.mubr.bf16.mxu0 0
    %4601 = vmatmul.mubr.bf16.gmra.mrb[0].mxu0 %v3787
    %v4602 = vpop.f32.mrb[0].mxu0
    %v4603 = vadd.f32 %v4562, %v4602
    %v4604 = vpop.f32.mrb[0].mxu0
    %v4605 = vadd.f32 %v4564, %v4604
    %v4606 = vpop.f32.mrb[0].mxu0
    %v4607 = vpop.f32.mrb[0].mxu0
    %4608 = vdwg.mxu0
    %v4609 = vmax.f32 %v4193, 0.0
    %v4610 = vmax.f32 %v4195, 0.0
    %v4611 = vmax.f32 %v4603, 0.0
    %v4612 = vmax.f32 %v4605, 0.0
    %v4613 = vpack.c.bf16 %v4609, %v4609
    %v4614 = vpack.c.bf16 %v4610, %v4610
    %v4615 = vpack.c.bf16 %v4611, %v4611
    %v4616 = vpack.c.bf16 %v4612, %v4612
    %v4617 = vld [vmem:[#allocation7] sm:$0xff]
    %v4618 = vld [vmem:[#allocation7 + $0x8] sm:$0xff]
    %v4619 = vld [vmem:[#allocation7 + $0x10] sm:$0xff]
    %v4620 = vld [vmem:[#allocation7 + $0x18] sm:$0xff]
    %v4621 = vld [vmem:[#allocation7 + $0x20] sm:$0xff]
    %v4622 = vld [vmem:[#allocation7 + $0x28] sm:$0xff]
    %v4623 = vld [vmem:[#allocation7 + $0x30] sm:$0xff]
    %v4624 = vld [vmem:[#allocation7 + $0x38] sm:$0xff]
    %v4625 = vld [vmem:[#allocation7 + $0x40] sm:$0xff]
    %v4626 = vld [vmem:[#allocation7 + $0x48] sm:$0xff]
    %v4627 = vld [vmem:[#allocation7 + $0x50] sm:$0xff]
    %v4628 = vld [vmem:[#allocation7 + $0x58] sm:$0xff]
    %v4629 = vld [vmem:[#allocation7 + $0x60] sm:$0xff]
    %v4630 = vld [vmem:[#allocation7 + $0x68] sm:$0xff]
    %v4631 = vld [vmem:[#allocation7 + $0x70] sm:$0xff]
    %v4632 = vld [vmem:[#allocation7 + $0x78] sm:$0xff]
    %v4633 = vld [vmem:[#allocation7 + $0x80] sm:$0xff]
    %v4634 = vld [vmem:[#allocation7 + $0x88] sm:$0xff]
    %v4635 = vld [vmem:[#allocation7 + $0x90] sm:$0xff]
    %v4636 = vld [vmem:[#allocation7 + $0x98] sm:$0xff]
    %v4637 = vld [vmem:[#allocation7 + $0xa0] sm:$0xff]
    %v4638 = vld [vmem:[#allocation7 + $0xa8] sm:$0xff]
    %v4639 = vld [vmem:[#allocation7 + $0xb0] sm:$0xff]
    %v4640 = vld [vmem:[#allocation7 + $0xb8] sm:$0xff]
    %v4641 = vld [vmem:[#allocation7 + $0xc0] sm:$0xff]
    %v4642 = vld [vmem:[#allocation7 + $0xc8] sm:$0xff]
    %v4643 = vld [vmem:[#allocation7 + $0xd0] sm:$0xff]
    %v4644 = vld [vmem:[#allocation7 + $0xd8] sm:$0xff]
    %v4645 = vld [vmem:[#allocation7 + $0xe0] sm:$0xff]
    %v4646 = vld [vmem:[#allocation7 + $0xe8] sm:$0xff]
    %v4647 = vld [vmem:[#allocation7 + $0xf0] sm:$0xff]
    %v4648 = vld [vmem:[#allocation7 + $0xf8] sm:$0xff]
    %v4649 = vld [vmem:[#allocation7 + $0x100] sm:$0xff]
    %v4650 = vld [vmem:[#allocation7 + $0x108] sm:$0xff]
    %v4651 = vld [vmem:[#allocation7 + $0x110] sm:$0xff]
    %v4652 = vld [vmem:[#allocation7 + $0x118] sm:$0xff]
    %v4653 = vld [vmem:[#allocation7 + $0x120] sm:$0xff]
    %v4654 = vld [vmem:[#allocation7 + $0x128] sm:$0xff]
    %v4655 = vld [vmem:[#allocation7 + $0x130] sm:$0xff]
    %v4656 = vld [vmem:[#allocation7 + $0x138] sm:$0xff]
    %v4657 = vld [vmem:[#allocation7 + $0x140] sm:$0xff]
    %v4658 = vld [vmem:[#allocation7 + $0x148] sm:$0xff]
    %v4659 = vld [vmem:[#allocation7 + $0x150] sm:$0xff]
    %v4660 = vld [vmem:[#allocation7 + $0x158] sm:$0xff]
    %v4661 = vld [vmem:[#allocation7 + $0x160] sm:$0xff]
    %v4662 = vld [vmem:[#allocation7 + $0x168] sm:$0xff]
    %v4663 = vld [vmem:[#allocation7 + $0x170] sm:$0xff]
    %v4664 = vld [vmem:[#allocation7 + $0x178] sm:$0xff]
    %v4665 = vld [vmem:[#allocation7 + $0x180] sm:$0xff]
    %v4666 = vld [vmem:[#allocation7 + $0x188] sm:$0xff]
    %v4667 = vld [vmem:[#allocation7 + $0x190] sm:$0xff]
    %v4668 = vld [vmem:[#allocation7 + $0x198] sm:$0xff]
    %v4669 = vld [vmem:[#allocation7 + $0x1a0] sm:$0xff]
    %v4670 = vld [vmem:[#allocation7 + $0x1a8] sm:$0xff]
    %v4671 = vld [vmem:[#allocation7 + $0x1b0] sm:$0xff]
    %v4672 = vld [vmem:[#allocation7 + $0x1b8] sm:$0xff]
    %v4673 = vld [vmem:[#allocation7 + $0x1c0] sm:$0xff]
    %v4674 = vld [vmem:[#allocation7 + $0x1c8] sm:$0xff]
    %v4675 = vld [vmem:[#allocation7 + $0x1d0] sm:$0xff]
    %v4676 = vld [vmem:[#allocation7 + $0x1d8] sm:$0xff]
    %v4677 = vld [vmem:[#allocation7 + $0x1e0] sm:$0xff]
    %v4678 = vld [vmem:[#allocation7 + $0x1e8] sm:$0xff]
    %v4679 = vld [vmem:[#allocation7 + $0x1f0] sm:$0xff]
    %v4680 = vld [vmem:[#allocation7 + $0x1f8] sm:$0xff]
    %v4681 = vld [vmem:[#allocation8] sm:$0x3]
    %v4683 = vlaneseq
    %v4684 = vshrl.u32 %v4683, 7
    %v4685 = vsub.s32 0, %v4684
    %v4686 = vrot.slane %v4681, %v4685
    %v4687 = vlaneseq
    %v4688 = vshrl.u32 %v4687, 7
    %v4689 = vsub.s32 1, %v4688
    %v4690 = vrot.slane %v4681, %v4689
    %v4757 = vunpack.c.l.b16 %v4617
    %v4758 = vunpack.c.h.b16 %v4617
    %v4759 = vunpack.c.l.b16 %v4618
    %v4760 = vunpack.c.h.b16 %v4618
    %v4761 = vunpack.c.l.b16 %v4619
    %v4762 = vunpack.c.h.b16 %v4619
    %v4763 = vunpack.c.l.b16 %v4620
    %v4764 = vunpack.c.h.b16 %v4620
    %v4765 = vunpack.c.l.b16 %v4621
    %v4766 = vunpack.c.h.b16 %v4621
    %v4767 = vunpack.c.l.b16 %v4622
    %v4768 = vunpack.c.h.b16 %v4622
    %v4769 = vunpack.c.l.b16 %v4623
    %v4770 = vunpack.c.h.b16 %v4623
    %v4771 = vunpack.c.l.b16 %v4624
    %v4772 = vunpack.c.h.b16 %v4624
    %v4773 = vunpack.c.l.b16 %v4625
    %v4774 = vunpack.c.h.b16 %v4625
    %v4775 = vunpack.c.l.b16 %v4626
    %v4776 = vunpack.c.h.b16 %v4626
    %v4777 = vunpack.c.l.b16 %v4627
    %v4778 = vunpack.c.h.b16 %v4627
    %v4779 = vunpack.c.l.b16 %v4628
    %v4780 = vunpack.c.h.b16 %v4628
    %v4781 = vunpack.c.l.b16 %v4629
    %v4782 = vunpack.c.h.b16 %v4629
    %v4783 = vunpack.c.l.b16 %v4630
    %v4784 = vunpack.c.h.b16 %v4630
    %v4785 = vunpack.c.l.b16 %v4631
    %v4786 = vunpack.c.h.b16 %v4631
    %v4787 = vunpack.c.l.b16 %v4632
    %v4788 = vunpack.c.h.b16 %v4632
    %v4789 = vunpack.c.l.b16 %v4633
    %v4790 = vunpack.c.h.b16 %v4633
    %v4791 = vunpack.c.l.b16 %v4634
    %v4792 = vunpack.c.h.b16 %v4634
    %v4793 = vunpack.c.l.b16 %v4635
    %v4794 = vunpack.c.h.b16 %v4635
    %v4795 = vunpack.c.l.b16 %v4636
    %v4796 = vunpack.c.h.b16 %v4636
    %v4797 = vunpack.c.l.b16 %v4637
    %v4798 = vunpack.c.h.b16 %v4637
    %v4799 = vunpack.c.l.b16 %v4638
    %v4800 = vunpack.c.h.b16 %v4638
    %v4801 = vunpack.c.l.b16 %v4639
    %v4802 = vunpack.c.h.b16 %v4639
    %v4803 = vunpack.c.l.b16 %v4640
    %v4804 = vunpack.c.h.b16 %v4640
    %v4805 = vunpack.c.l.b16 %v4641
    %v4806 = vunpack.c.h.b16 %v4641
    %v4807 = vunpack.c.l.b16 %v4642
    %v4808 = vunpack.c.h.b16 %v4642
    %v4809 = vunpack.c.l.b16 %v4643
    %v4810 = vunpack.c.h.b16 %v4643
    %v4811 = vunpack.c.l.b16 %v4644
    %v4812 = vunpack.c.h.b16 %v4644
    %v4813 = vunpack.c.l.b16 %v4645
    %v4814 = vunpack.c.h.b16 %v4645
    %v4815 = vunpack.c.l.b16 %v4646
    %v4816 = vunpack.c.h.b16 %v4646
    %v4817 = vunpack.c.l.b16 %v4647
    %v4818 = vunpack.c.h.b16 %v4647
    %v4819 = vunpack.c.l.b16 %v4648
    %v4820 = vunpack.c.h.b16 %v4648
    %v4821 = vunpack.c.l.b16 %v4649
    %v4822 = vunpack.c.h.b16 %v4649
    %v4823 = vunpack.c.l.b16 %v4650
    %v4824 = vunpack.c.h.b16 %v4650
    %v4825 = vunpack.c.l.b16 %v4651
    %v4826 = vunpack.c.h.b16 %v4651
    %v4827 = vunpack.c.l.b16 %v4652
    %v4828 = vunpack.c.h.b16 %v4652
    %v4829 = vunpack.c.l.b16 %v4653
    %v4830 = vunpack.c.h.b16 %v4653
    %v4831 = vunpack.c.l.b16 %v4654
    %v4832 = vunpack.c.h.b16 %v4654
    %v4833 = vunpack.c.l.b16 %v4655
    %v4834 = vunpack.c.h.b16 %v4655
    %v4835 = vunpack.c.l.b16 %v4656
    %v4836 = vunpack.c.h.b16 %v4656
    %v4837 = vunpack.c.l.b16 %v4657
    %v4838 = vunpack.c.h.b16 %v4657
    %v4839 = vunpack.c.l.b16 %v4658
    %v4840 = vunpack.c.h.b16 %v4658
    %v4841 = vunpack.c.l.b16 %v4659
    %v4842 = vunpack.c.h.b16 %v4659
    %v4843 = vunpack.c.l.b16 %v4660
    %v4844 = vunpack.c.h.b16 %v4660
    %v4845 = vunpack.c.l.b16 %v4661
    %v4846 = vunpack.c.h.b16 %v4661
    %v4847 = vunpack.c.l.b16 %v4662
    %v4848 = vunpack.c.h.b16 %v4662
    %v4849 = vunpack.c.l.b16 %v4663
    %v4850 = vunpack.c.h.b16 %v4663
    %v4851 = vunpack.c.l.b16 %v4664
    %v4852 = vunpack.c.h.b16 %v4664
    %v4853 = vunpack.c.l.b16 %v4665
    %v4854 = vunpack.c.h.b16 %v4665
    %v4855 = vunpack.c.l.b16 %v4666
    %v4856 = vunpack.c.h.b16 %v4666
    %v4857 = vunpack.c.l.b16 %v4667
    %v4858 = vunpack.c.h.b16 %v4667
    %v4859 = vunpack.c.l.b16 %v4668
    %v4860 = vunpack.c.h.b16 %v4668
    %v4861 = vunpack.c.l.b16 %v4669
    %v4862 = vunpack.c.h.b16 %v4669
    %v4863 = vunpack.c.l.b16 %v4670
    %v4864 = vunpack.c.h.b16 %v4670
    %v4865 = vunpack.c.l.b16 %v4671
    %v4866 = vunpack.c.h.b16 %v4671
    %v4867 = vunpack.c.l.b16 %v4672
    %v4868 = vunpack.c.h.b16 %v4672
    %v4869 = vunpack.c.l.b16 %v4673
    %v4870 = vunpack.c.h.b16 %v4673
    %v4871 = vunpack.c.l.b16 %v4674
    %v4872 = vunpack.c.h.b16 %v4674
    %v4873 = vunpack.c.l.b16 %v4675
    %v4874 = vunpack.c.h.b16 %v4675
    %v4875 = vunpack.c.l.b16 %v4676
    %v4876 = vunpack.c.h.b16 %v4676
    %v4877 = vunpack.c.l.b16 %v4677
    %v4878 = vunpack.c.h.b16 %v4677
    %v4879 = vunpack.c.l.b16 %v4678
    %v4880 = vunpack.c.h.b16 %v4678
    %v4881 = vunpack.c.l.b16 %v4679
    %v4882 = vunpack.c.h.b16 %v4679
    %v4883 = vunpack.c.l.b16 %v4680
    %v4884 = vunpack.c.h.b16 %v4680
    %v4885 = vpack.c.b16 %v4759, %v4757
    %v4886 = vpack.c.b16 %v4760, %v4758
    %v4887 = vpack.c.b16 %v4763, %v4761
    %v4888 = vpack.c.b16 %v4764, %v4762
    %v4889 = vpack.c.b16 %v4767, %v4765
    %v4890 = vpack.c.b16 %v4768, %v4766
    %v4891 = vpack.c.b16 %v4771, %v4769
    %v4892 = vpack.c.b16 %v4772, %v4770
    %v4893 = vpack.c.b16 %v4775, %v4773
    %v4894 = vpack.c.b16 %v4776, %v4774
    %v4895 = vpack.c.b16 %v4779, %v4777
    %v4896 = vpack.c.b16 %v4780, %v4778
    %v4897 = vpack.c.b16 %v4783, %v4781
    %v4898 = vpack.c.b16 %v4784, %v4782
    %v4899 = vpack.c.b16 %v4787, %v4785
    %v4900 = vpack.c.b16 %v4788, %v4786
    %v4901 = vpack.c.b16 %v4791, %v4789
    %v4902 = vpack.c.b16 %v4792, %v4790
    %v4903 = vpack.c.b16 %v4795, %v4793
    %v4904 = vpack.c.b16 %v4796, %v4794
    %v4905 = vpack.c.b16 %v4799, %v4797
    %v4906 = vpack.c.b16 %v4800, %v4798
    %v4907 = vpack.c.b16 %v4803, %v4801
    %v4908 = vpack.c.b16 %v4804, %v4802
    %v4909 = vpack.c.b16 %v4807, %v4805
    %v4910 = vpack.c.b16 %v4808, %v4806
    %v4911 = vpack.c.b16 %v4811, %v4809
    %v4912 = vpack.c.b16 %v4812, %v4810
    %v4913 = vpack.c.b16 %v4815, %v4813
    %v4914 = vpack.c.b16 %v4816, %v4814
    %v4915 = vpack.c.b16 %v4819, %v4817
    %v4916 = vpack.c.b16 %v4820, %v4818
    %v4917 = vpack.c.b16 %v4823, %v4821
    %v4918 = vpack.c.b16 %v4824, %v4822
    %v4919 = vpack.c.b16 %v4827, %v4825
    %v4920 = vpack.c.b16 %v4828, %v4826
    %v4921 = vpack.c.b16 %v4831, %v4829
    %v4922 = vpack.c.b16 %v4832, %v4830
    %v4923 = vpack.c.b16 %v4835, %v4833
    %v4924 = vpack.c.b16 %v4836, %v4834
    %v4925 = vpack.c.b16 %v4839, %v4837
    %v4926 = vpack.c.b16 %v4840, %v4838
    %v4927 = vpack.c.b16 %v4843, %v4841
    %v4928 = vpack.c.b16 %v4844, %v4842
    %v4929 = vpack.c.b16 %v4847, %v4845
    %v4930 = vpack.c.b16 %v4848, %v4846
    %v4931 = vpack.c.b16 %v4851, %v4849
    %v4932 = vpack.c.b16 %v4852, %v4850
    %v4933 = vpack.c.b16 %v4855, %v4853
    %v4934 = vpack.c.b16 %v4856, %v4854
    %v4935 = vpack.c.b16 %v4859, %v4857
    %v4936 = vpack.c.b16 %v4860, %v4858
    %v4937 = vpack.c.b16 %v4863, %v4861
    %v4938 = vpack.c.b16 %v4864, %v4862
    %v4939 = vpack.c.b16 %v4867, %v4865
    %v4940 = vpack.c.b16 %v4868, %v4866
    %v4941 = vpack.c.b16 %v4871, %v4869
    %v4942 = vpack.c.b16 %v4872, %v4870
    %v4943 = vpack.c.b16 %v4875, %v4873
    %v4944 = vpack.c.b16 %v4876, %v4874
    %v4945 = vpack.c.b16 %v4879, %v4877
    %v4946 = vpack.c.b16 %v4880, %v4878
    %v4947 = vpack.c.b16 %v4883, %v4881
    %v4948 = vpack.c.b16 %v4884, %v4882
    %5013 = vmatprep.subr.bf16.mxu0 %v4886
    %5014 = vmatpush1.bf16.msra.mxu0 %v4885
    %5015 = vmatprep.subr.bf16.mxu0 %v4888
    %5016 = vmatpush1.bf16.msra.mxu0 %v4887
    %5017 = vmatprep.subr.bf16.mxu0 %v4890
    %5018 = vmatpush1.bf16.msra.mxu0 %v4889
    %5019 = vmatprep.subr.bf16.mxu0 %v4892
    %5020 = vmatpush1.bf16.msra.mxu0 %v4891
    %5021 = vmatprep.subr.bf16.mxu0 %v4894
    %5022 = vmatpush1.bf16.msra.mxu0 %v4893
    %5023 = vmatprep.subr.bf16.mxu0 %v4896
    %5024 = vmatpush1.bf16.msra.mxu0 %v4895
    %5025 = vmatprep.subr.bf16.mxu0 %v4898
    %5026 = vmatpush1.bf16.msra.mxu0 %v4897
    %5027 = vmatprep.subr.bf16.mxu0 %v4900
    %5028 = vmatpush1.bf16.msra.mxu0 %v4899
    %5029 = vmatprep.subr.bf16.mxu0 %v4902
    %5030 = vmatpush1.bf16.msra.mxu0 %v4901
    %5031 = vmatprep.subr.bf16.mxu0 %v4904
    %5032 = vmatpush1.bf16.msra.mxu0 %v4903
    %5033 = vmatprep.subr.bf16.mxu0 %v4906
    %5034 = vmatpush1.bf16.msra.mxu0 %v4905
    %5035 = vmatprep.subr.bf16.mxu0 %v4908
    %5036 = vmatpush1.bf16.msra.mxu0 %v4907
    %5037 = vmatprep.subr.bf16.mxu0 %v4910
    %5038 = vmatpush1.bf16.msra.mxu0 %v4909
    %5039 = vmatprep.subr.bf16.mxu0 %v4912
    %5040 = vmatpush1.bf16.msra.mxu0 %v4911
    %5041 = vmatprep.subr.bf16.mxu0 %v4914
    %5042 = vmatpush1.bf16.msra.mxu0 %v4913
    %5043 = vmatprep.subr.bf16.mxu0 %v4916
    %5044 = vmatpush1.bf16.msra.mxu0 %v4915
    %5045 = vmatprep.mubr.bf16.mxu0 %v4614
    %5046 = vmatmul.mubr.bf16.gmra.mrb[0].mxu0 %v4613
    %v5047 = vpop.f32.mrb[0].mxu0
    %v5048 = vadd.f32 %v4686, %v5047
    %v5049 = vpop.f32.mrb[0].mxu0
    %v5050 = vadd.f32 %v4690, %v5049
    %v5051 = vpop.f32.mrb[0].mxu0
    %v5052 = vpop.f32.mrb[0].mxu0
    %5053 = vdwg.mxu0
    %5054 = vmatprep.subr.bf16.mxu0 %v4918
    %5055 = vmatpush1.bf16.msra.mxu0 %v4917
    %5056 = vmatprep.subr.bf16.mxu0 %v4920
    %5057 = vmatpush1.bf16.msra.mxu0 %v4919
    %5058 = vmatprep.subr.bf16.mxu0 %v4922
    %5059 = vmatpush1.bf16.msra.mxu0 %v4921
    %5060 = vmatprep.subr.bf16.mxu0 %v4924
    %5061 = vmatpush1.bf16.msra.mxu0 %v4923
    %5062 = vmatprep.subr.bf16.mxu0 %v4926
    %5063 = vmatpush1.bf16.msra.mxu0 %v4925
    %5064 = vmatprep.subr.bf16.mxu0 %v4928
    %5065 = vmatpush1.bf16.msra.mxu0 %v4927
    %5066 = vmatprep.subr.bf16.mxu0 %v4930
    %5067 = vmatpush1.bf16.msra.mxu0 %v4929
    %5068 = vmatprep.subr.bf16.mxu0 %v4932
    %5069 = vmatpush1.bf16.msra.mxu0 %v4931
    %5070 = vmatprep.subr.bf16.mxu0 %v4934
    %5071 = vmatpush1.bf16.msra.mxu0 %v4933
    %5072 = vmatprep.subr.bf16.mxu0 %v4936
    %5073 = vmatpush1.bf16.msra.mxu0 %v4935
    %5074 = vmatprep.subr.bf16.mxu0 %v4938
    %5075 = vmatpush1.bf16.msra.mxu0 %v4937
    %5076 = vmatprep.subr.bf16.mxu0 %v4940
    %5077 = vmatpush1.bf16.msra.mxu0 %v4939
    %5078 = vmatprep.subr.bf16.mxu0 %v4942
    %5079 = vmatpush1.bf16.msra.mxu0 %v4941
    %5080 = vmatprep.subr.bf16.mxu0 %v4944
    %5081 = vmatpush1.bf16.msra.mxu0 %v4943
    %5082 = vmatprep.subr.bf16.mxu0 %v4946
    %5083 = vmatpush1.bf16.msra.mxu0 %v4945
    %5084 = vmatprep.subr.bf16.mxu0 %v4948
    %5085 = vmatpush1.bf16.msra.mxu0 %v4947
    %5086 = vmatprep.mubr.bf16.mxu0 %v4616
    %5087 = vmatmul.mubr.bf16.gmra.mrb[0].mxu0 %v4615
    %v5088 = vpop.f32.mrb[0].mxu0
    %v5089 = vadd.f32 %v5048, %v5088
    %v5090 = vpop.f32.mrb[0].mxu0
    %v5091 = vadd.f32 %v5050, %v5090
    %v5092 = vpop.f32.mrb[0].mxu0
    %v5093 = vpop.f32.mrb[0].mxu0
    %5094 = vdwg.mxu0
    %v5095 = vmax.f32 %v5089, 0.0
    %v5096 = vmax.f32 %v5091, 0.0
    %v5097 = vpack.c.bf16 %v5095, %v5095
    %v5098 = vpack.c.bf16 %v5096, %v5096
    %v5099 = vld [vmem:[%s4] sm:$0xf]
    %v5100 = vld [vmem:[%s4 + $0x4] sm:$0xf]
    %v5101 = vld [vmem:[%s4 + $0x8] sm:$0xf]
    %v5102 = vld [vmem:[%s4 + $0xc] sm:$0xf]
    %v5103 = vld [vmem:[%s4 + $0x10] sm:$0xf]
    %v5104 = vld [vmem:[%s4 + $0x14] sm:$0xf]
    %v5105 = vld [vmem:[%s4 + $0x18] sm:$0xf]
    %v5106 = vld [vmem:[%s4 + $0x1c] sm:$0xf]
    %v5107 = vld [vmem:[%s4 + $0x20] sm:$0xf]
    %v5108 = vld [vmem:[%s4 + $0x24] sm:$0xf]
    %v5109 = vld [vmem:[%s4 + $0x28] sm:$0xf]
    %v5110 = vld [vmem:[%s4 + $0x2c] sm:$0xf]
    %v5111 = vld [vmem:[%s4 + $0x30] sm:$0xf]
    %v5112 = vld [vmem:[%s4 + $0x34] sm:$0xf]
    %v5113 = vld [vmem:[%s4 + $0x38] sm:$0xf]
    %v5114 = vld [vmem:[%s4 + $0x3c] sm:$0xf]
    %v5115 = vld [vmem:[%s4 + $0x40] sm:$0xf]
    %v5116 = vld [vmem:[%s4 + $0x44] sm:$0xf]
    %v5117 = vld [vmem:[%s4 + $0x48] sm:$0xf]
    %v5118 = vld [vmem:[%s4 + $0x4c] sm:$0xf]
    %v5119 = vld [vmem:[%s4 + $0x50] sm:$0xf]
    %v5120 = vld [vmem:[%s4 + $0x54] sm:$0xf]
    %v5121 = vld [vmem:[%s4 + $0x58] sm:$0xf]
    %v5122 = vld [vmem:[%s4 + $0x5c] sm:$0xf]
    %v5123 = vld [vmem:[%s4 + $0x60] sm:$0xf]
    %v5124 = vld [vmem:[%s4 + $0x64] sm:$0xf]
    %v5125 = vld [vmem:[%s4 + $0x68] sm:$0xf]
    %v5126 = vld [vmem:[%s4 + $0x6c] sm:$0xf]
    %v5127 = vld [vmem:[%s4 + $0x70] sm:$0xf]
    %v5128 = vld [vmem:[%s4 + $0x74] sm:$0xf]
    %v5129 = vld [vmem:[%s4 + $0x78] sm:$0xf]
    %v5130 = vld [vmem:[%s4 + $0x7c] sm:$0xf]
    %v5131 = vld [vmem:[#allocation10] sm:$0x1]
    %v5133 = vlaneseq
    %v5134 = vshrl.u32 %v5133, 7
    %v5135 = vsub.s32 0, %v5134
    %v5136 = vrot.slane %v5131, %v5135
    %v5170 = vunpack.c.l.b16 %v5099
    %v5171 = vunpack.c.l.b16 %v5100
    %v5172 = vunpack.c.l.b16 %v5101
    %v5173 = vunpack.c.l.b16 %v5102
    %v5174 = vunpack.c.l.b16 %v5103
    %v5175 = vunpack.c.l.b16 %v5104
    %v5176 = vunpack.c.l.b16 %v5105
    %v5177 = vunpack.c.l.b16 %v5106
    %v5178 = vunpack.c.l.b16 %v5107
    %v5179 = vunpack.c.l.b16 %v5108
    %v5180 = vunpack.c.l.b16 %v5109
    %v5181 = vunpack.c.l.b16 %v5110
    %v5182 = vunpack.c.l.b16 %v5111
    %v5183 = vunpack.c.l.b16 %v5112
    %v5184 = vunpack.c.l.b16 %v5113
    %v5185 = vunpack.c.l.b16 %v5114
    %v5186 = vunpack.c.l.b16 %v5115
    %v5187 = vunpack.c.l.b16 %v5116
    %v5188 = vunpack.c.l.b16 %v5117
    %v5189 = vunpack.c.l.b16 %v5118
    %v5190 = vunpack.c.l.b16 %v5119
    %v5191 = vunpack.c.l.b16 %v5120
    %v5192 = vunpack.c.l.b16 %v5121
    %v5193 = vunpack.c.l.b16 %v5122
    %v5194 = vunpack.c.l.b16 %v5123
    %v5195 = vunpack.c.l.b16 %v5124
    %v5196 = vunpack.c.l.b16 %v5125
    %v5197 = vunpack.c.l.b16 %v5126
    %v5198 = vunpack.c.l.b16 %v5127
    %v5199 = vunpack.c.l.b16 %v5128
    %v5200 = vunpack.c.l.b16 %v5129
    %v5201 = vunpack.c.l.b16 %v5130
    %v5202 = vpack.c.b16 %v5171, %v5170
    %v5203 = vpack.c.b16 %v5173, %v5172
    %v5204 = vpack.c.b16 %v5175, %v5174
    %v5205 = vpack.c.b16 %v5177, %v5176
    %v5206 = vpack.c.b16 %v5179, %v5178
    %v5207 = vpack.c.b16 %v5181, %v5180
    %v5208 = vpack.c.b16 %v5183, %v5182
    %v5209 = vpack.c.b16 %v5185, %v5184
    %v5210 = vpack.c.b16 %v5187, %v5186
    %v5211 = vpack.c.b16 %v5189, %v5188
    %v5212 = vpack.c.b16 %v5191, %v5190
    %v5213 = vpack.c.b16 %v5193, %v5192
    %v5214 = vpack.c.b16 %v5195, %v5194
    %v5215 = vpack.c.b16 %v5197, %v5196
    %v5216 = vpack.c.b16 %v5199, %v5198
    %v5217 = vpack.c.b16 %v5201, %v5200
    %5234 = vmatprep.subr.bf16.mxu0 0
    %5235 = vmatpush1.bf16.msra.mxu0 %v5202
    %5236 = vmatprep.subr.bf16.mxu0 0
    %5237 = vmatpush1.bf16.msra.mxu0 %v5203
    %5238 = vmatprep.subr.bf16.mxu0 0
    %5239 = vmatpush1.bf16.msra.mxu0 %v5204
    %5240 = vmatprep.subr.bf16.mxu0 0
    %5241 = vmatpush1.bf16.msra.mxu0 %v5205
    %5242 = vmatprep.subr.bf16.mxu0 0
    %5243 = vmatpush1.bf16.msra.mxu0 %v5206
    %5244 = vmatprep.subr.bf16.mxu0 0
    %5245 = vmatpush1.bf16.msra.mxu0 %v5207
    %5246 = vmatprep.subr.bf16.mxu0 0
    %5247 = vmatpush1.bf16.msra.mxu0 %v5208
    %5248 = vmatprep.subr.bf16.mxu0 0
    %5249 = vmatpush1.bf16.msra.mxu0 %v5209
    %5250 = vmatprep.subr.bf16.mxu0 0
    %5251 = vmatpush1.bf16.msra.mxu0 %v5210
    %5252 = vmatprep.subr.bf16.mxu0 0
    %5253 = vmatpush1.bf16.msra.mxu0 %v5211
    %5254 = vmatprep.subr.bf16.mxu0 0
    %5255 = vmatpush1.bf16.msra.mxu0 %v5212
    %5256 = vmatprep.subr.bf16.mxu0 0
    %5257 = vmatpush1.bf16.msra.mxu0 %v5213
    %5258 = vmatprep.subr.bf16.mxu0 0
    %5259 = vmatpush1.bf16.msra.mxu0 %v5214
    %5260 = vmatprep.subr.bf16.mxu0 0
    %5261 = vmatpush1.bf16.msra.mxu0 %v5215
    %5262 = vmatprep.subr.bf16.mxu0 0
    %5263 = vmatpush1.bf16.msra.mxu0 %v5216
    %5264 = vmatprep.subr.bf16.mxu0 0
    %5265 = vmatpush1.bf16.msra.mxu0 %v5217
    %5266 = vmatprep.mubr.bf16.mxu0 %v5098
    %5267 = vmatmul.mubr.bf16.gmra.mrb[0].mxu0 %v5097
    %v5268 = vpop.f32.mrb[0].mxu0
    %v5269 = vadd.f32 %v5136, %v5268
    %v5270 = vpop.f32.mrb[0].mxu0
    %v5271 = vpop.f32.mrb[0].mxu0
    %v5272 = vpop.f32.mrb[0].mxu0
    %5273 = vdwg.mxu0
    %vm5274 = vcmask 74752
    %5275 = vst.msk [vmem:[#allocation11] sm:$0x3] %vm5274, %v5269
    // Predicated region
    $region50: #{net_forward.1} parent=1 // pred_check
      _
    $region51: #{net_forward.1} parent=1 // pred_check_branch
      %5277 = sbr.rel (0) target = $region53
    $region52: #{net_forward.1} parent=1 // pred_region
      %s5279 = ssub.s32 32, 32
      %5280 = vsyncadd [#allocation4], %s5279
      %s5282 = sshll.u32 [#allocation11], 4
      %s5283 = int_to_ptr.vmem [resolvable:$true] %s5282
      %5285 = dma.vmem_to_hbm [thread:$0]  %s5283, 32, %s7, [#allocation4]
    $region53: #{net_forward.1} parent=1 // pred_fallthru
      _
    // Predicated region
    $region54: #{net_forward.1} parent=1 // pred_check
      _
    $region55: #{net_forward.1} parent=1 // pred_check_branch
      %5287 = sbr.rel (0) target = $region57
    $region56: #{net_forward.1} parent=1 // pred_region
      %5288 = dma.done [#allocation4], 32
    $region57: #{net_forward.1} parent=1 // pred_fallthru
      _
    %5289 = vsyncpa [#allocation3], 1
    %5290 = vsyncpa [#allocation6], 1
    %5291 = vsyncpa [#allocation9], 1
    %5292 = vsyncpa [#allocation4], 1

</llo_original>
